<compile_context>
chip_gen: v7x
topology: tpu7x:2x2x1
jax: 0.10.0
libtpu: 0.0.40
codegen_flags: <defaults>
</compile_context>

<pallas_src>
import functools

import jax
import jax.numpy as jnp
from jax.experimental import pallas as pl
from jax.experimental.pallas import tpu as pltpu

ATTN_SCALE = 0.12
NEG_INF = -1e30  # large finite negative: NaN-safe if the mask ever goes block-sparse


def _bf16_exp_supported():
    """bf16 EUP fast path exists on v6e/v7x; keep the exponent f32 on older gens."""
    try:
        kind = jax.devices()[0].device_kind.lower()
    except Exception:
        return False
    return ("tpu" in kind) and not any(v in kind for v in ("v2", "v3", "v4", "v5"))


# ----------------------------- Pallas kernel -----------------------------

def fused_attn_kernel(lam_ref, x_ref, wqkv_ref, cos_ref, sin_ref, ve_ref,
                      wproj_ref, o_ref, *, num_heads, head_dim, use_bf16_exp):
    """QKV proj + RMSNorm + rotary + lambda-mix + causal attention + c_proj."""
    H, Dh = num_heads, head_dim
    HD = H * Dh
    half = Dh // 2
    T = x_ref.shape[0]

    # One lane-dense QKV projection: (T, dim) @ (dim, 3*H*Dh); bf16 in, f32 acc.
    qkv = jnp.dot(x_ref[...], wqkv_ref[...], preferred_element_type=jnp.float32)

    q_raw = qkv[:, :HD]            # (T, HD) — 128-lane aligned slices
    k_raw = qkv[:, HD:2 * HD]
    v_raw = qkv[:, 2 * HD:]

    lam0 = lam_ref[0]
    lam1 = lam_ref[1]
    eps = jnp.finfo(jnp.float32).eps        # matches F.rms_norm default eps

    def rms_scale(u, extra):
        # Per-head inverse RMS (64-lane reductions are fine); the elementwise
        # multiply happens on the full 128-lane slab. `extra` folds ATTN_SCALE
        # into q for free (RMSNorm makes pre-scaling the input a no-op, so the
        # scale must be applied to the normalized result; rotary is linear so
        # applying it before rotary is equivalent).
        cols = []
        for h in range(H):
            uh = u[:, h * Dh:(h + 1) * Dh]
            inv = jax.lax.rsqrt(jnp.mean(uh * uh, axis=-1, keepdims=True) + eps)
            cols.append(jnp.broadcast_to(inv * extra, (T, Dh)))
        return u * jnp.concatenate(cols, axis=-1)

    cos_t = cos_ref[...]                    # (T, HD): [cos,  cos] tiled per head
    sin_t = sin_ref[...]                    # (T, HD): [sin, -sin] tiled per head

    def rotary(u):                          # full-slab rotate_half per head
        pieces = []
        for h in range(H):
            base = h * Dh
            pieces.append(u[:, base + half:base + Dh])
            pieces.append(u[:, base:base + half])
        u_rot = jnp.concatenate(pieces, axis=-1)
        return u * cos_t + u_rot * sin_t

    q = rotary(rms_scale(q_raw, ATTN_SCALE))
    k = rotary(rms_scale(k_raw, 1.0))
    v = lam0 * v_raw + lam1 * ve_ref[...].astype(jnp.float32)

    # Single full-width bf16 casts; MXU sees bf16 everywhere (f32 accumulate).
    q_bf = q.astype(jnp.bfloat16)
    k_bf = k.astype(jnp.bfloat16)
    v_bf = v.astype(jnp.bfloat16)

    row = jax.lax.broadcasted_iota(jnp.int32, (T, T), 0)
    col = jax.lax.broadcasted_iota(jnp.int32, (T, T), 1)
    causal = row >= col

    y_heads = []
    for h in range(H):                      # H small & static -> unrolled
        qh = q_bf[:, h * Dh:(h + 1) * Dh]
        kh = k_bf[:, h * Dh:(h + 1) * Dh]
        vh = v_bf[:, h * Dh:(h + 1) * Dh]

        # scores: contract over the head dim directly (no explicit .T relayout)
        s = jax.lax.dot_general(qh, kh, (((1,), (1,)), ((), ())),
                                preferred_element_type=jnp.float32)
        s = jnp.where(causal, s, NEG_INF)
        m = jnp.max(s, axis=-1, keepdims=True)
        z = s - m
        if use_bf16_exp:
            p = jnp.exp(z.astype(jnp.bfloat16))        # bf16 EUP fast path
            l = jnp.sum(p, axis=-1, keepdims=True, dtype=jnp.float32)
            p_mm = p
        else:
            p = jnp.exp(z)
            l = jnp.sum(p, axis=-1, keepdims=True)
            p_mm = p.astype(jnp.bfloat16)
        inv_l = pl.reciprocal(l, approx=True)          # EUP slot, off the VALU path
        y_h = jnp.dot(p_mm, vh, preferred_element_type=jnp.float32) * inv_l
        y_heads.append(y_h)

    y = jnp.concatenate(y_heads, axis=-1)              # (T, HD) lane-dense slab
    # fused c_proj: (T, HD) @ (HD, dim); 128-lane output block, bf16 store.
    o_ref[...] = jnp.dot(y.astype(jnp.bfloat16), wproj_ref[...],
                         preferred_element_type=jnp.float32).astype(o_ref.dtype)


# ----------------------------- glue / wrapper -----------------------------

def rotary_tables(head_dim, seq_len):
    quarter = head_dim // 4
    angular_freq = (1.0 / 1024.0) ** jnp.linspace(0.0, 1.0, quarter, dtype=jnp.float32)
    angular_freq = jnp.concatenate([angular_freq, jnp.zeros((quarter,), jnp.float32)])
    t = jnp.arange(seq_len, dtype=jnp.float32)
    theta = t[:, None] * angular_freq[None, :]                          # (T, Dh/2)
    return jnp.cos(theta), jnp.sin(theta)


def causal_self_attention(x, ve, qkv_w, lambdas, w_proj, num_heads, head_dim):
    B, T, dim = x.shape
    H, Dh = num_heads, head_dim
    HD = H * Dh

    # bf16 MXU operands, pre-transposed weights (one-time XLA ops, outside kernel).
    xs = x.astype(jnp.bfloat16)                                         # (B, T, dim)
    w_qkv_t = qkv_w.reshape(3 * HD, dim).T.astype(jnp.bfloat16)         # (dim, 3*HD)
    ve_flat = ve.reshape(B, T, HD).astype(jnp.bfloat16)                 # (B, T, HD)
    w_proj_t = w_proj.T.astype(jnp.bfloat16)                            # (HD, dim)

    cos, sin = rotary_tables(Dh, T)                                     # (T, Dh/2)
    cos_head = jnp.concatenate([cos, cos], axis=-1)                     # (T, Dh)
    sin_head = jnp.concatenate([sin, -sin], axis=-1)                    # (T, Dh) sign folded
    cos_t = jnp.tile(cos_head, (1, H))                                  # (T, HD) lane-dense
    sin_t = jnp.tile(sin_head, (1, H))
    lambdas = lambdas.astype(jnp.float32)

    kernel = functools.partial(fused_attn_kernel, num_heads=H, head_dim=Dh,
                               use_bf16_exp=_bf16_exp_supported())

    out = pl.pallas_call(
        kernel,
        out_shape=jax.ShapeDtypeStruct((B, T, dim), jnp.bfloat16),
        grid=(B,),
        in_specs=[
            pl.BlockSpec(memory_space=pltpu.MemorySpace.SMEM),          # lambdas (2,)
            pl.BlockSpec((None, T, dim), lambda b: (b, 0, 0)),          # x (bf16)
            pl.BlockSpec((dim, 3 * HD), lambda b: (0, 0)),              # W_qkv^T (bf16)
            pl.BlockSpec((T, HD), lambda b: (0, 0)),                    # cos_t (f32)
            pl.BlockSpec((T, HD), lambda b: (0, 0)),                    # sin_t (f32)
            pl.BlockSpec((None, T, HD), lambda b: (b, 0, 0)),           # ve (bf16)
            pl.BlockSpec((HD, dim), lambda b: (0, 0)),                  # W_proj^T (bf16)
        ],
        out_specs=pl.BlockSpec((None, T, dim), lambda b: (b, 0, 0)),
        compiler_params=pltpu.CompilerParams(
            dimension_semantics=("parallel",)),
    )(lambdas, xs, w_qkv_t, cos_t, sin_t, ve_flat, w_proj_t)

    return out                                                          # (B, T, dim) bf16


# ----------------------------- pure-JAX reference -----------------------------

def reference(x, ve, qkv_w, lambdas, w_proj, H, Dh):
    B, T, dim = x.shape
    qkv = jnp.einsum('btd,fd->btf', x, qkv_w.reshape(3 * H * Dh, dim))
    qkv = qkv.reshape(B, T, 3 * H, Dh)
    q, k, v = qkv[:, :, :H], qkv[:, :, H:2 * H], qkv[:, :, 2 * H:]
    eps = jnp.finfo(jnp.float32).eps
    rms = lambda u: u * jax.lax.rsqrt(jnp.mean(u * u, -1, keepdims=True) + eps)
    q, k = rms(q), rms(k)
    cos, sin = rotary_tables(Dh, T)

    def rot(u):
        u1, u2 = u[..., :Dh // 2], u[..., Dh // 2:]
        c, s = cos[None, :, None, :], sin[None, :, None, :]
        return jnp.concatenate([u1 * c + u2 * s, -u1 * s + u2 * c], -1)

    q, k = rot(q), rot(k)
    v = lambdas[0] * v + lambdas[1] * ve
    s = jnp.einsum('bthd,bshd->bhts', q, k) * ATTN_SCALE
    mask = jnp.tril(jnp.ones((T, T), bool))
    s = jnp.where(mask[None, None], s, -jnp.inf)
    p = jax.nn.softmax(s, -1)
    y = jnp.einsum('bhts,bshd->bthd', p, v).reshape(B, T, H * Dh)
    return jnp.einsum('btf,df->btd', y, w_proj)


# ----------------------------- main -----------------------------

if __name__ == "__main__":
    B, T, dim = 2, 128, 128            # B=2 -> two "parallel" grid steps (v7x: 2 TCs)
    num_heads, head_dim = 2, 64

    key = jax.random.PRNGKey(0)
    k1, k2, k3, k4 = jax.random.split(key, 4)

    bound = (3.0 ** 0.5) * 0.5 * dim ** (-0.5)
    qkv_w = jax.random.uniform(k1, (3, num_heads * head_dim, dim),
                               jnp.float32, -bound, bound)
    lambdas = jnp.array([0.5, 0.5], jnp.float32)
    # NOTE: the PyTorch module zero-inits c_proj.weight (output would be all-zero);
    # we use the CastedLinear reset_parameters init so the kernel is exercised.
    pbound = (3.0 ** 0.5) * 0.5 * (num_heads * head_dim) ** (-0.5)
    w_proj = jax.random.uniform(k2, (dim, num_heads * head_dim),
                                jnp.float32, -pbound, pbound)

    x = jax.random.normal(k3, (B, T, dim), jnp.float32)
    ve = jax.random.normal(k4, (B, T, num_heads, head_dim), jnp.float32)

    out = causal_self_attention(x, ve, qkv_w, lambdas, w_proj, num_heads, head_dim)
    out = jax.block_until_ready(out)

    ref = reference(x, ve, qkv_w, lambdas, w_proj, num_heads, head_dim)
    assert out.shape == (B, T, dim), out.shape
    # Kernel feeds every MXU op bf16 (f32 accumulate), optionally uses a bf16
    # exponent, an approx reciprocal in the softmax, and stores bf16 output.
    # Expected error vs. the pure-f32 reference is ~1e-2 at output scale ~0.2;
    # 3e-2 is a safe bound that still catches real bugs (those are O(0.1+)).
    max_err = float(jnp.max(jnp.abs(out.astype(jnp.float32) - ref)))
    assert max_err < 3e-2, f"mismatch vs reference: {max_err}"

    print("KERNEL_OK")
</pallas_src>

<mosaic_0001>
module attributes {stable_mosaic.version = 11 : i64} {
  func.func @fused_attn_kernel(%arg0: i32, %arg1: memref<2xf32, #tpu.memory_space<smem>>, %arg2: memref<1x128x128xbf16, #tpu.memory_space<vmem>>, %arg3: memref<128x384xbf16, #tpu.memory_space<vmem>>, %arg4: memref<128x128xf32, #tpu.memory_space<vmem>>, %arg5: memref<128x128xf32, #tpu.memory_space<vmem>>, %arg6: memref<1x128x128xbf16, #tpu.memory_space<vmem>>, %arg7: memref<128x128xbf16, #tpu.memory_space<vmem>>, %arg8: memref<1x128x128xbf16, #tpu.memory_space<vmem>>) attributes {dimension_semantics = [#tpu.dimension_semantics<parallel>], iteration_bounds = array<i64: 2>, scalar_prefetch = 0 : i64, scratch_operands = 0 : i64, tpu.core_type = #tpu.core_type<tc>, window_params = [{transform_indices = @transform_0, window_bounds = array<i64: 2>}, {transform_indices = @transform_1, window_bounds = array<i64: 1, 128, 128>}, {pipeline_mode = #tpu.pipeline_mode<synchronous>, transform_indices = @transform_2, window_bounds = array<i64: 128, 384>}, {pipeline_mode = #tpu.pipeline_mode<synchronous>, transform_indices = @transform_3, window_bounds = array<i64: 128, 128>}, {pipeline_mode = #tpu.pipeline_mode<synchronous>, transform_indices = @transform_4, window_bounds = array<i64: 128, 128>}, {transform_indices = @transform_5, window_bounds = array<i64: 1, 128, 128>}, {pipeline_mode = #tpu.pipeline_mode<synchronous>, transform_indices = @transform_6, window_bounds = array<i64: 128, 128>}, {transform_indices = @transform_7, window_bounds = array<i64: 1, 128, 128>}]} {
    %c0 = arith.constant 0 : index
    %c0_0 = arith.constant 0 : index
    %c0_1 = arith.constant 0 : index
    %0 = vector.load %arg2[%c0, %c0_0, %c0_1] : memref<1x128x128xbf16, #tpu.memory_space<vmem>>, vector<1x128x128xbf16>
    %1 = vector.shape_cast %0 : vector<1x128x128xbf16> to vector<128x128xbf16>
    %c0_2 = arith.constant 0 : index
    %c0_3 = arith.constant 0 : index
    %2 = vector.load %arg3[%c0_2, %c0_3] : memref<128x384xbf16, #tpu.memory_space<vmem>>, vector<128x384xbf16>
    %cst = arith.constant dense<0.000000e+00> : vector<128x384xf32>
    %3 = tpu.matmul %1, %2, %cst {dimension_numbers = #tpu.dot_dimension_numbers<[1], [0], [0], [1], [0, 0, 1, 1], [], []>} : vector<128x128xbf16>, vector<128x384xbf16>, vector<128x384xf32> -> vector<128x384xf32>
    %4 = vector.extract_strided_slice %3 {offsets = [0, 0], sizes = [128, 128], strides = [1, 1]} : vector<128x384xf32> to vector<128x128xf32>
    %5 = vector.extract_strided_slice %3 {offsets = [0, 128], sizes = [128, 128], strides = [1, 1]} : vector<128x384xf32> to vector<128x128xf32>
    %6 = vector.extract_strided_slice %3 {offsets = [0, 256], sizes = [128, 128], strides = [1, 1]} : vector<128x384xf32> to vector<128x128xf32>
    %c0_4 = arith.constant 0 : index
    %7 = memref.load %arg1[%c0_4] : memref<2xf32, #tpu.memory_space<smem>>
    %c1 = arith.constant 1 : index
    %8 = memref.load %arg1[%c1] : memref<2xf32, #tpu.memory_space<smem>>
    %c0_5 = arith.constant 0 : index
    %c0_6 = arith.constant 0 : index
    %9 = vector.load %arg4[%c0_5, %c0_6] : memref<128x128xf32, #tpu.memory_space<vmem>>, vector<128x128xf32>
    %c0_7 = arith.constant 0 : index
    %c0_8 = arith.constant 0 : index
    %10 = vector.load %arg5[%c0_7, %c0_8] : memref<128x128xf32, #tpu.memory_space<vmem>>, vector<128x128xf32>
    %11 = vector.extract_strided_slice %4 {offsets = [0, 0], sizes = [128, 64], strides = [1, 1]} : vector<128x128xf32> to vector<128x64xf32>
    %12 = arith.mulf %11, %11 : vector<128x64xf32>
    %cst_9 = arith.constant dense<0.000000e+00> : vector<128xf32>
    %13 = vector.multi_reduction <add>, %12, %cst_9 [1] : vector<128x64xf32> to vector<128xf32>
    %14 = vector.shape_cast %13 : vector<128xf32> to vector<128x1xf32>
    %cst_10 = arith.constant 6.400000e+01 : f32
    %15 = vector.broadcast %cst_10 : f32 to vector<128x1xf32>
    %16 = arith.divf %14, %15 : vector<128x1xf32>
    %cst_11 = arith.constant 1.1920929E-7 : f32
    %17 = vector.broadcast %cst_11 : f32 to vector<128x1xf32>
    %18 = arith.addf %16, %17 : vector<128x1xf32>
    %19 = math.rsqrt %18 : vector<128x1xf32>
    %cst_12 = arith.constant 1.200000e-01 : f32
    %20 = vector.broadcast %cst_12 : f32 to vector<128x1xf32>
    %21 = arith.mulf %19, %20 : vector<128x1xf32>
    %22 = vector.shape_cast %21 : vector<128x1xf32> to vector<128x1xf32>
    %23 = vector.broadcast %22 : vector<128x1xf32> to vector<128x64xf32>
    %24 = vector.extract_strided_slice %4 {offsets = [0, 64], sizes = [128, 64], strides = [1, 1]} : vector<128x128xf32> to vector<128x64xf32>
    %25 = arith.mulf %24, %24 : vector<128x64xf32>
    %cst_13 = arith.constant dense<0.000000e+00> : vector<128xf32>
    %26 = vector.multi_reduction <add>, %25, %cst_13 [1] : vector<128x64xf32> to vector<128xf32>
    %27 = vector.shape_cast %26 : vector<128xf32> to vector<128x1xf32>
    %cst_14 = arith.constant 6.400000e+01 : f32
    %28 = vector.broadcast %cst_14 : f32 to vector<128x1xf32>
    %29 = arith.divf %27, %28 : vector<128x1xf32>
    %cst_15 = arith.constant 1.1920929E-7 : f32
    %30 = vector.broadcast %cst_15 : f32 to vector<128x1xf32>
    %31 = arith.addf %29, %30 : vector<128x1xf32>
    %32 = math.rsqrt %31 : vector<128x1xf32>
    %cst_16 = arith.constant 1.200000e-01 : f32
    %33 = vector.broadcast %cst_16 : f32 to vector<128x1xf32>
    %34 = arith.mulf %32, %33 : vector<128x1xf32>
    %35 = vector.shape_cast %34 : vector<128x1xf32> to vector<128x1xf32>
    %36 = vector.broadcast %35 : vector<128x1xf32> to vector<128x64xf32>
    %37 = tpu.concatenate %23, %36 in 1 : vector<128x64xf32>, vector<128x64xf32> -> vector<128x128xf32>
    %38 = arith.mulf %4, %37 : vector<128x128xf32>
    %39 = vector.extract_strided_slice %38 {offsets = [0, 32], sizes = [128, 32], strides = [1, 1]} : vector<128x128xf32> to vector<128x32xf32>
    %40 = vector.extract_strided_slice %38 {offsets = [0, 0], sizes = [128, 32], strides = [1, 1]} : vector<128x128xf32> to vector<128x32xf32>
    %41 = vector.extract_strided_slice %38 {offsets = [0, 96], sizes = [128, 32], strides = [1, 1]} : vector<128x128xf32> to vector<128x32xf32>
    %42 = vector.extract_strided_slice %38 {offsets = [0, 64], sizes = [128, 32], strides = [1, 1]} : vector<128x128xf32> to vector<128x32xf32>
    %43 = tpu.concatenate %39, %40, %41, %42 in 1 : vector<128x32xf32>, vector<128x32xf32>, vector<128x32xf32>, vector<128x32xf32> -> vector<128x128xf32>
    %44 = arith.mulf %38, %9 : vector<128x128xf32>
    %45 = arith.mulf %43, %10 : vector<128x128xf32>
    %46 = arith.addf %44, %45 : vector<128x128xf32>
    %47 = vector.extract_strided_slice %5 {offsets = [0, 0], sizes = [128, 64], strides = [1, 1]} : vector<128x128xf32> to vector<128x64xf32>
    %48 = arith.mulf %47, %47 : vector<128x64xf32>
    %cst_17 = arith.constant dense<0.000000e+00> : vector<128xf32>
    %49 = vector.multi_reduction <add>, %48, %cst_17 [1] : vector<128x64xf32> to vector<128xf32>
    %50 = vector.shape_cast %49 : vector<128xf32> to vector<128x1xf32>
    %cst_18 = arith.constant 6.400000e+01 : f32
    %51 = vector.broadcast %cst_18 : f32 to vector<128x1xf32>
    %52 = arith.divf %50, %51 : vector<128x1xf32>
    %cst_19 = arith.constant 1.1920929E-7 : f32
    %53 = vector.broadcast %cst_19 : f32 to vector<128x1xf32>
    %54 = arith.addf %52, %53 : vector<128x1xf32>
    %55 = math.rsqrt %54 : vector<128x1xf32>
    %cst_20 = arith.constant 1.000000e+00 : f32
    %56 = vector.broadcast %cst_20 : f32 to vector<128x1xf32>
    %57 = arith.mulf %55, %56 : vector<128x1xf32>
    %58 = vector.shape_cast %57 : vector<128x1xf32> to vector<128x1xf32>
    %59 = vector.broadcast %58 : vector<128x1xf32> to vector<128x64xf32>
    %60 = vector.extract_strided_slice %5 {offsets = [0, 64], sizes = [128, 64], strides = [1, 1]} : vector<128x128xf32> to vector<128x64xf32>
    %61 = arith.mulf %60, %60 : vector<128x64xf32>
    %cst_21 = arith.constant dense<0.000000e+00> : vector<128xf32>
    %62 = vector.multi_reduction <add>, %61, %cst_21 [1] : vector<128x64xf32> to vector<128xf32>
    %63 = vector.shape_cast %62 : vector<128xf32> to vector<128x1xf32>
    %cst_22 = arith.constant 6.400000e+01 : f32
    %64 = vector.broadcast %cst_22 : f32 to vector<128x1xf32>
    %65 = arith.divf %63, %64 : vector<128x1xf32>
    %cst_23 = arith.constant 1.1920929E-7 : f32
    %66 = vector.broadcast %cst_23 : f32 to vector<128x1xf32>
    %67 = arith.addf %65, %66 : vector<128x1xf32>
    %68 = math.rsqrt %67 : vector<128x1xf32>
    %cst_24 = arith.constant 1.000000e+00 : f32
    %69 = vector.broadcast %cst_24 : f32 to vector<128x1xf32>
    %70 = arith.mulf %68, %69 : vector<128x1xf32>
    %71 = vector.shape_cast %70 : vector<128x1xf32> to vector<128x1xf32>
    %72 = vector.broadcast %71 : vector<128x1xf32> to vector<128x64xf32>
    %73 = tpu.concatenate %59, %72 in 1 : vector<128x64xf32>, vector<128x64xf32> -> vector<128x128xf32>
    %74 = arith.mulf %5, %73 : vector<128x128xf32>
    %75 = vector.extract_strided_slice %74 {offsets = [0, 32], sizes = [128, 32], strides = [1, 1]} : vector<128x128xf32> to vector<128x32xf32>
    %76 = vector.extract_strided_slice %74 {offsets = [0, 0], sizes = [128, 32], strides = [1, 1]} : vector<128x128xf32> to vector<128x32xf32>
    %77 = vector.extract_strided_slice %74 {offsets = [0, 96], sizes = [128, 32], strides = [1, 1]} : vector<128x128xf32> to vector<128x32xf32>
    %78 = vector.extract_strided_slice %74 {offsets = [0, 64], sizes = [128, 32], strides = [1, 1]} : vector<128x128xf32> to vector<128x32xf32>
    %79 = tpu.concatenate %75, %76, %77, %78 in 1 : vector<128x32xf32>, vector<128x32xf32>, vector<128x32xf32>, vector<128x32xf32> -> vector<128x128xf32>
    %80 = arith.mulf %74, %9 : vector<128x128xf32>
    %81 = arith.mulf %79, %10 : vector<128x128xf32>
    %82 = arith.addf %80, %81 : vector<128x128xf32>
    %83 = vector.broadcast %7 : f32 to vector<128x128xf32>
    %84 = arith.mulf %83, %6 : vector<128x128xf32>
    %c0_25 = arith.constant 0 : index
    %c0_26 = arith.constant 0 : index
    %c0_27 = arith.constant 0 : index
    %85 = vector.load %arg6[%c0_25, %c0_26, %c0_27] : memref<1x128x128xbf16, #tpu.memory_space<vmem>>, vector<1x128x128xbf16>
    %86 = vector.shape_cast %85 : vector<1x128x128xbf16> to vector<128x128xbf16>
    %87 = arith.extf %86 : vector<128x128xbf16> to vector<128x128xf32>
    %88 = vector.broadcast %8 : f32 to vector<128x128xf32>
    %89 = arith.mulf %88, %87 : vector<128x128xf32>
    %90 = arith.addf %84, %89 : vector<128x128xf32>
    %91 = arith.truncf %46 : vector<128x128xf32> to vector<128x128xbf16>
    %92 = arith.truncf %82 : vector<128x128xf32> to vector<128x128xbf16>
    %93 = arith.truncf %90 : vector<128x128xf32> to vector<128x128xbf16>
    %94 = tpu.iota {dimensions = array<i32: 0>} : vector<128x128xi32>
    %95 = tpu.iota {dimensions = array<i32: 1>} : vector<128x128xi32>
    %96 = arith.cmpi sge, %94, %95 : vector<128x128xi32>
    %97 = vector.extract_strided_slice %91 {offsets = [0, 0], sizes = [128, 64], strides = [1, 1]} : vector<128x128xbf16> to vector<128x64xbf16>
    %98 = vector.extract_strided_slice %92 {offsets = [0, 0], sizes = [128, 64], strides = [1, 1]} : vector<128x128xbf16> to vector<128x64xbf16>
    %99 = vector.extract_strided_slice %93 {offsets = [0, 0], sizes = [128, 64], strides = [1, 1]} : vector<128x128xbf16> to vector<128x64xbf16>
    %cst_28 = arith.constant dense<0.000000e+00> : vector<128x128xf32>
    %100 = tpu.matmul %97, %98, %cst_28 {dimension_numbers = #tpu.dot_dimension_numbers<[1], [1], [0], [0], [0, 0, 1, 0], [], []>} : vector<128x64xbf16>, vector<128x64xbf16>, vector<128x128xf32> -> vector<128x128xf32>
    %cst_29 = arith.constant -1.000000e+30 : f32
    %101 = vector.broadcast %cst_29 : f32 to vector<128x128xf32>
    %102 = arith.select %96, %100, %101 : vector<128x128xi1>, vector<128x128xf32>
    %cst_30 = arith.constant dense<0xFF800000> : vector<128xf32>
    %103 = vector.multi_reduction <maximumf>, %102, %cst_30 [1] : vector<128x128xf32> to vector<128xf32>
    %104 = vector.shape_cast %103 : vector<128xf32> to vector<128x1xf32>
    %105 = vector.broadcast %104 : vector<128x1xf32> to vector<128x128xf32>
    %106 = arith.subf %102, %105 : vector<128x128xf32>
    %107 = math.exp %106 : vector<128x128xf32>
    %cst_31 = arith.constant dense<0.000000e+00> : vector<128xf32>
    %108 = vector.multi_reduction <add>, %107, %cst_31 [1] : vector<128x128xf32> to vector<128xf32>
    %109 = vector.shape_cast %108 : vector<128xf32> to vector<128x1xf32>
    %110 = arith.truncf %107 : vector<128x128xf32> to vector<128x128xbf16>
    %111 = tpu.reciprocal %109 {approx = true} : vector<128x1xf32> -> vector<128x1xf32>
    %cst_32 = arith.constant dense<0.000000e+00> : vector<128x64xf32>
    %112 = tpu.matmul %110, %99, %cst_32 {dimension_numbers = #tpu.dot_dimension_numbers<[1], [0], [0], [1], [0, 0, 1, 1], [], []>} : vector<128x128xbf16>, vector<128x64xbf16>, vector<128x64xf32> -> vector<128x64xf32>
    %113 = vector.broadcast %111 : vector<128x1xf32> to vector<128x64xf32>
    %114 = arith.mulf %112, %113 : vector<128x64xf32>
    %115 = vector.extract_strided_slice %91 {offsets = [0, 64], sizes = [128, 64], strides = [1, 1]} : vector<128x128xbf16> to vector<128x64xbf16>
    %116 = vector.extract_strided_slice %92 {offsets = [0, 64], sizes = [128, 64], strides = [1, 1]} : vector<128x128xbf16> to vector<128x64xbf16>
    %117 = vector.extract_strided_slice %93 {offsets = [0, 64], sizes = [128, 64], strides = [1, 1]} : vector<128x128xbf16> to vector<128x64xbf16>
    %cst_33 = arith.constant dense<0.000000e+00> : vector<128x128xf32>
    %118 = tpu.matmul %115, %116, %cst_33 {dimension_numbers = #tpu.dot_dimension_numbers<[1], [1], [0], [0], [0, 0, 1, 0], [], []>} : vector<128x64xbf16>, vector<128x64xbf16>, vector<128x128xf32> -> vector<128x128xf32>
    %cst_34 = arith.constant -1.000000e+30 : f32
    %119 = vector.broadcast %cst_34 : f32 to vector<128x128xf32>
    %120 = arith.select %96, %118, %119 : vector<128x128xi1>, vector<128x128xf32>
    %cst_35 = arith.constant dense<0xFF800000> : vector<128xf32>
    %121 = vector.multi_reduction <maximumf>, %120, %cst_35 [1] : vector<128x128xf32> to vector<128xf32>
    %122 = vector.shape_cast %121 : vector<128xf32> to vector<128x1xf32>
    %123 = vector.broadcast %122 : vector<128x1xf32> to vector<128x128xf32>
    %124 = arith.subf %120, %123 : vector<128x128xf32>
    %125 = math.exp %124 : vector<128x128xf32>
    %cst_36 = arith.constant dense<0.000000e+00> : vector<128xf32>
    %126 = vector.multi_reduction <add>, %125, %cst_36 [1] : vector<128x128xf32> to vector<128xf32>
    %127 = vector.shape_cast %126 : vector<128xf32> to vector<128x1xf32>
    %128 = arith.truncf %125 : vector<128x128xf32> to vector<128x128xbf16>
    %129 = tpu.reciprocal %127 {approx = true} : vector<128x1xf32> -> vector<128x1xf32>
    %cst_37 = arith.constant dense<0.000000e+00> : vector<128x64xf32>
    %130 = tpu.matmul %128, %117, %cst_37 {dimension_numbers = #tpu.dot_dimension_numbers<[1], [0], [0], [1], [0, 0, 1, 1], [], []>} : vector<128x128xbf16>, vector<128x64xbf16>, vector<128x64xf32> -> vector<128x64xf32>
    %131 = vector.broadcast %129 : vector<128x1xf32> to vector<128x64xf32>
    %132 = arith.mulf %130, %131 : vector<128x64xf32>
    %133 = tpu.concatenate %114, %132 in 1 : vector<128x64xf32>, vector<128x64xf32> -> vector<128x128xf32>
    %134 = arith.truncf %133 : vector<128x128xf32> to vector<128x128xbf16>
    %c0_38 = arith.constant 0 : index
    %c0_39 = arith.constant 0 : index
    %135 = vector.load %arg7[%c0_38, %c0_39] : memref<128x128xbf16, #tpu.memory_space<vmem>>, vector<128x128xbf16>
    %cst_40 = arith.constant dense<0.000000e+00> : vector<128x128xf32>
    %136 = tpu.matmul %134, %135, %cst_40 {dimension_numbers = #tpu.dot_dimension_numbers<[1], [0], [0], [1], [0, 0, 1, 1], [], []>} : vector<128x128xbf16>, vector<128x128xbf16>, vector<128x128xf32> -> vector<128x128xf32>
    %137 = arith.truncf %136 : vector<128x128xf32> to vector<128x128xbf16>
    %c0_41 = arith.constant 0 : index
    %c0_42 = arith.constant 0 : index
    %c0_43 = arith.constant 0 : index
    %138 = vector.load %arg8[%c0_41, %c0_42, %c0_43] : memref<1x128x128xbf16, #tpu.memory_space<vmem>>, vector<1x128x128xbf16>
    %139 = vector.shape_cast %138 : vector<1x128x128xbf16> to vector<128x128xbf16>
    %140 = vector.shape_cast %137 : vector<128x128xbf16> to vector<1x128x128xbf16>
    tpu.vector_store %arg8[%c0_41, %c0_42, %c0_43], %140 {strides = array<i32>} : memref<1x128x128xbf16, #tpu.memory_space<vmem>>, vector<1x128x128xbf16>,
    return
  }
  func.func @transform_0(%arg0: i32) -> i32 {
    %c0_i32 = arith.constant 0 : i32
    %c0_i32_0 = arith.constant 0 : i32
    return %c0_i32 : i32
  }
  func.func @transform_1(%arg0: i32) -> (i32, i32, i32) {
    %c0_i32 = arith.constant 0 : i32
    %c0_i32_0 = arith.constant 0 : i32
    %c0_i32_1 = arith.constant 0 : i32
    return %arg0, %c0_i32, %c0_i32_0 : i32, i32, i32
  }
  func.func @transform_2(%arg0: i32) -> (i32, i32) {
    %c0_i32 = arith.constant 0 : i32
    %c0_i32_0 = arith.constant 0 : i32
    %c0_i32_1 = arith.constant 0 : i32
    return %c0_i32, %c0_i32_0 : i32, i32
  }
  func.func @transform_3(%arg0: i32) -> (i32, i32) {
    %c0_i32 = arith.constant 0 : i32
    %c0_i32_0 = arith.constant 0 : i32
    %c0_i32_1 = arith.constant 0 : i32
    return %c0_i32, %c0_i32_0 : i32, i32
  }
  func.func @transform_4(%arg0: i32) -> (i32, i32) {
    %c0_i32 = arith.constant 0 : i32
    %c0_i32_0 = arith.constant 0 : i32
    %c0_i32_1 = arith.constant 0 : i32
    return %c0_i32, %c0_i32_0 : i32, i32
  }
  func.func @transform_5(%arg0: i32) -> (i32, i32, i32) {
    %c0_i32 = arith.constant 0 : i32
    %c0_i32_0 = arith.constant 0 : i32
    %c0_i32_1 = arith.constant 0 : i32
    return %arg0, %c0_i32, %c0_i32_0 : i32, i32, i32
  }
  func.func @transform_6(%arg0: i32) -> (i32, i32) {
    %c0_i32 = arith.constant 0 : i32
    %c0_i32_0 = arith.constant 0 : i32
    %c0_i32_1 = arith.constant 0 : i32
    return %c0_i32, %c0_i32_0 : i32, i32
  }
  func.func @transform_7(%arg0: i32) -> (i32, i32, i32) {
    %c0_i32 = arith.constant 0 : i32
    %c0_i32_0 = arith.constant 0 : i32
    %c0_i32_1 = arith.constant 0 : i32
    return %arg0, %c0_i32, %c0_i32_0 : i32, i32, i32
  }
}

</mosaic_0001>

<llo_original>
// kernel: tpu_custom_call.1
$region0: #{tpu_custom_call.1}
  #allocation0 [shape = 'u32[]', space=smem, size = 0x4, offset = 0x4, fixed_abs, tag = 'smem constant byte address 0x4 - core index']
  #allocation1 [shape = 'u32[144,128]{1,0:T(1,128)}', space=vmem, size = 0x12000, scoped, tag = 'internal scratch']
  %s0 = inlined_call_operand.hbm [shape: f32[2], index: 0, kind: input, shape index: {}]
  %s1 = inlined_call_operand.hbm [shape: bf16[2,128,128], index: 1, kind: input, shape index: {}]
  %s2 = inlined_call_operand.hbm [shape: bf16[128,384], index: 2, kind: input, shape index: {}]
  %s3 = inlined_call_operand.hbm [shape: f32[128,128], index: 3, kind: input, shape index: {}]
  %s4 = inlined_call_operand.hbm [shape: f32[128,128], index: 4, kind: input, shape index: {}]
  %s5 = inlined_call_operand.hbm [shape: bf16[2,128,128], index: 5, kind: input, shape index: {}]
  %s6 = inlined_call_operand.hbm [shape: bf16[128,128], index: 6, kind: input, shape index: {}]
  %s7 = inlined_call_operand.hbm [shape: bf16[2,128,128], index: 7, kind: output, shape index: {}]
  %s8 = sld [smem:[#allocation0]]
  $region89: #{tpu_custom_call.1} parent=0
    _
  %s10 = ssub.s32 1, %s8
  %s11 = scalar_select 0, %s10, %s8
  $region1: #{tpu_custom_call.1} parent=0
    #allocation2 [shape = 'u8[512]{0}', space=smem, size = 0x200, scoped, tag = 'input window, operand 0, single buffered']
    #allocation3 [shape = 's32[2]{0}', space=sflag, size = 0x8, scoped, tag = 'scoped memory for tpu_custom_call.1']
    #allocation4 [shape = 's32[2]{0}', space=sflag, size = 0x8, scoped, tag = 'scoped memory for tpu_custom_call.1']
    #allocation5 [shape = 's32[2]{0}', space=sflag, size = 0x8, scoped, tag = 'scoped memory for tpu_custom_call.1']
    #allocation6 [shape = 'u8[65536]{0}', space=vmem, size = 0x10000, scoped, tag = 'input window, operand 1']
    #allocation7 [shape = 'u8[98304]{0}', space=vmem, size = 0x18000, scoped, tag = 'input window, operand 2, single buffered']
    #allocation8 [shape = 's32[1]{0}', space=sflag, size = 0x4, scoped, tag = 'scoped memory for tpu_custom_call.1']
    #allocation9 [shape = 'u8[65536]{0}', space=vmem, size = 0x10000, scoped, tag = 'input window, operand 3, single buffered']
    #allocation10 [shape = 'u8[65536]{0}', space=vmem, size = 0x10000, scoped, tag = 'input window, operand 4, single buffered']
    #allocation11 [shape = 's32[1]{0}', space=sflag, size = 0x4, scoped, tag = 'scoped memory for tpu_custom_call.1']
    #allocation12 [shape = 'u8[65536]{0}', space=vmem, size = 0x10000, scoped, tag = 'input window, operand 5']
    #allocation13 [shape = 'u8[32768]{0}', space=vmem, size = 0x8000, scoped, tag = 'input window, operand 6, single buffered']
    #allocation14 [shape = 'u8[65536]{0}', space=vmem, size = 0x10000, scoped, tag = 'output window, operand 0']
    %12 = vsyncpa [#allocation5], 0
    %13 = vsyncpa [#allocation3], 0
    %s14 = scalar_lea.sflag [#allocation3], 1
    %15 = vsyncpa %s14, 0
    %16 = vsyncpa [#allocation8], 0
    %17 = vsyncpa [#allocation11], 0
    %18 = vsyncpa [#allocation4], 0
    %s19 = scalar_lea.sflag [#allocation4], 1
    %20 = vsyncpa %s19, 0
    loop: start=0, step=1, limit=4
    $region2: #{tpu_custom_call.1} parent=1 // loop_pre_header
      _
    $region3: #{tpu_custom_call.1} parent=1 // loop_header
      %s22 = sphi 0, %s26
      %p23 = scmp.ge.s32.totalorder %s22, 4
      %s30 = sphi 0, %s30
      %s32 = sphi 0, %s30
      %s33 = sphi 0, %s32
      %s47 = sphi 0, %s33
      %s53 = sphi 0, %s55
      %s56 = sphi 0, %s53
      %s57 = sphi 0, %s56
      %s73 = sphi 0, %s57
      %s77 = sphi 0, %s77
      %s79 = sphi 0, %s77
      %s80 = sphi 0, %s79
      %s94 = sphi 0, %s80
      %s98 = sphi 0, %s98
      %s100 = sphi 0, %s98
      %s101 = sphi 0, %s100
      %s115 = sphi 0, %s101
      %s119 = sphi 0, %s119
      %s121 = sphi 0, %s119
      %s122 = sphi 0, %s121
      %s136 = sphi 0, %s122
      %s142 = sphi 0, %s144
      %s145 = sphi 0, %s142
      %s146 = sphi 0, %s145
      %s162 = sphi 0, %s146
      %s166 = sphi 0, %s166
      %s168 = sphi 0, %s166
      %s169 = sphi 0, %s168
      %s183 = sphi 0, %s169
      %s189 = sphi 0, %s191
      %s192 = sphi 0, %s189
      %s193 = sphi 0, %s192
      %s209 = sphi 0, %s193
    $region4: #{tpu_custom_call.1} parent=1 // loop_header_branch
      %25 = sbr.rel (%p23) target = $region8
    $region5: #{tpu_custom_call.1} parent=1 // loop_body
      %s27 = ssub.s32 %s22, 1
      %s28 = ssub.s32 %s22, 2
      %s29 = sadd.s32 %s22, 1
      %s31 = sadd.s32 %s30, 1
      %p34 = scmp.eq.s32.totalorder %s22, 1
      %p35 = scmp.ne.s32.totalorder %s30, %s32
      %p36 = scmp.eq.s32.totalorder %s22, 0
      %p37 = por %p35, %p36
      %p38 = scmp.ne.s32.totalorder %s30, %s32
      %p39 = scmp.eq.s32.totalorder %s27, 1
      %p40 = por %p38, %p39
      %p41 = scmp.ne.s32.totalorder %s32, %s33
      %p42 = scmp.eq.s32.totalorder %s27, 0
      %p43 = por %p41, %p42
      %p44 = scmp.ne.s32.totalorder %s32, %s33
      %p45 = scmp.eq.s32.totalorder %s28, 1
      %p46 = por %p44, %p45
      %p48 = scmp.ne.s32.totalorder %s33, %s47
      %p49 = scmp.eq.s32.totalorder %s28, 0
      %p50 = por %p48, %p49
      %s51 = ssub.s32 %s22, %s29
      %p52 = scmp.eq.s32.totalorder %s51, 0
      %s54 = sadd.s32 %s53, 1
      %s55 = scalar_select %p52, %s53, %s54
      %p58 = pneg %p52
      %p59 = scmp.eq.s32.totalorder %s22, 1
      %p60 = por %p58, %p59
      %p61 = scmp.ne.s32.totalorder %s53, %s56
      %p62 = scmp.eq.s32.totalorder %s22, 0
      %p63 = por %p61, %p62
      %p64 = scmp.ne.s32.totalorder %s53, %s56
      %p65 = scmp.eq.s32.totalorder %s27, 1
      %p66 = por %p64, %p65
      %p67 = scmp.ne.s32.totalorder %s56, %s57
      %p68 = scmp.eq.s32.totalorder %s27, 0
      %p69 = por %p67, %p68
      %p70 = scmp.ne.s32.totalorder %s56, %s57
      %p71 = scmp.eq.s32.totalorder %s28, 1
      %p72 = por %p70, %p71
      %p74 = scmp.ne.s32.totalorder %s57, %s73
      %p75 = scmp.eq.s32.totalorder %s28, 0
      %p76 = por %p74, %p75
      %s78 = sadd.s32 %s77, 1
      %p81 = scmp.eq.s32.totalorder %s22, 1
      %p82 = scmp.ne.s32.totalorder %s77, %s79
      %p83 = scmp.eq.s32.totalorder %s22, 0
      %p84 = por %p82, %p83
      %p85 = scmp.ne.s32.totalorder %s77, %s79
      %p86 = scmp.eq.s32.totalorder %s27, 1
      %p87 = por %p85, %p86
      %p88 = scmp.ne.s32.totalorder %s79, %s80
      %p89 = scmp.eq.s32.totalorder %s27, 0
      %p90 = por %p88, %p89
      %p91 = scmp.ne.s32.totalorder %s79, %s80
      %p92 = scmp.eq.s32.totalorder %s28, 1
      %p93 = por %p91, %p92
      %p95 = scmp.ne.s32.totalorder %s80, %s94
      %p96 = scmp.eq.s32.totalorder %s28, 0
      %p97 = por %p95, %p96
      %s99 = sadd.s32 %s98, 1
      %p102 = scmp.eq.s32.totalorder %s22, 1
      %p103 = scmp.ne.s32.totalorder %s98, %s100
      %p104 = scmp.eq.s32.totalorder %s22, 0
      %p105 = por %p103, %p104
      %p106 = scmp.ne.s32.totalorder %s98, %s100
      %p107 = scmp.eq.s32.totalorder %s27, 1
      %p108 = por %p106, %p107
      %p109 = scmp.ne.s32.totalorder %s100, %s101
      %p110 = scmp.eq.s32.totalorder %s27, 0
      %p111 = por %p109, %p110
      %p112 = scmp.ne.s32.totalorder %s100, %s101
      %p113 = scmp.eq.s32.totalorder %s28, 1
      %p114 = por %p112, %p113
      %p116 = scmp.ne.s32.totalorder %s101, %s115
      %p117 = scmp.eq.s32.totalorder %s28, 0
      %p118 = por %p116, %p117
      %s120 = sadd.s32 %s119, 1
      %p123 = scmp.eq.s32.totalorder %s22, 1
      %p124 = scmp.ne.s32.totalorder %s119, %s121
      %p125 = scmp.eq.s32.totalorder %s22, 0
      %p126 = por %p124, %p125
      %p127 = scmp.ne.s32.totalorder %s119, %s121
      %p128 = scmp.eq.s32.totalorder %s27, 1
      %p129 = por %p127, %p128
      %p130 = scmp.ne.s32.totalorder %s121, %s122
      %p131 = scmp.eq.s32.totalorder %s27, 0
      %p132 = por %p130, %p131
      %p133 = scmp.ne.s32.totalorder %s121, %s122
      %p134 = scmp.eq.s32.totalorder %s28, 1
      %p135 = por %p133, %p134
      %p137 = scmp.ne.s32.totalorder %s122, %s136
      %p138 = scmp.eq.s32.totalorder %s28, 0
      %p139 = por %p137, %p138
      %s140 = ssub.s32 %s22, %s29
      %p141 = scmp.eq.s32.totalorder %s140, 0
      %s143 = sadd.s32 %s142, 1
      %s144 = scalar_select %p141, %s142, %s143
      %p147 = pneg %p141
      %p148 = scmp.eq.s32.totalorder %s22, 1
      %p149 = por %p147, %p148
      %p150 = scmp.ne.s32.totalorder %s142, %s145
      %p151 = scmp.eq.s32.totalorder %s22, 0
      %p152 = por %p150, %p151
      %p153 = scmp.ne.s32.totalorder %s142, %s145
      %p154 = scmp.eq.s32.totalorder %s27, 1
      %p155 = por %p153, %p154
      %p156 = scmp.ne.s32.totalorder %s145, %s146
      %p157 = scmp.eq.s32.totalorder %s27, 0
      %p158 = por %p156, %p157
      %p159 = scmp.ne.s32.totalorder %s145, %s146
      %p160 = scmp.eq.s32.totalorder %s28, 1
      %p161 = por %p159, %p160
      %p163 = scmp.ne.s32.totalorder %s146, %s162
      %p164 = scmp.eq.s32.totalorder %s28, 0
      %p165 = por %p163, %p164
      %s167 = sadd.s32 %s166, 1
      %p170 = scmp.eq.s32.totalorder %s22, 1
      %p171 = scmp.ne.s32.totalorder %s166, %s168
      %p172 = scmp.eq.s32.totalorder %s22, 0
      %p173 = por %p171, %p172
      %p174 = scmp.ne.s32.totalorder %s166, %s168
      %p175 = scmp.eq.s32.totalorder %s27, 1
      %p176 = por %p174, %p175
      %p177 = scmp.ne.s32.totalorder %s168, %s169
      %p178 = scmp.eq.s32.totalorder %s27, 0
      %p179 = por %p177, %p178
      %p180 = scmp.ne.s32.totalorder %s168, %s169
      %p181 = scmp.eq.s32.totalorder %s28, 1
      %p182 = por %p180, %p181
      %p184 = scmp.ne.s32.totalorder %s169, %s183
      %p185 = scmp.eq.s32.totalorder %s28, 0
      %p186 = por %p184, %p185
      %s187 = ssub.s32 %s22, %s29
      %p188 = scmp.eq.s32.totalorder %s187, 0
      %s190 = sadd.s32 %s189, 1
      %s191 = scalar_select %p188, %s189, %s190
      %p194 = pneg %p188
      %p195 = scmp.eq.s32.totalorder %s22, 1
      %p196 = por %p194, %p195
      %p197 = scmp.ne.s32.totalorder %s189, %s192
      %p198 = scmp.eq.s32.totalorder %s22, 0
      %p199 = por %p197, %p198
      %p200 = scmp.ne.s32.totalorder %s189, %s192
      %p201 = scmp.eq.s32.totalorder %s27, 1
      %p202 = por %p200, %p201
      %p203 = scmp.ne.s32.totalorder %s192, %s193
      %p204 = scmp.eq.s32.totalorder %s27, 0
      %p205 = por %p203, %p204
      %p206 = scmp.ne.s32.totalorder %s192, %s193
      %p207 = scmp.eq.s32.totalorder %s28, 1
      %p208 = por %p206, %p207
      %p210 = scmp.ne.s32.totalorder %s193, %s209
      %p211 = scmp.eq.s32.totalorder %s28, 0
      %p212 = por %p210, %p211
      %p213 = scmp.le.s32.totalorder 1, %s22
      %p214 = scmp.lt.s32.totalorder %s22, 3
      %p215 = pnand %p213, %p214
      %p216 = pneg %p215
      // Predicated region
      $region9: #{tpu_custom_call.1} parent=5 // pred_check
        _
      $region10: #{tpu_custom_call.1} parent=5 // pred_check_branch
        %218 = sbr.rel (%p215) target = $region12
      $region11: #{tpu_custom_call.1} parent=5 // pred_region
        %s219 = ssub.s32 %s22, 1
        // Predicated region
        $region13: #{tpu_custom_call.1} parent=11 // pred_check
          %p220 = pneg %p43
        $region14: #{tpu_custom_call.1} parent=11 // pred_check_branch
          %222 = sbr.rel (%p220) target = $region16
        $region15: #{tpu_custom_call.1} parent=11 // pred_region
          %s224 = ssub.s32 16, 16
          %225 = vsyncadd [#allocation5], %s224
          %228 = dma.hbm_to_smem %s0, 16, [#allocation2], [#allocation5]
        $region16: #{tpu_custom_call.1} parent=11 // pred_fallthru
          _
        // Predicated region
        $region17: #{tpu_custom_call.1} parent=11 // pred_check
          %p229 = pneg %p90
        $region18: #{tpu_custom_call.1} parent=11 // pred_check_branch
          %231 = sbr.rel (%p229) target = $region20
        $region19: #{tpu_custom_call.1} parent=11 // pred_region
          %s233 = ssub.s32 3072, 3072
          %234 = vsyncadd [#allocation8], %s233
          %s235 = sshll.u32 [#allocation7], 4
          %s236 = int_to_ptr.vmem [resolvable:$true] %s235
          %241 = dma.hbm_to_vmem [thread:$0]  %s2, 3072, %s236, [#allocation8], 192, 192, 12
        $region20: #{tpu_custom_call.1} parent=11 // pred_fallthru
          _
        // Predicated region
        $region21: #{tpu_custom_call.1} parent=11 // pred_check
          %p242 = pneg %p111
        $region22: #{tpu_custom_call.1} parent=11 // pred_check_branch
          %244 = sbr.rel (%p242) target = $region24
        $region23: #{tpu_custom_call.1} parent=11 // pred_region
          %s246 = ssub.s32 2048, 2048
          %247 = vsyncadd [#allocation8], %s246
          %s248 = sshll.u32 [#allocation9], 4
          %s249 = int_to_ptr.vmem [resolvable:$true] %s248
          %254 = dma.hbm_to_vmem [thread:$0]  %s3, 2048, %s249, [#allocation8], 128, 128, 8
        $region24: #{tpu_custom_call.1} parent=11 // pred_fallthru
          _
        // Predicated region
        $region25: #{tpu_custom_call.1} parent=11 // pred_check
          %p255 = pneg %p132
        $region26: #{tpu_custom_call.1} parent=11 // pred_check_branch
          %257 = sbr.rel (%p255) target = $region28
        $region27: #{tpu_custom_call.1} parent=11 // pred_region
          %s259 = ssub.s32 2048, 2048
          %260 = vsyncadd [#allocation11], %s259
          %s261 = sshll.u32 [#allocation10], 4
          %s262 = int_to_ptr.vmem [resolvable:$true] %s261
          %267 = dma.hbm_to_vmem [thread:$0]  %s4, 2048, %s262, [#allocation11], 128, 128, 8
        $region28: #{tpu_custom_call.1} parent=11 // pred_fallthru
          _
        // Predicated region
        $region29: #{tpu_custom_call.1} parent=11 // pred_check
          %p268 = pneg %p179
        $region30: #{tpu_custom_call.1} parent=11 // pred_check_branch
          %270 = sbr.rel (%p268) target = $region32
        $region31: #{tpu_custom_call.1} parent=11 // pred_region
          %s272 = ssub.s32 1024, 1024
          %273 = vsyncadd [#allocation8], %s272
          %s274 = sshll.u32 [#allocation13], 4
          %s275 = int_to_ptr.vmem [resolvable:$true] %s274
          %280 = dma.hbm_to_vmem [thread:$0]  %s6, 1024, %s275, [#allocation8], 64, 64, 4
        $region32: #{tpu_custom_call.1} parent=11 // pred_fallthru
          _
      $region12: #{tpu_custom_call.1} parent=5 // pred_fallthru
        _
      %p281 = scmp.lt.s32.totalorder %s22, 2
      // Predicated region
      $region33: #{tpu_custom_call.1} parent=5 // pred_check
        %p282 = pneg %p281
      $region34: #{tpu_custom_call.1} parent=5 // pred_check_branch
        %284 = sbr.rel (%p282) target = $region36
      $region35: #{tpu_custom_call.1} parent=5 // pred_region
        // Predicated region
        $region37: #{tpu_custom_call.1} parent=35 // pred_check
          %p285 = pneg %p63
        $region38: #{tpu_custom_call.1} parent=35 // pred_check_branch
          %287 = sbr.rel (%p285) target = $region40
        $region39: #{tpu_custom_call.1} parent=35 // pred_region
          %s288 = sand.u32 %s22, 1
          %s289 = scalar_lea.sflag [#allocation3], %s288
          %s290 = sand.u32 %s53, 1
          %s291 = smul.addr %s290, 64
          %s292 = scalar_lea.vmem [#allocation6], %s291
          %s294 = ssub.s32 1024, 1024
          %295 = vsyncadd %s289, %s294
          %s296 = smul.addr %s22, 16
          %s297 = smul.addr %s296, 64
          %s298 = scalar_lea.hbm %s1, %s297
          %s299 = sshll.u32 %s292, 4
          %s300 = int_to_ptr.vmem [resolvable:$true] %s299
          %305 = dma.hbm_to_vmem [thread:$0]  %s298, 1024, %s300, %s289, 64, 64, 4
        $region40: #{tpu_custom_call.1} parent=35 // pred_fallthru
          _
        // Predicated region
        $region41: #{tpu_custom_call.1} parent=35 // pred_check
          %p306 = pneg %p152
        $region42: #{tpu_custom_call.1} parent=35 // pred_check_branch
          %308 = sbr.rel (%p306) target = $region44
        $region43: #{tpu_custom_call.1} parent=35 // pred_region
          %s309 = sand.u32 %s22, 1
          %s310 = scalar_lea.sflag [#allocation3], %s309
          %s311 = sand.u32 %s142, 1
          %s312 = smul.addr %s311, 64
          %s313 = scalar_lea.vmem [#allocation12], %s312
          %s315 = ssub.s32 1024, 1024
          %316 = vsyncadd %s310, %s315
          %s317 = smul.addr %s22, 16
          %s318 = smul.addr %s317, 64
          %s319 = scalar_lea.hbm %s5, %s318
          %s320 = sshll.u32 %s313, 4
          %s321 = int_to_ptr.vmem [resolvable:$true] %s320
          %326 = dma.hbm_to_vmem [thread:$0]  %s319, 1024, %s321, %s310, 64, 64, 4
        $region44: #{tpu_custom_call.1} parent=35 // pred_fallthru
          _
      $region36: #{tpu_custom_call.1} parent=5 // pred_fallthru
        _
      %p327 = scmp.le.s32.totalorder 1, %s22
      %p328 = scmp.lt.s32.totalorder %s22, 3
      %p329 = pnand %p327, %p328
      %p330 = pneg %p329
      // Predicated region
      $region45: #{tpu_custom_call.1} parent=5 // pred_check
        _
      $region46: #{tpu_custom_call.1} parent=5 // pred_check_branch
        %332 = sbr.rel (%p329) target = $region48
      $region47: #{tpu_custom_call.1} parent=5 // pred_region
        %s333 = ssub.s32 %s22, 1
        // Predicated region
        $region49: #{tpu_custom_call.1} parent=47 // pred_check
          %p334 = pneg %p43
        $region50: #{tpu_custom_call.1} parent=47 // pred_check_branch
          %336 = sbr.rel (%p334) target = $region52
        $region51: #{tpu_custom_call.1} parent=47 // pred_region
          %337 = dma.done [#allocation5], 16
        $region52: #{tpu_custom_call.1} parent=47 // pred_fallthru
          _
        %s338 = sand.u32 %s27, 1
        %s339 = scalar_lea.sflag [#allocation3], %s338
        %s340 = sand.u32 %s56, 1
        %s341 = smul.addr %s340, 64
        %s342 = scalar_lea.vmem [#allocation6], %s341
        // Predicated region
        $region53: #{tpu_custom_call.1} parent=47 // pred_check
          %p343 = pneg %p69
        $region54: #{tpu_custom_call.1} parent=47 // pred_check_branch
          %345 = sbr.rel (%p343) target = $region56
        $region55: #{tpu_custom_call.1} parent=47 // pred_region
          %346 = dma.done %s339, 1024
        $region56: #{tpu_custom_call.1} parent=47 // pred_fallthru
          _
        // Predicated region
        $region57: #{tpu_custom_call.1} parent=47 // pred_check
          %p347 = pneg %p90
        $region58: #{tpu_custom_call.1} parent=47 // pred_check_branch
          %349 = sbr.rel (%p347) target = $region60
        $region59: #{tpu_custom_call.1} parent=47 // pred_region
          %350 = dma.done [#allocation8], 3072
        $region60: #{tpu_custom_call.1} parent=47 // pred_fallthru
          _
        // Predicated region
        $region61: #{tpu_custom_call.1} parent=47 // pred_check
          %p351 = pneg %p111
        $region62: #{tpu_custom_call.1} parent=47 // pred_check_branch
          %353 = sbr.rel (%p351) target = $region64
        $region63: #{tpu_custom_call.1} parent=47 // pred_region
          %354 = dma.done [#allocation8], 2048
        $region64: #{tpu_custom_call.1} parent=47 // pred_fallthru
          _
        // Predicated region
        $region65: #{tpu_custom_call.1} parent=47 // pred_check
          %p355 = pneg %p132
        $region66: #{tpu_custom_call.1} parent=47 // pred_check_branch
          %357 = sbr.rel (%p355) target = $region68
        $region67: #{tpu_custom_call.1} parent=47 // pred_region
          %358 = dma.done [#allocation11], 2048
        $region68: #{tpu_custom_call.1} parent=47 // pred_fallthru
          _
        %s359 = sand.u32 %s27, 1
        %s360 = scalar_lea.sflag [#allocation3], %s359
        %s361 = sand.u32 %s145, 1
        %s362 = smul.addr %s361, 64
        %s363 = scalar_lea.vmem [#allocation12], %s362
        // Predicated region
        $region69: #{tpu_custom_call.1} parent=47 // pred_check
          %p364 = pneg %p158
        $region70: #{tpu_custom_call.1} parent=47 // pred_check_branch
          %366 = sbr.rel (%p364) target = $region72
        $region71: #{tpu_custom_call.1} parent=47 // pred_region
          %367 = dma.done %s360, 1024
        $region72: #{tpu_custom_call.1} parent=47 // pred_fallthru
          _
        // Predicated region
        $region73: #{tpu_custom_call.1} parent=47 // pred_check
          %p368 = pneg %p179
        $region74: #{tpu_custom_call.1} parent=47 // pred_check_branch
          %370 = sbr.rel (%p368) target = $region76
        $region75: #{tpu_custom_call.1} parent=47 // pred_region
          %371 = dma.done [#allocation8], 1024
        $region76: #{tpu_custom_call.1} parent=47 // pred_fallthru
          _
        %372 = sfence
        %p373 = pneg %p43
        %p374 = pneg %p40
        %s375 = sand.u32 %s27, 1
        %s376 = scalar_lea.sflag [#allocation3], %s375
        %s377 = sand.u32 %s56, 1
        %s378 = smul.addr %s377, 64
        %s379 = scalar_lea.vmem [#allocation6], %s378
        %p380 = pneg %p69
        %p381 = pneg %p66
        %p382 = pneg %p90
        %p383 = pneg %p87
        %p384 = pneg %p111
        %p385 = pneg %p108
        %p386 = pneg %p132
        %p387 = pneg %p129
        %s388 = sand.u32 %s27, 1
        %s389 = scalar_lea.sflag [#allocation3], %s388
        %s390 = sand.u32 %s145, 1
        %s391 = smul.addr %s390, 64
        %s392 = scalar_lea.vmem [#allocation12], %s391
        %p393 = pneg %p158
        %p394 = pneg %p155
        %p395 = pneg %p179
        %p396 = pneg %p176
        %p397 = pneg %p205
        %p398 = pneg %p202
        %s399 = sand.u32 %s192, 1
        %s400 = scalar_lea.sflag [#allocation4], %s399
        %s401 = sand.u32 %s192, 1
        %s402 = smul.addr %s401, 64
        %s403 = scalar_lea.vmem [#allocation14], %s402
        %v405 = vld [vmem:[%s342] sm:$0xf]
        %v406 = vld [vmem:[%s342 + $0x4] sm:$0xf]
        %v407 = vld [vmem:[%s342 + $0x8] sm:$0xf]
        %v408 = vld [vmem:[%s342 + $0xc] sm:$0xf]
        %v409 = vld [vmem:[%s342 + $0x10] sm:$0xf]
        %v410 = vld [vmem:[%s342 + $0x14] sm:$0xf]
        %v411 = vld [vmem:[%s342 + $0x18] sm:$0xf]
        %v412 = vld [vmem:[%s342 + $0x1c] sm:$0xf]
        %v413 = vld [vmem:[%s342 + $0x20] sm:$0xf]
        %v414 = vld [vmem:[%s342 + $0x24] sm:$0xf]
        %v415 = vld [vmem:[%s342 + $0x28] sm:$0xf]
        %v416 = vld [vmem:[%s342 + $0x2c] sm:$0xf]
        %v417 = vld [vmem:[%s342 + $0x30] sm:$0xf]
        %v418 = vld [vmem:[%s342 + $0x34] sm:$0xf]
        %v419 = vld [vmem:[%s342 + $0x38] sm:$0xf]
        %v420 = vld [vmem:[%s342 + $0x3c] sm:$0xf]
        %v421 = vld [vmem:[#allocation7] sm:$0xff]
        %v422 = vld [vmem:[#allocation7 + $0x8] sm:$0xf]
        %v423 = vld [vmem:[#allocation7 + $0xc] sm:$0xff]
        %v424 = vld [vmem:[#allocation7 + $0x14] sm:$0xf]
        %v425 = vld [vmem:[#allocation7 + $0x18] sm:$0xff]
        %v426 = vld [vmem:[#allocation7 + $0x20] sm:$0xf]
        %v427 = vld [vmem:[#allocation7 + $0x24] sm:$0xff]
        %v428 = vld [vmem:[#allocation7 + $0x2c] sm:$0xf]
        %v429 = vld [vmem:[#allocation7 + $0x30] sm:$0xff]
        %v430 = vld [vmem:[#allocation7 + $0x38] sm:$0xf]
        %v431 = vld [vmem:[#allocation7 + $0x3c] sm:$0xff]
        %v432 = vld [vmem:[#allocation7 + $0x44] sm:$0xf]
        %v433 = vld [vmem:[#allocation7 + $0x48] sm:$0xff]
        %v434 = vld [vmem:[#allocation7 + $0x50] sm:$0xf]
        %v435 = vld [vmem:[#allocation7 + $0x54] sm:$0xff]
        %v436 = vld [vmem:[#allocation7 + $0x5c] sm:$0xf]
        %v437 = vld [vmem:[#allocation7 + $0x60] sm:$0xff]
        %v438 = vld [vmem:[#allocation7 + $0x68] sm:$0xf]
        %v439 = vld [vmem:[#allocation7 + $0x6c] sm:$0xff]
        %v440 = vld [vmem:[#allocation7 + $0x74] sm:$0xf]
        %v441 = vld [vmem:[#allocation7 + $0x78] sm:$0xff]
        %v442 = vld [vmem:[#allocation7 + $0x80] sm:$0xf]
        %v443 = vld [vmem:[#allocation7 + $0x84] sm:$0xff]
        %v444 = vld [vmem:[#allocation7 + $0x8c] sm:$0xf]
        %v445 = vld [vmem:[#allocation7 + $0x90] sm:$0xff]
        %v446 = vld [vmem:[#allocation7 + $0x98] sm:$0xf]
        %v447 = vld [vmem:[#allocation7 + $0x9c] sm:$0xff]
        %v448 = vld [vmem:[#allocation7 + $0xa4] sm:$0xf]
        %v449 = vld [vmem:[#allocation7 + $0xa8] sm:$0xff]
        %v450 = vld [vmem:[#allocation7 + $0xb0] sm:$0xf]
        %v451 = vld [vmem:[#allocation7 + $0xb4] sm:$0xff]
        %v452 = vld [vmem:[#allocation7 + $0xbc] sm:$0xf]
        %v469 = vunpack.c.l.b16 %v405
        %v470 = vunpack.c.l.b16 %v406
        %v471 = vunpack.c.l.b16 %v407
        %v472 = vunpack.c.l.b16 %v408
        %v473 = vunpack.c.l.b16 %v409
        %v474 = vunpack.c.l.b16 %v410
        %v475 = vunpack.c.l.b16 %v411
        %v476 = vunpack.c.l.b16 %v412
        %v477 = vunpack.c.l.b16 %v413
        %v478 = vunpack.c.l.b16 %v414
        %v479 = vunpack.c.l.b16 %v415
        %v480 = vunpack.c.l.b16 %v416
        %v481 = vunpack.c.l.b16 %v417
        %v482 = vunpack.c.l.b16 %v418
        %v483 = vunpack.c.l.b16 %v419
        %v484 = vunpack.c.l.b16 %v420
        %v485 = vpack.c.b16 %v470, %v469
        %v486 = vpack.c.b16 %v472, %v471
        %v487 = vpack.c.b16 %v474, %v473
        %v488 = vpack.c.b16 %v476, %v475
        %v489 = vpack.c.b16 %v478, %v477
        %v490 = vpack.c.b16 %v480, %v479
        %v491 = vpack.c.b16 %v482, %v481
        %v492 = vpack.c.b16 %v484, %v483
        %v533 = vunpack.c.l.b16 %v421
        %v534 = vunpack.c.h.b16 %v421
        %v535 = vunpack.c.l.b16 %v422
        %v536 = vunpack.c.l.b16 %v423
        %v537 = vunpack.c.h.b16 %v423
        %v538 = vunpack.c.l.b16 %v424
        %v539 = vunpack.c.l.b16 %v425
        %v540 = vunpack.c.h.b16 %v425
        %v541 = vunpack.c.l.b16 %v426
        %v542 = vunpack.c.l.b16 %v427
        %v543 = vunpack.c.h.b16 %v427
        %v544 = vunpack.c.l.b16 %v428
        %v545 = vunpack.c.l.b16 %v429
        %v546 = vunpack.c.h.b16 %v429
        %v547 = vunpack.c.l.b16 %v430
        %v548 = vunpack.c.l.b16 %v431
        %v549 = vunpack.c.h.b16 %v431
        %v550 = vunpack.c.l.b16 %v432
        %v551 = vunpack.c.l.b16 %v433
        %v552 = vunpack.c.h.b16 %v433
        %v553 = vunpack.c.l.b16 %v434
        %v554 = vunpack.c.l.b16 %v435
        %v555 = vunpack.c.h.b16 %v435
        %v556 = vunpack.c.l.b16 %v436
        %v557 = vunpack.c.l.b16 %v437
        %v558 = vunpack.c.h.b16 %v437
        %v559 = vunpack.c.l.b16 %v438
        %v560 = vunpack.c.l.b16 %v439
        %v561 = vunpack.c.h.b16 %v439
        %v562 = vunpack.c.l.b16 %v440
        %v563 = vunpack.c.l.b16 %v441
        %v564 = vunpack.c.h.b16 %v441
        %v565 = vunpack.c.l.b16 %v442
        %v566 = vunpack.c.l.b16 %v443
        %v567 = vunpack.c.h.b16 %v443
        %v568 = vunpack.c.l.b16 %v444
        %v569 = vunpack.c.l.b16 %v445
        %v570 = vunpack.c.h.b16 %v445
        %v571 = vunpack.c.l.b16 %v446
        %v572 = vunpack.c.l.b16 %v447
        %v573 = vunpack.c.h.b16 %v447
        %v574 = vunpack.c.l.b16 %v448
        %v575 = vunpack.c.l.b16 %v449
        %v576 = vunpack.c.h.b16 %v449
        %v577 = vunpack.c.l.b16 %v450
        %v578 = vunpack.c.l.b16 %v451
        %v579 = vunpack.c.h.b16 %v451
        %v580 = vunpack.c.l.b16 %v452
        %v581 = vpack.c.b16 %v536, %v533
        %v582 = vpack.c.b16 %v537, %v534
        %v583 = vpack.c.b16 %v538, %v535
        %v584 = vpack.c.b16 %v542, %v539
        %v585 = vpack.c.b16 %v543, %v540
        %v586 = vpack.c.b16 %v544, %v541
        %v587 = vpack.c.b16 %v548, %v545
        %v588 = vpack.c.b16 %v549, %v546
        %v589 = vpack.c.b16 %v550, %v547
        %v590 = vpack.c.b16 %v554, %v551
        %v591 = vpack.c.b16 %v555, %v552
        %v592 = vpack.c.b16 %v556, %v553
        %v593 = vpack.c.b16 %v560, %v557
        %v594 = vpack.c.b16 %v561, %v558
        %v595 = vpack.c.b16 %v562, %v559
        %v596 = vpack.c.b16 %v566, %v563
        %v597 = vpack.c.b16 %v567, %v564
        %v598 = vpack.c.b16 %v568, %v565
        %v599 = vpack.c.b16 %v572, %v569
        %v600 = vpack.c.b16 %v573, %v570
        %v601 = vpack.c.b16 %v574, %v571
        %v602 = vpack.c.b16 %v578, %v575
        %v603 = vpack.c.b16 %v579, %v576
        %v604 = vpack.c.b16 %v580, %v577
        %629 = vmatprep.subr.bf16.mxu0 %v582
        %630 = vmatpush1.bf16.msra.mxu0 %v581
        %631 = vmatprep.subr.bf16.mxu0 %v585
        %632 = vmatpush1.bf16.msra.mxu0 %v584
        %633 = vmatprep.subr.bf16.mxu0 %v588
        %634 = vmatpush1.bf16.msra.mxu0 %v587
        %635 = vmatprep.subr.bf16.mxu0 %v591
        %636 = vmatpush1.bf16.msra.mxu0 %v590
        %637 = vmatprep.subr.bf16.mxu0 %v594
        %638 = vmatpush1.bf16.msra.mxu0 %v593
        %639 = vmatprep.subr.bf16.mxu0 %v597
        %640 = vmatpush1.bf16.msra.mxu0 %v596
        %641 = vmatprep.subr.bf16.mxu0 %v600
        %642 = vmatpush1.bf16.msra.mxu0 %v599
        %643 = vmatprep.subr.bf16.mxu0 %v603
        %644 = vmatpush1.bf16.msra.mxu0 %v602
        %645 = vmatprep.subr.bf16.mxu0 0
        %646 = vmatpush1.bf16.msra.mxu0 0
        %647 = vmatprep.subr.bf16.mxu0 0
        %648 = vmatpush1.bf16.msra.mxu0 0
        %649 = vmatprep.subr.bf16.mxu0 0
        %650 = vmatpush1.bf16.msra.mxu0 0
        %651 = vmatprep.subr.bf16.mxu0 0
        %652 = vmatpush1.bf16.msra.mxu0 0
        %653 = vmatprep.subr.bf16.mxu0 0
        %654 = vmatpush1.bf16.msra.mxu0 0
        %655 = vmatprep.subr.bf16.mxu0 0
        %656 = vmatpush1.bf16.msra.mxu0 0
        %657 = vmatprep.subr.bf16.mxu0 0
        %658 = vmatpush1.bf16.msra.mxu0 0
        %659 = vmatprep.subr.bf16.mxu0 0
        %660 = vmatpush1.bf16.msra.mxu0 0
        %661 = vmatprep.mubr.bf16.mxu0 0
        %662 = vmatmul.mubr.bf16.gmra.mrb[0].mxu0 %v485
        %v663 = vpop.f32.mrb[0].mxu0
        %v664 = vadd.f32 0.0, %v663
        %v665 = vpop.f32.mrb[0].mxu0
        %v666 = vadd.f32 0.0, %v665
        %v667 = vpop.f32.mrb[0].mxu0
        %v668 = vadd.f32 0.0, %v667
        %v669 = vpop.f32.mrb[0].mxu0
        %v670 = vadd.f32 0.0, %v669
        %671 = vmatprep.mubr.bf16.mxu0 0
        %672 = vmatmul.mubr.bf16.gmra.mrb[0].mxu0 %v486
        %v673 = vpop.f32.mrb[0].mxu0
        %v674 = vadd.f32 0.0, %v673
        %v675 = vpop.f32.mrb[0].mxu0
        %v676 = vadd.f32 0.0, %v675
        %v677 = vpop.f32.mrb[0].mxu0
        %v678 = vadd.f32 0.0, %v677
        %v679 = vpop.f32.mrb[0].mxu0
        %v680 = vadd.f32 0.0, %v679
        %681 = vmatprep.mubr.bf16.mxu0 0
        %682 = vmatmul.mubr.bf16.gmra.mrb[0].mxu0 %v487
        %v683 = vpop.f32.mrb[0].mxu0
        %v684 = vadd.f32 0.0, %v683
        %v685 = vpop.f32.mrb[0].mxu0
        %v686 = vadd.f32 0.0, %v685
        %v687 = vpop.f32.mrb[0].mxu0
        %v688 = vadd.f32 0.0, %v687
        %v689 = vpop.f32.mrb[0].mxu0
        %v690 = vadd.f32 0.0, %v689
        %691 = vmatprep.mubr.bf16.mxu0 0
        %692 = vmatmul.mubr.bf16.gmra.mrb[0].mxu0 %v488
        %v693 = vpop.f32.mrb[0].mxu0
        %v694 = vadd.f32 0.0, %v693
        %v695 = vpop.f32.mrb[0].mxu0
        %v696 = vadd.f32 0.0, %v695
        %v697 = vpop.f32.mrb[0].mxu0
        %v698 = vadd.f32 0.0, %v697
        %v699 = vpop.f32.mrb[0].mxu0
        %v700 = vadd.f32 0.0, %v699
        %701 = vmatprep.mubr.bf16.mxu0 0
        %702 = vmatmul.mubr.bf16.gmra.mrb[0].mxu0 %v489
        %v703 = vpop.f32.mrb[0].mxu0
        %v704 = vadd.f32 0.0, %v703
        %v705 = vpop.f32.mrb[0].mxu0
        %v706 = vadd.f32 0.0, %v705
        %v707 = vpop.f32.mrb[0].mxu0
        %v708 = vadd.f32 0.0, %v707
        %v709 = vpop.f32.mrb[0].mxu0
        %v710 = vadd.f32 0.0, %v709
        %711 = vmatprep.mubr.bf16.mxu0 0
        %712 = vmatmul.mubr.bf16.gmra.mrb[0].mxu0 %v490
        %v713 = vpop.f32.mrb[0].mxu0
        %v714 = vadd.f32 0.0, %v713
        %v715 = vpop.f32.mrb[0].mxu0
        %v716 = vadd.f32 0.0, %v715
        %v717 = vpop.f32.mrb[0].mxu0
        %v718 = vadd.f32 0.0, %v717
        %v719 = vpop.f32.mrb[0].mxu0
        %v720 = vadd.f32 0.0, %v719
        %721 = vmatprep.mubr.bf16.mxu0 0
        %722 = vmatmul.mubr.bf16.gmra.mrb[0].mxu0 %v491
        %v723 = vpop.f32.mrb[0].mxu0
        %v724 = vadd.f32 0.0, %v723
        %v725 = vpop.f32.mrb[0].mxu0
        %v726 = vadd.f32 0.0, %v725
        %v727 = vpop.f32.mrb[0].mxu0
        %v728 = vadd.f32 0.0, %v727
        %v729 = vpop.f32.mrb[0].mxu0
        %v730 = vadd.f32 0.0, %v729
        %731 = vmatprep.mubr.bf16.mxu0 0
        %732 = vmatmul.mubr.bf16.gmra.mrb[0].mxu0 %v492
        %v733 = vpop.f32.mrb[0].mxu0
        %v734 = vadd.f32 0.0, %v733
        %v735 = vpop.f32.mrb[0].mxu0
        %v736 = vadd.f32 0.0, %v735
        %v737 = vpop.f32.mrb[0].mxu0
        %v738 = vadd.f32 0.0, %v737
        %v739 = vpop.f32.mrb[0].mxu0
        %v740 = vadd.f32 0.0, %v739
        %741 = vdwg.mxu0
        %742 = vmatprep.subr.bf16.mxu0 0
        %743 = vmatpush1.bf16.msra.mxu0 %v583
        %744 = vmatprep.subr.bf16.mxu0 0
        %745 = vmatpush1.bf16.msra.mxu0 %v586
        %746 = vmatprep.subr.bf16.mxu0 0
        %747 = vmatpush1.bf16.msra.mxu0 %v589
        %748 = vmatprep.subr.bf16.mxu0 0
        %749 = vmatpush1.bf16.msra.mxu0 %v592
        %750 = vmatprep.subr.bf16.mxu0 0
        %751 = vmatpush1.bf16.msra.mxu0 %v595
        %752 = vmatprep.subr.bf16.mxu0 0
        %753 = vmatpush1.bf16.msra.mxu0 %v598
        %754 = vmatprep.subr.bf16.mxu0 0
        %755 = vmatpush1.bf16.msra.mxu0 %v601
        %756 = vmatprep.subr.bf16.mxu0 0
        %757 = vmatpush1.bf16.msra.mxu0 %v604
        %758 = vmatprep.subr.bf16.mxu0 0
        %759 = vmatpush1.bf16.msra.mxu0 0
        %760 = vmatprep.subr.bf16.mxu0 0
        %761 = vmatpush1.bf16.msra.mxu0 0
        %762 = vmatprep.subr.bf16.mxu0 0
        %763 = vmatpush1.bf16.msra.mxu0 0
        %764 = vmatprep.subr.bf16.mxu0 0
        %765 = vmatpush1.bf16.msra.mxu0 0
        %766 = vmatprep.subr.bf16.mxu0 0
        %767 = vmatpush1.bf16.msra.mxu0 0
        %768 = vmatprep.subr.bf16.mxu0 0
        %769 = vmatpush1.bf16.msra.mxu0 0
        %770 = vmatprep.subr.bf16.mxu0 0
        %771 = vmatpush1.bf16.msra.mxu0 0
        %772 = vmatprep.subr.bf16.mxu0 0
        %773 = vmatpush1.bf16.msra.mxu0 0
        %774 = vmatprep.mubr.bf16.mxu0 0
        %775 = vmatmul.mubr.bf16.gmra.mrb[0].mxu0 %v485
        %v776 = vpop.f32.mrb[0].mxu0
        %v777 = vadd.f32 0.0, %v776
        %v778 = vpop.f32.mrb[0].mxu0
        %v779 = vpop.f32.mrb[0].mxu0
        %v780 = vadd.f32 0.0, %v779
        %v781 = vpop.f32.mrb[0].mxu0
        %782 = vmatprep.mubr.bf16.mxu0 0
        %783 = vmatmul.mubr.bf16.gmra.mrb[0].mxu0 %v486
        %v784 = vpop.f32.mrb[0].mxu0
        %v785 = vadd.f32 0.0, %v784
        %v786 = vpop.f32.mrb[0].mxu0
        %v787 = vpop.f32.mrb[0].mxu0
        %v788 = vadd.f32 0.0, %v787
        %v789 = vpop.f32.mrb[0].mxu0
        %790 = vmatprep.mubr.bf16.mxu0 0
        %791 = vmatmul.mubr.bf16.gmra.mrb[0].mxu0 %v487
        %v792 = vpop.f32.mrb[0].mxu0
        %v793 = vadd.f32 0.0, %v792
        %v794 = vpop.f32.mrb[0].mxu0
        %v795 = vpop.f32.mrb[0].mxu0
        %v796 = vadd.f32 0.0, %v795
        %v797 = vpop.f32.mrb[0].mxu0
        %798 = vmatprep.mubr.bf16.mxu0 0
        %799 = vmatmul.mubr.bf16.gmra.mrb[0].mxu0 %v488
        %v800 = vpop.f32.mrb[0].mxu0
        %v801 = vadd.f32 0.0, %v800
        %v802 = vpop.f32.mrb[0].mxu0
        %v803 = vpop.f32.mrb[0].mxu0
        %v804 = vadd.f32 0.0, %v803
        %v805 = vpop.f32.mrb[0].mxu0
        %806 = vmatprep.mubr.bf16.mxu0 0
        %807 = vmatmul.mubr.bf16.gmra.mrb[0].mxu0 %v489
        %v808 = vpop.f32.mrb[0].mxu0
        %v809 = vadd.f32 0.0, %v808
        %v810 = vpop.f32.mrb[0].mxu0
        %v811 = vpop.f32.mrb[0].mxu0
        %v812 = vadd.f32 0.0, %v811
        %v813 = vpop.f32.mrb[0].mxu0
        %814 = vmatprep.mubr.bf16.mxu0 0
        %815 = vmatmul.mubr.bf16.gmra.mrb[0].mxu0 %v490
        %v816 = vpop.f32.mrb[0].mxu0
        %v817 = vadd.f32 0.0, %v816
        %v818 = vpop.f32.mrb[0].mxu0
        %v819 = vpop.f32.mrb[0].mxu0
        %v820 = vadd.f32 0.0, %v819
        %v821 = vpop.f32.mrb[0].mxu0
        %822 = vmatprep.mubr.bf16.mxu0 0
        %823 = vmatmul.mubr.bf16.gmra.mrb[0].mxu0 %v491
        %v824 = vpop.f32.mrb[0].mxu0
        %v825 = vadd.f32 0.0, %v824
        %v826 = vpop.f32.mrb[0].mxu0
        %v827 = vpop.f32.mrb[0].mxu0
        %v828 = vadd.f32 0.0, %v827
        %v829 = vpop.f32.mrb[0].mxu0
        %830 = vmatprep.mubr.bf16.mxu0 0
        %831 = vmatmul.mubr.bf16.gmra.mrb[0].mxu0 %v492
        %v832 = vpop.f32.mrb[0].mxu0
        %v833 = vadd.f32 0.0, %v832
        %v834 = vpop.f32.mrb[0].mxu0
        %v835 = vpop.f32.mrb[0].mxu0
        %v836 = vadd.f32 0.0, %v835
        %v837 = vpop.f32.mrb[0].mxu0
        %838 = vdwg.mxu0
        %s839 = sld [smem:[#allocation2]]
        %s840 = sld [smem:[#allocation2 + $0x1]]
        %v841 = vld [vmem:[#allocation9] sm:$0xff]
        %v842 = vld [vmem:[#allocation9 + $0x8] sm:$0xff]
        %v843 = vld [vmem:[#allocation9 + $0x10] sm:$0xff]
        %v844 = vld [vmem:[#allocation9 + $0x18] sm:$0xff]
        %v845 = vld [vmem:[#allocation9 + $0x20] sm:$0xff]
        %v846 = vld [vmem:[#allocation9 + $0x28] sm:$0xff]
        %v847 = vld [vmem:[#allocation9 + $0x30] sm:$0xff]
        %v848 = vld [vmem:[#allocation9 + $0x38] sm:$0xff]
        %v849 = vld [vmem:[#allocation9 + $0x40] sm:$0xff]
        %v850 = vld [vmem:[#allocation9 + $0x48] sm:$0xff]
        %v851 = vld [vmem:[#allocation9 + $0x50] sm:$0xff]
        %v852 = vld [vmem:[#allocation9 + $0x58] sm:$0xff]
        %v853 = vld [vmem:[#allocation9 + $0x60] sm:$0xff]
        %v854 = vld [vmem:[#allocation9 + $0x68] sm:$0xff]
        %v855 = vld [vmem:[#allocation9 + $0x70] sm:$0xff]
        %v856 = vld [vmem:[#allocation9 + $0x78] sm:$0xff]
        %v857 = vld [vmem:[#allocation10] sm:$0xff]
        %v858 = vld [vmem:[#allocation10 + $0x8] sm:$0xff]
        %v859 = vld [vmem:[#allocation10 + $0x10] sm:$0xff]
        %v860 = vld [vmem:[#allocation10 + $0x18] sm:$0xff]
        %v861 = vld [vmem:[#allocation10 + $0x20] sm:$0xff]
        %v862 = vld [vmem:[#allocation10 + $0x28] sm:$0xff]
        %v863 = vld [vmem:[#allocation10 + $0x30] sm:$0xff]
        %v864 = vld [vmem:[#allocation10 + $0x38] sm:$0xff]
        %v865 = vld [vmem:[#allocation10 + $0x40] sm:$0xff]
        %v866 = vld [vmem:[#allocation10 + $0x48] sm:$0xff]
        %v867 = vld [vmem:[#allocation10 + $0x50] sm:$0xff]
        %v868 = vld [vmem:[#allocation10 + $0x58] sm:$0xff]
        %v869 = vld [vmem:[#allocation10 + $0x60] sm:$0xff]
        %v870 = vld [vmem:[#allocation10 + $0x68] sm:$0xff]
        %v871 = vld [vmem:[#allocation10 + $0x70] sm:$0xff]
        %v872 = vld [vmem:[#allocation10 + $0x78] sm:$0xff]
        %v873 = vmul.f32 %v664, %v664
        %v874 = vmul.f32 %v668, %v668
        %v875 = vmul.f32 %v674, %v674
        %v876 = vmul.f32 %v678, %v678
        %v877 = vmul.f32 %v684, %v684
        %v878 = vmul.f32 %v688, %v688
        %v879 = vmul.f32 %v694, %v694
        %v880 = vmul.f32 %v698, %v698
        %v881 = vmul.f32 %v704, %v704
        %v882 = vmul.f32 %v708, %v708
        %v883 = vmul.f32 %v714, %v714
        %v884 = vmul.f32 %v718, %v718
        %v885 = vmul.f32 %v724, %v724
        %v886 = vmul.f32 %v728, %v728
        %v887 = vmul.f32 %v734, %v734
        %v888 = vmul.f32 %v738, %v738
        %vm889 = vcmask 523264
        %v890 = vsel %vm889, %v873, 0.0
        %891 = vadd.xlane.f32.xlu0 %v890
        %v892 = vpop.xlane.xlu0 %891
        %v893 = vsel %vm889, %v874, 0.0
        %894 = vadd.xlane.f32.xlu0 %v893
        %v895 = vpop.xlane.xlu0 %894
        %v896 = vsel %vm889, %v875, 0.0
        %897 = vadd.xlane.f32.xlu0 %v896
        %v898 = vpop.xlane.xlu0 %897
        %v899 = vsel %vm889, %v876, 0.0
        %900 = vadd.xlane.f32.xlu0 %v899
        %v901 = vpop.xlane.xlu0 %900
        %v902 = vsel %vm889, %v877, 0.0
        %903 = vadd.xlane.f32.xlu0 %v902
        %v904 = vpop.xlane.xlu0 %903
        %v905 = vsel %vm889, %v878, 0.0
        %906 = vadd.xlane.f32.xlu0 %v905
        %v907 = vpop.xlane.xlu0 %906
        %v908 = vsel %vm889, %v879, 0.0
        %909 = vadd.xlane.f32.xlu0 %v908
        %v910 = vpop.xlane.xlu0 %909
        %v911 = vsel %vm889, %v880, 0.0
        %912 = vadd.xlane.f32.xlu0 %v911
        %v913 = vpop.xlane.xlu0 %912
        %v914 = vsel %vm889, %v881, 0.0
        %915 = vadd.xlane.f32.xlu0 %v914
        %v916 = vpop.xlane.xlu0 %915
        %v917 = vsel %vm889, %v882, 0.0
        %918 = vadd.xlane.f32.xlu0 %v917
        %v919 = vpop.xlane.xlu0 %918
        %v920 = vsel %vm889, %v883, 0.0
        %921 = vadd.xlane.f32.xlu0 %v920
        %v922 = vpop.xlane.xlu0 %921
        %v923 = vsel %vm889, %v884, 0.0
        %924 = vadd.xlane.f32.xlu0 %v923
        %v925 = vpop.xlane.xlu0 %924
        %v926 = vsel %vm889, %v885, 0.0
        %927 = vadd.xlane.f32.xlu0 %v926
        %v928 = vpop.xlane.xlu0 %927
        %v929 = vsel %vm889, %v886, 0.0
        %930 = vadd.xlane.f32.xlu0 %v929
        %v931 = vpop.xlane.xlu0 %930
        %v932 = vsel %vm889, %v887, 0.0
        %933 = vadd.xlane.f32.xlu0 %v932
        %v934 = vpop.xlane.xlu0 %933
        %v935 = vsel %vm889, %v888, 0.0
        %936 = vadd.xlane.f32.xlu0 %v935
        %v937 = vpop.xlane.xlu0 %936
        %v938 = vrcp.pop 64.0
        %v939 = vmul.f32 %v892, %v938
        %v940 = vmul.f32 %v895, %v938
        %v941 = vmul.f32 %v898, %v938
        %v942 = vmul.f32 %v901, %v938
        %v943 = vmul.f32 %v904, %v938
        %v944 = vmul.f32 %v907, %v938
        %v945 = vmul.f32 %v910, %v938
        %v946 = vmul.f32 %v913, %v938
        %v947 = vmul.f32 %v916, %v938
        %v948 = vmul.f32 %v919, %v938
        %v949 = vmul.f32 %v922, %v938
        %v950 = vmul.f32 %v925, %v938
        %v951 = vmul.f32 %v928, %v938
        %v952 = vmul.f32 %v931, %v938
        %v953 = vmul.f32 %v934, %v938
        %v954 = vmul.f32 %v937, %v938
        %v955 = vadd.f32 %v939, 1.1920929e-07
        %v956 = vadd.f32 %v940, 1.1920929e-07
        %v957 = vadd.f32 %v941, 1.1920929e-07
        %v958 = vadd.f32 %v942, 1.1920929e-07
        %v959 = vadd.f32 %v943, 1.1920929e-07
        %v960 = vadd.f32 %v944, 1.1920929e-07
        %v961 = vadd.f32 %v945, 1.1920929e-07
        %v962 = vadd.f32 %v946, 1.1920929e-07
        %v963 = vadd.f32 %v947, 1.1920929e-07
        %v964 = vadd.f32 %v948, 1.1920929e-07
        %v965 = vadd.f32 %v949, 1.1920929e-07
        %v966 = vadd.f32 %v950, 1.1920929e-07
        %v967 = vadd.f32 %v951, 1.1920929e-07
        %v968 = vadd.f32 %v952, 1.1920929e-07
        %v969 = vadd.f32 %v953, 1.1920929e-07
        %v970 = vadd.f32 %v954, 1.1920929e-07
        %v971 = vrsqrt.pop %v955
        %v972 = vrsqrt.pop %v956
        %v973 = vrsqrt.pop %v957
        %v974 = vrsqrt.pop %v958
        %v975 = vrsqrt.pop %v959
        %v976 = vrsqrt.pop %v960
        %v977 = vrsqrt.pop %v961
        %v978 = vrsqrt.pop %v962
        %v979 = vrsqrt.pop %v963
        %v980 = vrsqrt.pop %v964
        %v981 = vrsqrt.pop %v965
        %v982 = vrsqrt.pop %v966
        %v983 = vrsqrt.pop %v967
        %v984 = vrsqrt.pop %v968
        %v985 = vrsqrt.pop %v969
        %v986 = vrsqrt.pop %v970
        %v987 = vmul.f32 %v971, 0.12
        %v988 = vmul.f32 %v972, 0.12
        %v989 = vmul.f32 %v973, 0.12
        %v990 = vmul.f32 %v974, 0.12
        %v991 = vmul.f32 %v975, 0.12
        %v992 = vmul.f32 %v976, 0.12
        %v993 = vmul.f32 %v977, 0.12
        %v994 = vmul.f32 %v978, 0.12
        %v995 = vmul.f32 %v979, 0.12
        %v996 = vmul.f32 %v980, 0.12
        %v997 = vmul.f32 %v981, 0.12
        %v998 = vmul.f32 %v982, 0.12
        %v999 = vmul.f32 %v983, 0.12
        %v1000 = vmul.f32 %v984, 0.12
        %v1001 = vmul.f32 %v985, 0.12
        %v1002 = vmul.f32 %v986, 0.12
        %1019 = vrot.lane.b32.xlu0 %v873, 64
        %v1020 = vpop.permute.xlu0 %1019
        %1021 = vrot.lane.b32.xlu0 %v874, 64
        %v1022 = vpop.permute.xlu0 %1021
        %1023 = vrot.lane.b32.xlu0 %v875, 64
        %v1024 = vpop.permute.xlu0 %1023
        %1025 = vrot.lane.b32.xlu0 %v876, 64
        %v1026 = vpop.permute.xlu0 %1025
        %1027 = vrot.lane.b32.xlu0 %v877, 64
        %v1028 = vpop.permute.xlu0 %1027
        %1029 = vrot.lane.b32.xlu0 %v878, 64
        %v1030 = vpop.permute.xlu0 %1029
        %1031 = vrot.lane.b32.xlu0 %v879, 64
        %v1032 = vpop.permute.xlu0 %1031
        %1033 = vrot.lane.b32.xlu0 %v880, 64
        %v1034 = vpop.permute.xlu0 %1033
        %1035 = vrot.lane.b32.xlu0 %v881, 64
        %v1036 = vpop.permute.xlu0 %1035
        %1037 = vrot.lane.b32.xlu0 %v882, 64
        %v1038 = vpop.permute.xlu0 %1037
        %1039 = vrot.lane.b32.xlu0 %v883, 64
        %v1040 = vpop.permute.xlu0 %1039
        %1041 = vrot.lane.b32.xlu0 %v884, 64
        %v1042 = vpop.permute.xlu0 %1041
        %1043 = vrot.lane.b32.xlu0 %v885, 64
        %v1044 = vpop.permute.xlu0 %1043
        %1045 = vrot.lane.b32.xlu0 %v886, 64
        %v1046 = vpop.permute.xlu0 %1045
        %1047 = vrot.lane.b32.xlu0 %v887, 64
        %v1048 = vpop.permute.xlu0 %1047
        %1049 = vrot.lane.b32.xlu0 %v888, 64
        %v1050 = vpop.permute.xlu0 %1049
        %v1067 = vsel %vm889, %v1020, 0.0
        %1068 = vadd.xlane.f32.xlu0 %v1067
        %v1069 = vpop.xlane.xlu0 %1068
        %v1070 = vsel %vm889, %v1022, 0.0
        %1071 = vadd.xlane.f32.xlu0 %v1070
        %v1072 = vpop.xlane.xlu0 %1071
        %v1073 = vsel %vm889, %v1024, 0.0
        %1074 = vadd.xlane.f32.xlu0 %v1073
        %v1075 = vpop.xlane.xlu0 %1074
        %v1076 = vsel %vm889, %v1026, 0.0
        %1077 = vadd.xlane.f32.xlu0 %v1076
        %v1078 = vpop.xlane.xlu0 %1077
        %v1079 = vsel %vm889, %v1028, 0.0
        %1080 = vadd.xlane.f32.xlu0 %v1079
        %v1081 = vpop.xlane.xlu0 %1080
        %v1082 = vsel %vm889, %v1030, 0.0
        %1083 = vadd.xlane.f32.xlu0 %v1082
        %v1084 = vpop.xlane.xlu0 %1083
        %v1085 = vsel %vm889, %v1032, 0.0
        %1086 = vadd.xlane.f32.xlu0 %v1085
        %v1087 = vpop.xlane.xlu0 %1086
        %v1088 = vsel %vm889, %v1034, 0.0
        %1089 = vadd.xlane.f32.xlu0 %v1088
        %v1090 = vpop.xlane.xlu0 %1089
        %v1091 = vsel %vm889, %v1036, 0.0
        %1092 = vadd.xlane.f32.xlu0 %v1091
        %v1093 = vpop.xlane.xlu0 %1092
        %v1094 = vsel %vm889, %v1038, 0.0
        %1095 = vadd.xlane.f32.xlu0 %v1094
        %v1096 = vpop.xlane.xlu0 %1095
        %v1097 = vsel %vm889, %v1040, 0.0
        %1098 = vadd.xlane.f32.xlu0 %v1097
        %v1099 = vpop.xlane.xlu0 %1098
        %v1100 = vsel %vm889, %v1042, 0.0
        %1101 = vadd.xlane.f32.xlu0 %v1100
        %v1102 = vpop.xlane.xlu0 %1101
        %v1103 = vsel %vm889, %v1044, 0.0
        %1104 = vadd.xlane.f32.xlu0 %v1103
        %v1105 = vpop.xlane.xlu0 %1104
        %v1106 = vsel %vm889, %v1046, 0.0
        %1107 = vadd.xlane.f32.xlu0 %v1106
        %v1108 = vpop.xlane.xlu0 %1107
        %v1109 = vsel %vm889, %v1048, 0.0
        %1110 = vadd.xlane.f32.xlu0 %v1109
        %v1111 = vpop.xlane.xlu0 %1110
        %v1112 = vsel %vm889, %v1050, 0.0
        %1113 = vadd.xlane.f32.xlu0 %v1112
        %v1114 = vpop.xlane.xlu0 %1113
        %v1115 = vmul.f32 %v1069, %v938
        %v1116 = vmul.f32 %v1072, %v938
        %v1117 = vmul.f32 %v1075, %v938
        %v1118 = vmul.f32 %v1078, %v938
        %v1119 = vmul.f32 %v1081, %v938
        %v1120 = vmul.f32 %v1084, %v938
        %v1121 = vmul.f32 %v1087, %v938
        %v1122 = vmul.f32 %v1090, %v938
        %v1123 = vmul.f32 %v1093, %v938
        %v1124 = vmul.f32 %v1096, %v938
        %v1125 = vmul.f32 %v1099, %v938
        %v1126 = vmul.f32 %v1102, %v938
        %v1127 = vmul.f32 %v1105, %v938
        %v1128 = vmul.f32 %v1108, %v938
        %v1129 = vmul.f32 %v1111, %v938
        %v1130 = vmul.f32 %v1114, %v938
        %v1131 = vadd.f32 %v1115, 1.1920929e-07
        %v1132 = vadd.f32 %v1116, 1.1920929e-07
        %v1133 = vadd.f32 %v1117, 1.1920929e-07
        %v1134 = vadd.f32 %v1118, 1.1920929e-07
        %v1135 = vadd.f32 %v1119, 1.1920929e-07
        %v1136 = vadd.f32 %v1120, 1.1920929e-07
        %v1137 = vadd.f32 %v1121, 1.1920929e-07
        %v1138 = vadd.f32 %v1122, 1.1920929e-07
        %v1139 = vadd.f32 %v1123, 1.1920929e-07
        %v1140 = vadd.f32 %v1124, 1.1920929e-07
        %v1141 = vadd.f32 %v1125, 1.1920929e-07
        %v1142 = vadd.f32 %v1126, 1.1920929e-07
        %v1143 = vadd.f32 %v1127, 1.1920929e-07
        %v1144 = vadd.f32 %v1128, 1.1920929e-07
        %v1145 = vadd.f32 %v1129, 1.1920929e-07
        %v1146 = vadd.f32 %v1130, 1.1920929e-07
        %v1147 = vrsqrt.pop %v1131
        %v1148 = vrsqrt.pop %v1132
        %v1149 = vrsqrt.pop %v1133
        %v1150 = vrsqrt.pop %v1134
        %v1151 = vrsqrt.pop %v1135
        %v1152 = vrsqrt.pop %v1136
        %v1153 = vrsqrt.pop %v1137
        %v1154 = vrsqrt.pop %v1138
        %v1155 = vrsqrt.pop %v1139
        %v1156 = vrsqrt.pop %v1140
        %v1157 = vrsqrt.pop %v1141
        %v1158 = vrsqrt.pop %v1142
        %v1159 = vrsqrt.pop %v1143
        %v1160 = vrsqrt.pop %v1144
        %v1161 = vrsqrt.pop %v1145
        %v1162 = vrsqrt.pop %v1146
        %v1163 = vmul.f32 %v1147, 0.12
        %v1164 = vmul.f32 %v1148, 0.12
        %v1165 = vmul.f32 %v1149, 0.12
        %v1166 = vmul.f32 %v1150, 0.12
        %v1167 = vmul.f32 %v1151, 0.12
        %v1168 = vmul.f32 %v1152, 0.12
        %v1169 = vmul.f32 %v1153, 0.12
        %v1170 = vmul.f32 %v1154, 0.12
        %v1171 = vmul.f32 %v1155, 0.12
        %v1172 = vmul.f32 %v1156, 0.12
        %v1173 = vmul.f32 %v1157, 0.12
        %v1174 = vmul.f32 %v1158, 0.12
        %v1175 = vmul.f32 %v1159, 0.12
        %v1176 = vmul.f32 %v1160, 0.12
        %v1177 = vmul.f32 %v1161, 0.12
        %v1178 = vmul.f32 %v1162, 0.12
        %v1179 = vsel %vm889, %v987, %v1163
        %v1180 = vsel %vm889, %v988, %v1164
        %v1181 = vsel %vm889, %v989, %v1165
        %v1182 = vsel %vm889, %v990, %v1166
        %v1183 = vsel %vm889, %v991, %v1167
        %v1184 = vsel %vm889, %v992, %v1168
        %v1185 = vsel %vm889, %v993, %v1169
        %v1186 = vsel %vm889, %v994, %v1170
        %v1187 = vsel %vm889, %v995, %v1171
        %v1188 = vsel %vm889, %v996, %v1172
        %v1189 = vsel %vm889, %v997, %v1173
        %v1190 = vsel %vm889, %v998, %v1174
        %v1191 = vsel %vm889, %v999, %v1175
        %v1192 = vsel %vm889, %v1000, %v1176
        %v1193 = vsel %vm889, %v1001, %v1177
        %v1194 = vsel %vm889, %v1002, %v1178
        %v1195 = vmul.f32 %v664, %v1179
        %v1196 = vmul.f32 %v668, %v1180
        %v1197 = vmul.f32 %v674, %v1181
        %v1198 = vmul.f32 %v678, %v1182
        %v1199 = vmul.f32 %v684, %v1183
        %v1200 = vmul.f32 %v688, %v1184
        %v1201 = vmul.f32 %v694, %v1185
        %v1202 = vmul.f32 %v698, %v1186
        %v1203 = vmul.f32 %v704, %v1187
        %v1204 = vmul.f32 %v708, %v1188
        %v1205 = vmul.f32 %v714, %v1189
        %v1206 = vmul.f32 %v718, %v1190
        %v1207 = vmul.f32 %v724, %v1191
        %v1208 = vmul.f32 %v728, %v1192
        %v1209 = vmul.f32 %v734, %v1193
        %v1210 = vmul.f32 %v738, %v1194
        %1227 = vrot.lane.b32.xlu0 %v1195, 96
        %v1228 = vpop.permute.xlu0 %1227
        %1229 = vrot.lane.b32.xlu0 %v1196, 96
        %v1230 = vpop.permute.xlu0 %1229
        %1231 = vrot.lane.b32.xlu0 %v1197, 96
        %v1232 = vpop.permute.xlu0 %1231
        %1233 = vrot.lane.b32.xlu0 %v1198, 96
        %v1234 = vpop.permute.xlu0 %1233
        %1235 = vrot.lane.b32.xlu0 %v1199, 96
        %v1236 = vpop.permute.xlu0 %1235
        %1237 = vrot.lane.b32.xlu0 %v1200, 96
        %v1238 = vpop.permute.xlu0 %1237
        %1239 = vrot.lane.b32.xlu0 %v1201, 96
        %v1240 = vpop.permute.xlu0 %1239
        %1241 = vrot.lane.b32.xlu0 %v1202, 96
        %v1242 = vpop.permute.xlu0 %1241
        %1243 = vrot.lane.b32.xlu0 %v1203, 96
        %v1244 = vpop.permute.xlu0 %1243
        %1245 = vrot.lane.b32.xlu0 %v1204, 96
        %v1246 = vpop.permute.xlu0 %1245
        %1247 = vrot.lane.b32.xlu0 %v1205, 96
        %v1248 = vpop.permute.xlu0 %1247
        %1249 = vrot.lane.b32.xlu0 %v1206, 96
        %v1250 = vpop.permute.xlu0 %1249
        %1251 = vrot.lane.b32.xlu0 %v1207, 96
        %v1252 = vpop.permute.xlu0 %1251
        %1253 = vrot.lane.b32.xlu0 %v1208, 96
        %v1254 = vpop.permute.xlu0 %1253
        %1255 = vrot.lane.b32.xlu0 %v1209, 96
        %v1256 = vpop.permute.xlu0 %1255
        %1257 = vrot.lane.b32.xlu0 %v1210, 96
        %v1258 = vpop.permute.xlu0 %1257
        %1275 = vrot.lane.b32.xlu0 %v1195, 32
        %v1276 = vpop.permute.xlu0 %1275
        %1277 = vrot.lane.b32.xlu0 %v1196, 32
        %v1278 = vpop.permute.xlu0 %1277
        %1279 = vrot.lane.b32.xlu0 %v1197, 32
        %v1280 = vpop.permute.xlu0 %1279
        %1281 = vrot.lane.b32.xlu0 %v1198, 32
        %v1282 = vpop.permute.xlu0 %1281
        %1283 = vrot.lane.b32.xlu0 %v1199, 32
        %v1284 = vpop.permute.xlu0 %1283
        %1285 = vrot.lane.b32.xlu0 %v1200, 32
        %v1286 = vpop.permute.xlu0 %1285
        %1287 = vrot.lane.b32.xlu0 %v1201, 32
        %v1288 = vpop.permute.xlu0 %1287
        %1289 = vrot.lane.b32.xlu0 %v1202, 32
        %v1290 = vpop.permute.xlu0 %1289
        %1291 = vrot.lane.b32.xlu0 %v1203, 32
        %v1292 = vpop.permute.xlu0 %1291
        %1293 = vrot.lane.b32.xlu0 %v1204, 32
        %v1294 = vpop.permute.xlu0 %1293
        %1295 = vrot.lane.b32.xlu0 %v1205, 32
        %v1296 = vpop.permute.xlu0 %1295
        %1297 = vrot.lane.b32.xlu0 %v1206, 32
        %v1298 = vpop.permute.xlu0 %1297
        %1299 = vrot.lane.b32.xlu0 %v1207, 32
        %v1300 = vpop.permute.xlu0 %1299
        %1301 = vrot.lane.b32.xlu0 %v1208, 32
        %v1302 = vpop.permute.xlu0 %1301
        %1303 = vrot.lane.b32.xlu0 %v1209, 32
        %v1304 = vpop.permute.xlu0 %1303
        %1305 = vrot.lane.b32.xlu0 %v1210, 32
        %v1306 = vpop.permute.xlu0 %1305
        %vm1323 = vcmask 261120
        %v1324 = vsel %vm1323, %v1228, %v1276
        %v1325 = vsel %vm1323, %v1230, %v1278
        %v1326 = vsel %vm1323, %v1232, %v1280
        %v1327 = vsel %vm1323, %v1234, %v1282
        %v1328 = vsel %vm1323, %v1236, %v1284
        %v1329 = vsel %vm1323, %v1238, %v1286
        %v1330 = vsel %vm1323, %v1240, %v1288
        %v1331 = vsel %vm1323, %v1242, %v1290
        %v1332 = vsel %vm1323, %v1244, %v1292
        %v1333 = vsel %vm1323, %v1246, %v1294
        %v1334 = vsel %vm1323, %v1248, %v1296
        %v1335 = vsel %vm1323, %v1250, %v1298
        %v1336 = vsel %vm1323, %v1252, %v1300
        %v1337 = vsel %vm1323, %v1254, %v1302
        %v1338 = vsel %vm1323, %v1256, %v1304
        %v1339 = vsel %vm1323, %v1258, %v1306
        %v1340 = vsel %vm889, %v1324, %v1228
        %v1341 = vsel %vm889, %v1325, %v1230
        %v1342 = vsel %vm889, %v1326, %v1232
        %v1343 = vsel %vm889, %v1327, %v1234
        %v1344 = vsel %vm889, %v1328, %v1236
        %v1345 = vsel %vm889, %v1329, %v1238
        %v1346 = vsel %vm889, %v1330, %v1240
        %v1347 = vsel %vm889, %v1331, %v1242
        %v1348 = vsel %vm889, %v1332, %v1244
        %v1349 = vsel %vm889, %v1333, %v1246
        %v1350 = vsel %vm889, %v1334, %v1248
        %v1351 = vsel %vm889, %v1335, %v1250
        %v1352 = vsel %vm889, %v1336, %v1252
        %v1353 = vsel %vm889, %v1337, %v1254
        %v1354 = vsel %vm889, %v1338, %v1256
        %v1355 = vsel %vm889, %v1339, %v1258
        %vm1356 = vcmask 785408
        %v1357 = vsel %vm1356, %v1340, %v1276
        %v1358 = vsel %vm1356, %v1341, %v1278
        %v1359 = vsel %vm1356, %v1342, %v1280
        %v1360 = vsel %vm1356, %v1343, %v1282
        %v1361 = vsel %vm1356, %v1344, %v1284
        %v1362 = vsel %vm1356, %v1345, %v1286
        %v1363 = vsel %vm1356, %v1346, %v1288
        %v1364 = vsel %vm1356, %v1347, %v1290
        %v1365 = vsel %vm1356, %v1348, %v1292
        %v1366 = vsel %vm1356, %v1349, %v1294
        %v1367 = vsel %vm1356, %v1350, %v1296
        %v1368 = vsel %vm1356, %v1351, %v1298
        %v1369 = vsel %vm1356, %v1352, %v1300
        %v1370 = vsel %vm1356, %v1353, %v1302
        %v1371 = vsel %vm1356, %v1354, %v1304
        %v1372 = vsel %vm1356, %v1355, %v1306
        %v1373 = vmul.f32 %v1195, %v841
        %v1374 = vmul.f32 %v1196, %v842
        %v1375 = vmul.f32 %v1197, %v843
        %v1376 = vmul.f32 %v1198, %v844
        %v1377 = vmul.f32 %v1199, %v845
        %v1378 = vmul.f32 %v1200, %v846
        %v1379 = vmul.f32 %v1201, %v847
        %v1380 = vmul.f32 %v1202, %v848
        %v1381 = vmul.f32 %v1203, %v849
        %v1382 = vmul.f32 %v1204, %v850
        %v1383 = vmul.f32 %v1205, %v851
        %v1384 = vmul.f32 %v1206, %v852
        %v1385 = vmul.f32 %v1207, %v853
        %v1386 = vmul.f32 %v1208, %v854
        %v1387 = vmul.f32 %v1209, %v855
        %v1388 = vmul.f32 %v1210, %v856
        %v1389 = vmul.f32 %v1357, %v857
        %v1390 = vmul.f32 %v1358, %v858
        %v1391 = vmul.f32 %v1359, %v859
        %v1392 = vmul.f32 %v1360, %v860
        %v1393 = vmul.f32 %v1361, %v861
        %v1394 = vmul.f32 %v1362, %v862
        %v1395 = vmul.f32 %v1363, %v863
        %v1396 = vmul.f32 %v1364, %v864
        %v1397 = vmul.f32 %v1365, %v865
        %v1398 = vmul.f32 %v1366, %v866
        %v1399 = vmul.f32 %v1367, %v867
        %v1400 = vmul.f32 %v1368, %v868
        %v1401 = vmul.f32 %v1369, %v869
        %v1402 = vmul.f32 %v1370, %v870
        %v1403 = vmul.f32 %v1371, %v871
        %v1404 = vmul.f32 %v1372, %v872
        %v1405 = vadd.f32 %v1373, %v1389
        %v1406 = vadd.f32 %v1374, %v1390
        %v1407 = vadd.f32 %v1375, %v1391
        %v1408 = vadd.f32 %v1376, %v1392
        %v1409 = vadd.f32 %v1377, %v1393
        %v1410 = vadd.f32 %v1378, %v1394
        %v1411 = vadd.f32 %v1379, %v1395
        %v1412 = vadd.f32 %v1380, %v1396
        %v1413 = vadd.f32 %v1381, %v1397
        %v1414 = vadd.f32 %v1382, %v1398
        %v1415 = vadd.f32 %v1383, %v1399
        %v1416 = vadd.f32 %v1384, %v1400
        %v1417 = vadd.f32 %v1385, %v1401
        %v1418 = vadd.f32 %v1386, %v1402
        %v1419 = vadd.f32 %v1387, %v1403
        %v1420 = vadd.f32 %v1388, %v1404
        %v1421 = vmul.f32 %v666, %v666
        %v1422 = vmul.f32 %v670, %v670
        %v1423 = vmul.f32 %v676, %v676
        %v1424 = vmul.f32 %v680, %v680
        %v1425 = vmul.f32 %v686, %v686
        %v1426 = vmul.f32 %v690, %v690
        %v1427 = vmul.f32 %v696, %v696
        %v1428 = vmul.f32 %v700, %v700
        %v1429 = vmul.f32 %v706, %v706
        %v1430 = vmul.f32 %v710, %v710
        %v1431 = vmul.f32 %v716, %v716
        %v1432 = vmul.f32 %v720, %v720
        %v1433 = vmul.f32 %v726, %v726
        %v1434 = vmul.f32 %v730, %v730
        %v1435 = vmul.f32 %v736, %v736
        %v1436 = vmul.f32 %v740, %v740
        %v1437 = vsel %vm889, %v1421, 0.0
        %1438 = vadd.xlane.f32.xlu0 %v1437
        %v1439 = vpop.xlane.xlu0 %1438
        %v1440 = vsel %vm889, %v1422, 0.0
        %1441 = vadd.xlane.f32.xlu0 %v1440
        %v1442 = vpop.xlane.xlu0 %1441
        %v1443 = vsel %vm889, %v1423, 0.0
        %1444 = vadd.xlane.f32.xlu0 %v1443
        %v1445 = vpop.xlane.xlu0 %1444
        %v1446 = vsel %vm889, %v1424, 0.0
        %1447 = vadd.xlane.f32.xlu0 %v1446
        %v1448 = vpop.xlane.xlu0 %1447
        %v1449 = vsel %vm889, %v1425, 0.0
        %1450 = vadd.xlane.f32.xlu0 %v1449
        %v1451 = vpop.xlane.xlu0 %1450
        %v1452 = vsel %vm889, %v1426, 0.0
        %1453 = vadd.xlane.f32.xlu0 %v1452
        %v1454 = vpop.xlane.xlu0 %1453
        %v1455 = vsel %vm889, %v1427, 0.0
        %1456 = vadd.xlane.f32.xlu0 %v1455
        %v1457 = vpop.xlane.xlu0 %1456
        %v1458 = vsel %vm889, %v1428, 0.0
        %1459 = vadd.xlane.f32.xlu0 %v1458
        %v1460 = vpop.xlane.xlu0 %1459
        %v1461 = vsel %vm889, %v1429, 0.0
        %1462 = vadd.xlane.f32.xlu0 %v1461
        %v1463 = vpop.xlane.xlu0 %1462
        %v1464 = vsel %vm889, %v1430, 0.0
        %1465 = vadd.xlane.f32.xlu0 %v1464
        %v1466 = vpop.xlane.xlu0 %1465
        %v1467 = vsel %vm889, %v1431, 0.0
        %1468 = vadd.xlane.f32.xlu0 %v1467
        %v1469 = vpop.xlane.xlu0 %1468
        %v1470 = vsel %vm889, %v1432, 0.0
        %1471 = vadd.xlane.f32.xlu0 %v1470
        %v1472 = vpop.xlane.xlu0 %1471
        %v1473 = vsel %vm889, %v1433, 0.0
        %1474 = vadd.xlane.f32.xlu0 %v1473
        %v1475 = vpop.xlane.xlu0 %1474
        %v1476 = vsel %vm889, %v1434, 0.0
        %1477 = vadd.xlane.f32.xlu0 %v1476
        %v1478 = vpop.xlane.xlu0 %1477
        %v1479 = vsel %vm889, %v1435, 0.0
        %1480 = vadd.xlane.f32.xlu0 %v1479
        %v1481 = vpop.xlane.xlu0 %1480
        %v1482 = vsel %vm889, %v1436, 0.0
        %1483 = vadd.xlane.f32.xlu0 %v1482
        %v1484 = vpop.xlane.xlu0 %1483
        %v1485 = vmul.f32 %v1439, %v938
        %v1486 = vmul.f32 %v1442, %v938
        %v1487 = vmul.f32 %v1445, %v938
        %v1488 = vmul.f32 %v1448, %v938
        %v1489 = vmul.f32 %v1451, %v938
        %v1490 = vmul.f32 %v1454, %v938
        %v1491 = vmul.f32 %v1457, %v938
        %v1492 = vmul.f32 %v1460, %v938
        %v1493 = vmul.f32 %v1463, %v938
        %v1494 = vmul.f32 %v1466, %v938
        %v1495 = vmul.f32 %v1469, %v938
        %v1496 = vmul.f32 %v1472, %v938
        %v1497 = vmul.f32 %v1475, %v938
        %v1498 = vmul.f32 %v1478, %v938
        %v1499 = vmul.f32 %v1481, %v938
        %v1500 = vmul.f32 %v1484, %v938
        %v1501 = vadd.f32 %v1485, 1.1920929e-07
        %v1502 = vadd.f32 %v1486, 1.1920929e-07
        %v1503 = vadd.f32 %v1487, 1.1920929e-07
        %v1504 = vadd.f32 %v1488, 1.1920929e-07
        %v1505 = vadd.f32 %v1489, 1.1920929e-07
        %v1506 = vadd.f32 %v1490, 1.1920929e-07
        %v1507 = vadd.f32 %v1491, 1.1920929e-07
        %v1508 = vadd.f32 %v1492, 1.1920929e-07
        %v1509 = vadd.f32 %v1493, 1.1920929e-07
        %v1510 = vadd.f32 %v1494, 1.1920929e-07
        %v1511 = vadd.f32 %v1495, 1.1920929e-07
        %v1512 = vadd.f32 %v1496, 1.1920929e-07
        %v1513 = vadd.f32 %v1497, 1.1920929e-07
        %v1514 = vadd.f32 %v1498, 1.1920929e-07
        %v1515 = vadd.f32 %v1499, 1.1920929e-07
        %v1516 = vadd.f32 %v1500, 1.1920929e-07
        %v1517 = vrsqrt.pop %v1501
        %v1518 = vrsqrt.pop %v1502
        %v1519 = vrsqrt.pop %v1503
        %v1520 = vrsqrt.pop %v1504
        %v1521 = vrsqrt.pop %v1505
        %v1522 = vrsqrt.pop %v1506
        %v1523 = vrsqrt.pop %v1507
        %v1524 = vrsqrt.pop %v1508
        %v1525 = vrsqrt.pop %v1509
        %v1526 = vrsqrt.pop %v1510
        %v1527 = vrsqrt.pop %v1511
        %v1528 = vrsqrt.pop %v1512
        %v1529 = vrsqrt.pop %v1513
        %v1530 = vrsqrt.pop %v1514
        %v1531 = vrsqrt.pop %v1515
        %v1532 = vrsqrt.pop %v1516
        %1549 = vrot.lane.b32.xlu0 %v1421, 64
        %v1550 = vpop.permute.xlu0 %1549
        %1551 = vrot.lane.b32.xlu0 %v1422, 64
        %v1552 = vpop.permute.xlu0 %1551
        %1553 = vrot.lane.b32.xlu0 %v1423, 64
        %v1554 = vpop.permute.xlu0 %1553
        %1555 = vrot.lane.b32.xlu0 %v1424, 64
        %v1556 = vpop.permute.xlu0 %1555
        %1557 = vrot.lane.b32.xlu0 %v1425, 64
        %v1558 = vpop.permute.xlu0 %1557
        %1559 = vrot.lane.b32.xlu0 %v1426, 64
        %v1560 = vpop.permute.xlu0 %1559
        %1561 = vrot.lane.b32.xlu0 %v1427, 64
        %v1562 = vpop.permute.xlu0 %1561
        %1563 = vrot.lane.b32.xlu0 %v1428, 64
        %v1564 = vpop.permute.xlu0 %1563
        %1565 = vrot.lane.b32.xlu0 %v1429, 64
        %v1566 = vpop.permute.xlu0 %1565
        %1567 = vrot.lane.b32.xlu0 %v1430, 64
        %v1568 = vpop.permute.xlu0 %1567
        %1569 = vrot.lane.b32.xlu0 %v1431, 64
        %v1570 = vpop.permute.xlu0 %1569
        %1571 = vrot.lane.b32.xlu0 %v1432, 64
        %v1572 = vpop.permute.xlu0 %1571
        %1573 = vrot.lane.b32.xlu0 %v1433, 64
        %v1574 = vpop.permute.xlu0 %1573
        %1575 = vrot.lane.b32.xlu0 %v1434, 64
        %v1576 = vpop.permute.xlu0 %1575
        %1577 = vrot.lane.b32.xlu0 %v1435, 64
        %v1578 = vpop.permute.xlu0 %1577
        %1579 = vrot.lane.b32.xlu0 %v1436, 64
        %v1580 = vpop.permute.xlu0 %1579
        %v1597 = vsel %vm889, %v1550, 0.0
        %1598 = vadd.xlane.f32.xlu0 %v1597
        %v1599 = vpop.xlane.xlu0 %1598
        %v1600 = vsel %vm889, %v1552, 0.0
        %1601 = vadd.xlane.f32.xlu0 %v1600
        %v1602 = vpop.xlane.xlu0 %1601
        %v1603 = vsel %vm889, %v1554, 0.0
        %1604 = vadd.xlane.f32.xlu0 %v1603
        %v1605 = vpop.xlane.xlu0 %1604
        %v1606 = vsel %vm889, %v1556, 0.0
        %1607 = vadd.xlane.f32.xlu0 %v1606
        %v1608 = vpop.xlane.xlu0 %1607
        %v1609 = vsel %vm889, %v1558, 0.0
        %1610 = vadd.xlane.f32.xlu0 %v1609
        %v1611 = vpop.xlane.xlu0 %1610
        %v1612 = vsel %vm889, %v1560, 0.0
        %1613 = vadd.xlane.f32.xlu0 %v1612
        %v1614 = vpop.xlane.xlu0 %1613
        %v1615 = vsel %vm889, %v1562, 0.0
        %1616 = vadd.xlane.f32.xlu0 %v1615
        %v1617 = vpop.xlane.xlu0 %1616
        %v1618 = vsel %vm889, %v1564, 0.0
        %1619 = vadd.xlane.f32.xlu0 %v1618
        %v1620 = vpop.xlane.xlu0 %1619
        %v1621 = vsel %vm889, %v1566, 0.0
        %1622 = vadd.xlane.f32.xlu0 %v1621
        %v1623 = vpop.xlane.xlu0 %1622
        %v1624 = vsel %vm889, %v1568, 0.0
        %1625 = vadd.xlane.f32.xlu0 %v1624
        %v1626 = vpop.xlane.xlu0 %1625
        %v1627 = vsel %vm889, %v1570, 0.0
        %1628 = vadd.xlane.f32.xlu0 %v1627
        %v1629 = vpop.xlane.xlu0 %1628
        %v1630 = vsel %vm889, %v1572, 0.0
        %1631 = vadd.xlane.f32.xlu0 %v1630
        %v1632 = vpop.xlane.xlu0 %1631
        %v1633 = vsel %vm889, %v1574, 0.0
        %1634 = vadd.xlane.f32.xlu0 %v1633
        %v1635 = vpop.xlane.xlu0 %1634
        %v1636 = vsel %vm889, %v1576, 0.0
        %1637 = vadd.xlane.f32.xlu0 %v1636
        %v1638 = vpop.xlane.xlu0 %1637
        %v1639 = vsel %vm889, %v1578, 0.0
        %1640 = vadd.xlane.f32.xlu0 %v1639
        %v1641 = vpop.xlane.xlu0 %1640
        %v1642 = vsel %vm889, %v1580, 0.0
        %1643 = vadd.xlane.f32.xlu0 %v1642
        %v1644 = vpop.xlane.xlu0 %1643
        %v1645 = vmul.f32 %v1599, %v938
        %v1646 = vmul.f32 %v1602, %v938
        %v1647 = vmul.f32 %v1605, %v938
        %v1648 = vmul.f32 %v1608, %v938
        %v1649 = vmul.f32 %v1611, %v938
        %v1650 = vmul.f32 %v1614, %v938
        %v1651 = vmul.f32 %v1617, %v938
        %v1652 = vmul.f32 %v1620, %v938
        %v1653 = vmul.f32 %v1623, %v938
        %v1654 = vmul.f32 %v1626, %v938
        %v1655 = vmul.f32 %v1629, %v938
        %v1656 = vmul.f32 %v1632, %v938
        %v1657 = vmul.f32 %v1635, %v938
        %v1658 = vmul.f32 %v1638, %v938
        %v1659 = vmul.f32 %v1641, %v938
        %v1660 = vmul.f32 %v1644, %v938
        %v1661 = vadd.f32 %v1645, 1.1920929e-07
        %v1662 = vadd.f32 %v1646, 1.1920929e-07
        %v1663 = vadd.f32 %v1647, 1.1920929e-07
        %v1664 = vadd.f32 %v1648, 1.1920929e-07
        %v1665 = vadd.f32 %v1649, 1.1920929e-07
        %v1666 = vadd.f32 %v1650, 1.1920929e-07
        %v1667 = vadd.f32 %v1651, 1.1920929e-07
        %v1668 = vadd.f32 %v1652, 1.1920929e-07
        %v1669 = vadd.f32 %v1653, 1.1920929e-07
        %v1670 = vadd.f32 %v1654, 1.1920929e-07
        %v1671 = vadd.f32 %v1655, 1.1920929e-07
        %v1672 = vadd.f32 %v1656, 1.1920929e-07
        %v1673 = vadd.f32 %v1657, 1.1920929e-07
        %v1674 = vadd.f32 %v1658, 1.1920929e-07
        %v1675 = vadd.f32 %v1659, 1.1920929e-07
        %v1676 = vadd.f32 %v1660, 1.1920929e-07
        %v1677 = vrsqrt.pop %v1661
        %v1678 = vrsqrt.pop %v1662
        %v1679 = vrsqrt.pop %v1663
        %v1680 = vrsqrt.pop %v1664
        %v1681 = vrsqrt.pop %v1665
        %v1682 = vrsqrt.pop %v1666
        %v1683 = vrsqrt.pop %v1667
        %v1684 = vrsqrt.pop %v1668
        %v1685 = vrsqrt.pop %v1669
        %v1686 = vrsqrt.pop %v1670
        %v1687 = vrsqrt.pop %v1671
        %v1688 = vrsqrt.pop %v1672
        %v1689 = vrsqrt.pop %v1673
        %v1690 = vrsqrt.pop %v1674
        %v1691 = vrsqrt.pop %v1675
        %v1692 = vrsqrt.pop %v1676
        %v1693 = vsel %vm889, %v1517, %v1677
        %v1694 = vsel %vm889, %v1518, %v1678
        %v1695 = vsel %vm889, %v1519, %v1679
        %v1696 = vsel %vm889, %v1520, %v1680
        %v1697 = vsel %vm889, %v1521, %v1681
        %v1698 = vsel %vm889, %v1522, %v1682
        %v1699 = vsel %vm889, %v1523, %v1683
        %v1700 = vsel %vm889, %v1524, %v1684
        %v1701 = vsel %vm889, %v1525, %v1685
        %v1702 = vsel %vm889, %v1526, %v1686
        %v1703 = vsel %vm889, %v1527, %v1687
        %v1704 = vsel %vm889, %v1528, %v1688
        %v1705 = vsel %vm889, %v1529, %v1689
        %v1706 = vsel %vm889, %v1530, %v1690
        %v1707 = vsel %vm889, %v1531, %v1691
        %v1708 = vsel %vm889, %v1532, %v1692
        %v1709 = vmul.f32 %v666, %v1693
        %v1710 = vmul.f32 %v670, %v1694
        %v1711 = vmul.f32 %v676, %v1695
        %v1712 = vmul.f32 %v680, %v1696
        %v1713 = vmul.f32 %v686, %v1697
        %v1714 = vmul.f32 %v690, %v1698
        %v1715 = vmul.f32 %v696, %v1699
        %v1716 = vmul.f32 %v700, %v1700
        %v1717 = vmul.f32 %v706, %v1701
        %v1718 = vmul.f32 %v710, %v1702
        %v1719 = vmul.f32 %v716, %v1703
        %v1720 = vmul.f32 %v720, %v1704
        %v1721 = vmul.f32 %v726, %v1705
        %v1722 = vmul.f32 %v730, %v1706
        %v1723 = vmul.f32 %v736, %v1707
        %v1724 = vmul.f32 %v740, %v1708
        %1741 = vrot.lane.b32.xlu0 %v1709, 96
        %v1742 = vpop.permute.xlu0 %1741
        %1743 = vrot.lane.b32.xlu0 %v1710, 96
        %v1744 = vpop.permute.xlu0 %1743
        %1745 = vrot.lane.b32.xlu0 %v1711, 96
        %v1746 = vpop.permute.xlu0 %1745
        %1747 = vrot.lane.b32.xlu0 %v1712, 96
        %v1748 = vpop.permute.xlu0 %1747
        %1749 = vrot.lane.b32.xlu0 %v1713, 96
        %v1750 = vpop.permute.xlu0 %1749
        %1751 = vrot.lane.b32.xlu0 %v1714, 96
        %v1752 = vpop.permute.xlu0 %1751
        %1753 = vrot.lane.b32.xlu0 %v1715, 96
        %v1754 = vpop.permute.xlu0 %1753
        %1755 = vrot.lane.b32.xlu0 %v1716, 96
        %v1756 = vpop.permute.xlu0 %1755
        %1757 = vrot.lane.b32.xlu0 %v1717, 96
        %v1758 = vpop.permute.xlu0 %1757
        %1759 = vrot.lane.b32.xlu0 %v1718, 96
        %v1760 = vpop.permute.xlu0 %1759
        %1761 = vrot.lane.b32.xlu0 %v1719, 96
        %v1762 = vpop.permute.xlu0 %1761
        %1763 = vrot.lane.b32.xlu0 %v1720, 96
        %v1764 = vpop.permute.xlu0 %1763
        %1765 = vrot.lane.b32.xlu0 %v1721, 96
        %v1766 = vpop.permute.xlu0 %1765
        %1767 = vrot.lane.b32.xlu0 %v1722, 96
        %v1768 = vpop.permute.xlu0 %1767
        %1769 = vrot.lane.b32.xlu0 %v1723, 96
        %v1770 = vpop.permute.xlu0 %1769
        %1771 = vrot.lane.b32.xlu0 %v1724, 96
        %v1772 = vpop.permute.xlu0 %1771
        %1789 = vrot.lane.b32.xlu0 %v1709, 32
        %v1790 = vpop.permute.xlu0 %1789
        %1791 = vrot.lane.b32.xlu0 %v1710, 32
        %v1792 = vpop.permute.xlu0 %1791
        %1793 = vrot.lane.b32.xlu0 %v1711, 32
        %v1794 = vpop.permute.xlu0 %1793
        %1795 = vrot.lane.b32.xlu0 %v1712, 32
        %v1796 = vpop.permute.xlu0 %1795
        %1797 = vrot.lane.b32.xlu0 %v1713, 32
        %v1798 = vpop.permute.xlu0 %1797
        %1799 = vrot.lane.b32.xlu0 %v1714, 32
        %v1800 = vpop.permute.xlu0 %1799
        %1801 = vrot.lane.b32.xlu0 %v1715, 32
        %v1802 = vpop.permute.xlu0 %1801
        %1803 = vrot.lane.b32.xlu0 %v1716, 32
        %v1804 = vpop.permute.xlu0 %1803
        %1805 = vrot.lane.b32.xlu0 %v1717, 32
        %v1806 = vpop.permute.xlu0 %1805
        %1807 = vrot.lane.b32.xlu0 %v1718, 32
        %v1808 = vpop.permute.xlu0 %1807
        %1809 = vrot.lane.b32.xlu0 %v1719, 32
        %v1810 = vpop.permute.xlu0 %1809
        %1811 = vrot.lane.b32.xlu0 %v1720, 32
        %v1812 = vpop.permute.xlu0 %1811
        %1813 = vrot.lane.b32.xlu0 %v1721, 32
        %v1814 = vpop.permute.xlu0 %1813
        %1815 = vrot.lane.b32.xlu0 %v1722, 32
        %v1816 = vpop.permute.xlu0 %1815
        %1817 = vrot.lane.b32.xlu0 %v1723, 32
        %v1818 = vpop.permute.xlu0 %1817
        %1819 = vrot.lane.b32.xlu0 %v1724, 32
        %v1820 = vpop.permute.xlu0 %1819
        %v1837 = vsel %vm1323, %v1742, %v1790
        %v1838 = vsel %vm1323, %v1744, %v1792
        %v1839 = vsel %vm1323, %v1746, %v1794
        %v1840 = vsel %vm1323, %v1748, %v1796
        %v1841 = vsel %vm1323, %v1750, %v1798
        %v1842 = vsel %vm1323, %v1752, %v1800
        %v1843 = vsel %vm1323, %v1754, %v1802
        %v1844 = vsel %vm1323, %v1756, %v1804
        %v1845 = vsel %vm1323, %v1758, %v1806
        %v1846 = vsel %vm1323, %v1760, %v1808
        %v1847 = vsel %vm1323, %v1762, %v1810
        %v1848 = vsel %vm1323, %v1764, %v1812
        %v1849 = vsel %vm1323, %v1766, %v1814
        %v1850 = vsel %vm1323, %v1768, %v1816
        %v1851 = vsel %vm1323, %v1770, %v1818
        %v1852 = vsel %vm1323, %v1772, %v1820
        %v1853 = vsel %vm889, %v1837, %v1742
        %v1854 = vsel %vm889, %v1838, %v1744
        %v1855 = vsel %vm889, %v1839, %v1746
        %v1856 = vsel %vm889, %v1840, %v1748
        %v1857 = vsel %vm889, %v1841, %v1750
        %v1858 = vsel %vm889, %v1842, %v1752
        %v1859 = vsel %vm889, %v1843, %v1754
        %v1860 = vsel %vm889, %v1844, %v1756
        %v1861 = vsel %vm889, %v1845, %v1758
        %v1862 = vsel %vm889, %v1846, %v1760
        %v1863 = vsel %vm889, %v1847, %v1762
        %v1864 = vsel %vm889, %v1848, %v1764
        %v1865 = vsel %vm889, %v1849, %v1766
        %v1866 = vsel %vm889, %v1850, %v1768
        %v1867 = vsel %vm889, %v1851, %v1770
        %v1868 = vsel %vm889, %v1852, %v1772
        %v1869 = vsel %vm1356, %v1853, %v1790
        %v1870 = vsel %vm1356, %v1854, %v1792
        %v1871 = vsel %vm1356, %v1855, %v1794
        %v1872 = vsel %vm1356, %v1856, %v1796
        %v1873 = vsel %vm1356, %v1857, %v1798
        %v1874 = vsel %vm1356, %v1858, %v1800
        %v1875 = vsel %vm1356, %v1859, %v1802
        %v1876 = vsel %vm1356, %v1860, %v1804
        %v1877 = vsel %vm1356, %v1861, %v1806
        %v1878 = vsel %vm1356, %v1862, %v1808
        %v1879 = vsel %vm1356, %v1863, %v1810
        %v1880 = vsel %vm1356, %v1864, %v1812
        %v1881 = vsel %vm1356, %v1865, %v1814
        %v1882 = vsel %vm1356, %v1866, %v1816
        %v1883 = vsel %vm1356, %v1867, %v1818
        %v1884 = vsel %vm1356, %v1868, %v1820
        %v1885 = vmul.f32 %v1709, %v841
        %v1886 = vmul.f32 %v1710, %v842
        %v1887 = vmul.f32 %v1711, %v843
        %v1888 = vmul.f32 %v1712, %v844
        %v1889 = vmul.f32 %v1713, %v845
        %v1890 = vmul.f32 %v1714, %v846
        %v1891 = vmul.f32 %v1715, %v847
        %v1892 = vmul.f32 %v1716, %v848
        %v1893 = vmul.f32 %v1717, %v849
        %v1894 = vmul.f32 %v1718, %v850
        %v1895 = vmul.f32 %v1719, %v851
        %v1896 = vmul.f32 %v1720, %v852
        %v1897 = vmul.f32 %v1721, %v853
        %v1898 = vmul.f32 %v1722, %v854
        %v1899 = vmul.f32 %v1723, %v855
        %v1900 = vmul.f32 %v1724, %v856
        %v1901 = vmul.f32 %v1869, %v857
        %v1902 = vmul.f32 %v1870, %v858
        %v1903 = vmul.f32 %v1871, %v859
        %v1904 = vmul.f32 %v1872, %v860
        %v1905 = vmul.f32 %v1873, %v861
        %v1906 = vmul.f32 %v1874, %v862
        %v1907 = vmul.f32 %v1875, %v863
        %v1908 = vmul.f32 %v1876, %v864
        %v1909 = vmul.f32 %v1877, %v865
        %v1910 = vmul.f32 %v1878, %v866
        %v1911 = vmul.f32 %v1879, %v867
        %v1912 = vmul.f32 %v1880, %v868
        %v1913 = vmul.f32 %v1881, %v869
        %v1914 = vmul.f32 %v1882, %v870
        %v1915 = vmul.f32 %v1883, %v871
        %v1916 = vmul.f32 %v1884, %v872
        %v1917 = vadd.f32 %v1885, %v1901
        %v1918 = vadd.f32 %v1886, %v1902
        %v1919 = vadd.f32 %v1887, %v1903
        %v1920 = vadd.f32 %v1888, %v1904
        %v1921 = vadd.f32 %v1889, %v1905
        %v1922 = vadd.f32 %v1890, %v1906
        %v1923 = vadd.f32 %v1891, %v1907
        %v1924 = vadd.f32 %v1892, %v1908
        %v1925 = vadd.f32 %v1893, %v1909
        %v1926 = vadd.f32 %v1894, %v1910
        %v1927 = vadd.f32 %v1895, %v1911
        %v1928 = vadd.f32 %v1896, %v1912
        %v1929 = vadd.f32 %v1897, %v1913
        %v1930 = vadd.f32 %v1898, %v1914
        %v1931 = vadd.f32 %v1899, %v1915
        %v1932 = vadd.f32 %v1900, %v1916
        %v1933 = vstv %s839
        %v1934 = vmul.f32 %v1933, %v777
        %v1935 = vmul.f32 %v1933, %v780
        %v1936 = vmul.f32 %v1933, %v785
        %v1937 = vmul.f32 %v1933, %v788
        %v1938 = vmul.f32 %v1933, %v793
        %v1939 = vmul.f32 %v1933, %v796
        %v1940 = vmul.f32 %v1933, %v801
        %v1941 = vmul.f32 %v1933, %v804
        %v1942 = vmul.f32 %v1933, %v809
        %v1943 = vmul.f32 %v1933, %v812
        %v1944 = vmul.f32 %v1933, %v817
        %v1945 = vmul.f32 %v1933, %v820
        %v1946 = vmul.f32 %v1933, %v825
        %v1947 = vmul.f32 %v1933, %v828
        %v1948 = vmul.f32 %v1933, %v833
        %v1949 = vmul.f32 %v1933, %v836
        %v1950 = vld [vmem:[%s363] sm:$0xf]
        %v1951 = vld [vmem:[%s363 + $0x4] sm:$0xf]
        %v1952 = vld [vmem:[%s363 + $0x8] sm:$0xf]
        %v1953 = vld [vmem:[%s363 + $0xc] sm:$0xf]
        %v1954 = vld [vmem:[%s363 + $0x10] sm:$0xf]
        %v1955 = vld [vmem:[%s363 + $0x14] sm:$0xf]
        %v1956 = vld [vmem:[%s363 + $0x18] sm:$0xf]
        %v1957 = vld [vmem:[%s363 + $0x1c] sm:$0xf]
        %v1958 = vld [vmem:[%s363 + $0x20] sm:$0xf]
        %v1959 = vld [vmem:[%s363 + $0x24] sm:$0xf]
        %v1960 = vld [vmem:[%s363 + $0x28] sm:$0xf]
        %v1961 = vld [vmem:[%s363 + $0x2c] sm:$0xf]
        %v1962 = vld [vmem:[%s363 + $0x30] sm:$0xf]
        %v1963 = vld [vmem:[%s363 + $0x34] sm:$0xf]
        %v1964 = vld [vmem:[%s363 + $0x38] sm:$0xf]
        %v1965 = vld [vmem:[%s363 + $0x3c] sm:$0xf]
        %v1966 = vunpack.c.l.bf16 %v1950
        %v1967 = vunpack.c.l.bf16 %v1951
        %v1968 = vunpack.c.l.bf16 %v1952
        %v1969 = vunpack.c.l.bf16 %v1953
        %v1970 = vunpack.c.l.bf16 %v1954
        %v1971 = vunpack.c.l.bf16 %v1955
        %v1972 = vunpack.c.l.bf16 %v1956
        %v1973 = vunpack.c.l.bf16 %v1957
        %v1974 = vunpack.c.l.bf16 %v1958
        %v1975 = vunpack.c.l.bf16 %v1959
        %v1976 = vunpack.c.l.bf16 %v1960
        %v1977 = vunpack.c.l.bf16 %v1961
        %v1978 = vunpack.c.l.bf16 %v1962
        %v1979 = vunpack.c.l.bf16 %v1963
        %v1980 = vunpack.c.l.bf16 %v1964
        %v1981 = vunpack.c.l.bf16 %v1965
        %v1982 = vstv %s840
        %v1983 = vmul.f32 %v1982, %v1966
        %v1984 = vmul.f32 %v1982, %v1967
        %v1985 = vmul.f32 %v1982, %v1968
        %v1986 = vmul.f32 %v1982, %v1969
        %v1987 = vmul.f32 %v1982, %v1970
        %v1988 = vmul.f32 %v1982, %v1971
        %v1989 = vmul.f32 %v1982, %v1972
        %v1990 = vmul.f32 %v1982, %v1973
        %v1991 = vmul.f32 %v1982, %v1974
        %v1992 = vmul.f32 %v1982, %v1975
        %v1993 = vmul.f32 %v1982, %v1976
        %v1994 = vmul.f32 %v1982, %v1977
        %v1995 = vmul.f32 %v1982, %v1978
        %v1996 = vmul.f32 %v1982, %v1979
        %v1997 = vmul.f32 %v1982, %v1980
        %v1998 = vmul.f32 %v1982, %v1981
        %v1999 = vadd.f32 %v1934, %v1983
        %v2000 = vadd.f32 %v1935, %v1984
        %v2001 = vadd.f32 %v1936, %v1985
        %v2002 = vadd.f32 %v1937, %v1986
        %v2003 = vadd.f32 %v1938, %v1987
        %v2004 = vadd.f32 %v1939, %v1988
        %v2005 = vadd.f32 %v1940, %v1989
        %v2006 = vadd.f32 %v1941, %v1990
        %v2007 = vadd.f32 %v1942, %v1991
        %v2008 = vadd.f32 %v1943, %v1992
        %v2009 = vadd.f32 %v1944, %v1993
        %v2010 = vadd.f32 %v1945, %v1994
        %v2011 = vadd.f32 %v1946, %v1995
        %v2012 = vadd.f32 %v1947, %v1996
        %v2013 = vadd.f32 %v1948, %v1997
        %v2014 = vadd.f32 %v1949, %v1998
        %v2015 = vpack.c.bf16 %v1406, %v1405
        %v2016 = vpack.c.bf16 %v1408, %v1407
        %v2017 = vpack.c.bf16 %v1410, %v1409
        %v2018 = vpack.c.bf16 %v1412, %v1411
        %v2019 = vpack.c.bf16 %v1414, %v1413
        %v2020 = vpack.c.bf16 %v1416, %v1415
        %v2021 = vpack.c.bf16 %v1418, %v1417
        %v2022 = vpack.c.bf16 %v1420, %v1419
        %v2023 = vpack.c.bf16 %v1918, %v1917
        %v2024 = vpack.c.bf16 %v1920, %v1919
        %v2025 = vpack.c.bf16 %v1922, %v1921
        %v2026 = vpack.c.bf16 %v1924, %v1923
        %v2027 = vpack.c.bf16 %v1926, %v1925
        %v2028 = vpack.c.bf16 %v1928, %v1927
        %v2029 = vpack.c.bf16 %v1930, %v1929
        %v2030 = vpack.c.bf16 %v1932, %v1931
        %v2031 = vpack.c.bf16 %v2000, %v1999
        %v2032 = vpack.c.bf16 %v2002, %v2001
        %v2033 = vpack.c.bf16 %v2004, %v2003
        %v2034 = vpack.c.bf16 %v2006, %v2005
        %v2035 = vpack.c.bf16 %v2008, %v2007
        %v2036 = vpack.c.bf16 %v2010, %v2009
        %v2037 = vpack.c.bf16 %v2012, %v2011
        %v2038 = vpack.c.bf16 %v2014, %v2013
        %v2039 = vlaneseq
        %v2040 = vshrl.u32 %v2039, 7
        %v2041 = vadd.s32 %v2040, 8
        %v2042 = vadd.s32 %v2040, 16
        %v2043 = vadd.s32 %v2040, 24
        %v2044 = vadd.s32 %v2040, 32
        %v2045 = vadd.s32 %v2040, 40
        %v2046 = vadd.s32 %v2040, 48
        %v2047 = vadd.s32 %v2040, 56
        %v2048 = vadd.s32 %v2040, 64
        %v2049 = vadd.s32 %v2040, 72
        %v2050 = vadd.s32 %v2040, 80
        %v2051 = vadd.s32 %v2040, 88
        %v2052 = vadd.s32 %v2040, 96
        %v2053 = vadd.s32 %v2040, 104
        %v2054 = vadd.s32 %v2040, 112
        %v2055 = vadd.s32 %v2040, 120
        %v2056 = vlaneseq
        %v2057 = vand.u32 %v2056, 127
        %vm2058 = vcmp.ge.s32.totalorder %v2040, %v2057
        %vm2059 = vcmp.ge.s32.totalorder %v2041, %v2057
        %vm2060 = vcmp.ge.s32.totalorder %v2042, %v2057
        %vm2061 = vcmp.ge.s32.totalorder %v2043, %v2057
        %vm2062 = vcmp.ge.s32.totalorder %v2044, %v2057
        %vm2063 = vcmp.ge.s32.totalorder %v2045, %v2057
        %vm2064 = vcmp.ge.s32.totalorder %v2046, %v2057
        %vm2065 = vcmp.ge.s32.totalorder %v2047, %v2057
        %vm2066 = vcmp.ge.s32.totalorder %v2048, %v2057
        %vm2067 = vcmp.ge.s32.totalorder %v2049, %v2057
        %vm2068 = vcmp.ge.s32.totalorder %v2050, %v2057
        %vm2069 = vcmp.ge.s32.totalorder %v2051, %v2057
        %vm2070 = vcmp.ge.s32.totalorder %v2052, %v2057
        %vm2071 = vcmp.ge.s32.totalorder %v2053, %v2057
        %vm2072 = vcmp.ge.s32.totalorder %v2054, %v2057
        %vm2073 = vcmp.ge.s32.totalorder %v2055, %v2057
        %v2075 = vsel %vm889, %v2015, 0
        %v2078 = vsel %vm889, %v2016, 0
        %v2081 = vsel %vm889, %v2017, 0
        %v2084 = vsel %vm889, %v2018, 0
        %v2087 = vsel %vm889, %v2019, 0
        %v2090 = vsel %vm889, %v2020, 0
        %v2093 = vsel %vm889, %v2021, 0
        %v2096 = vsel %vm889, %v2022, 0
        %v2099 = vsel %vm889, %v2023, 0
        %v2102 = vsel %vm889, %v2024, 0
        %v2105 = vsel %vm889, %v2025, 0
        %v2108 = vsel %vm889, %v2026, 0
        %v2111 = vsel %vm889, %v2027, 0
        %v2114 = vsel %vm889, %v2028, 0
        %v2117 = vsel %vm889, %v2029, 0
        %v2120 = vsel %vm889, %v2030, 0
        %2122 = vmatprep.subr.bf16.mxu0 0
        %2123 = vmatpush1.bf16.xpose.msra.mxu0 %v2099
        %2124 = vmatprep.subr.bf16.mxu0 0
        %2125 = vmatpush1.bf16.xpose.msra.mxu0 %v2102
        %2126 = vmatprep.subr.bf16.mxu0 0
        %2127 = vmatpush1.bf16.xpose.msra.mxu0 %v2105
        %2128 = vmatprep.subr.bf16.mxu0 0
        %2129 = vmatpush1.bf16.xpose.msra.mxu0 %v2108
        %2130 = vmatprep.subr.bf16.mxu0 0
        %2131 = vmatpush1.bf16.xpose.msra.mxu0 %v2111
        %2132 = vmatprep.subr.bf16.mxu0 0
        %2133 = vmatpush1.bf16.xpose.msra.mxu0 %v2114
        %2134 = vmatprep.subr.bf16.mxu0 0
        %2135 = vmatpush1.bf16.xpose.msra.mxu0 %v2117
        %2136 = vmatprep.subr.bf16.mxu0 0
        %2137 = vmatpush1.bf16.xpose.msra.mxu0 %v2120
        %2138 = vmatprep.subr.bf16.mxu0 0
        %2139 = vmatpush1.bf16.xpose.msra.mxu0 0
        %2140 = vmatprep.subr.bf16.mxu0 0
        %2141 = vmatpush1.bf16.xpose.msra.mxu0 0
        %2142 = vmatprep.subr.bf16.mxu0 0
        %2143 = vmatpush1.bf16.xpose.msra.mxu0 0
        %2144 = vmatprep.subr.bf16.mxu0 0
        %2145 = vmatpush1.bf16.xpose.msra.mxu0 0
        %2146 = vmatprep.subr.bf16.mxu0 0
        %2147 = vmatpush1.bf16.xpose.msra.mxu0 0
        %2148 = vmatprep.subr.bf16.mxu0 0
        %2149 = vmatpush1.bf16.xpose.msra.mxu0 0
        %2150 = vmatprep.subr.bf16.mxu0 0
        %2151 = vmatpush1.bf16.xpose.msra.mxu0 0
        %2152 = vmatprep.subr.bf16.mxu0 0
        %2153 = vmatpush1.bf16.xpose.msra.mxu0 0
        %2154 = vmatprep.mubr.bf16.mxu0 0
        %2155 = vmatmul.mubr.bf16.gmra.mrb[0].mxu0 %v2075
        %v2156 = vpop.f32.mrb[0].mxu0
        %v2157 = vadd.f32 0.0, %v2156
        %v2158 = vpop.f32.mrb[0].mxu0
        %v2159 = vpop.f32.mrb[0].mxu0
        %v2160 = vadd.f32 0.0, %v2159
        %v2161 = vpop.f32.mrb[0].mxu0
        %2162 = vmatprep.mubr.bf16.mxu0 0
        %2163 = vmatmul.mubr.bf16.gmra.mrb[0].mxu0 %v2078
        %v2164 = vpop.f32.mrb[0].mxu0
        %v2165 = vadd.f32 0.0, %v2164
        %v2166 = vpop.f32.mrb[0].mxu0
        %v2167 = vpop.f32.mrb[0].mxu0
        %v2168 = vadd.f32 0.0, %v2167
        %v2169 = vpop.f32.mrb[0].mxu0
        %2170 = vmatprep.mubr.bf16.mxu0 0
        %2171 = vmatmul.mubr.bf16.gmra.mrb[0].mxu0 %v2081
        %v2172 = vpop.f32.mrb[0].mxu0
        %v2173 = vadd.f32 0.0, %v2172
        %v2174 = vpop.f32.mrb[0].mxu0
        %v2175 = vpop.f32.mrb[0].mxu0
        %v2176 = vadd.f32 0.0, %v2175
        %v2177 = vpop.f32.mrb[0].mxu0
        %2178 = vmatprep.mubr.bf16.mxu0 0
        %2179 = vmatmul.mubr.bf16.gmra.mrb[0].mxu0 %v2084
        %v2180 = vpop.f32.mrb[0].mxu0
        %v2181 = vadd.f32 0.0, %v2180
        %v2182 = vpop.f32.mrb[0].mxu0
        %v2183 = vpop.f32.mrb[0].mxu0
        %v2184 = vadd.f32 0.0, %v2183
        %v2185 = vpop.f32.mrb[0].mxu0
        %2186 = vmatprep.mubr.bf16.mxu0 0
        %2187 = vmatmul.mubr.bf16.gmra.mrb[0].mxu0 %v2087
        %v2188 = vpop.f32.mrb[0].mxu0
        %v2189 = vadd.f32 0.0, %v2188
        %v2190 = vpop.f32.mrb[0].mxu0
        %v2191 = vpop.f32.mrb[0].mxu0
        %v2192 = vadd.f32 0.0, %v2191
        %v2193 = vpop.f32.mrb[0].mxu0
        %2194 = vmatprep.mubr.bf16.mxu0 0
        %2195 = vmatmul.mubr.bf16.gmra.mrb[0].mxu0 %v2090
        %v2196 = vpop.f32.mrb[0].mxu0
        %v2197 = vadd.f32 0.0, %v2196
        %v2198 = vpop.f32.mrb[0].mxu0
        %v2199 = vpop.f32.mrb[0].mxu0
        %v2200 = vadd.f32 0.0, %v2199
        %v2201 = vpop.f32.mrb[0].mxu0
        %2202 = vmatprep.mubr.bf16.mxu0 0
        %2203 = vmatmul.mubr.bf16.gmra.mrb[0].mxu0 %v2093
        %v2204 = vpop.f32.mrb[0].mxu0
        %v2205 = vadd.f32 0.0, %v2204
        %v2206 = vpop.f32.mrb[0].mxu0
        %v2207 = vpop.f32.mrb[0].mxu0
        %v2208 = vadd.f32 0.0, %v2207
        %v2209 = vpop.f32.mrb[0].mxu0
        %2210 = vmatprep.mubr.bf16.mxu0 0
        %2211 = vmatmul.mubr.bf16.gmra.mrb[0].mxu0 %v2096
        %v2212 = vpop.f32.mrb[0].mxu0
        %v2213 = vadd.f32 0.0, %v2212
        %v2214 = vpop.f32.mrb[0].mxu0
        %v2215 = vpop.f32.mrb[0].mxu0
        %v2216 = vadd.f32 0.0, %v2215
        %v2217 = vpop.f32.mrb[0].mxu0
        %2218 = vdwg.mxu0
        %v2219 = vsel %vm2058, %v2157, -1e+30
        %v2220 = vsel %vm2059, %v2160, -1e+30
        %v2221 = vsel %vm2060, %v2165, -1e+30
        %v2222 = vsel %vm2061, %v2168, -1e+30
        %v2223 = vsel %vm2062, %v2173, -1e+30
        %v2224 = vsel %vm2063, %v2176, -1e+30
        %v2225 = vsel %vm2064, %v2181, -1e+30
        %v2226 = vsel %vm2065, %v2184, -1e+30
        %v2227 = vsel %vm2066, %v2189, -1e+30
        %v2228 = vsel %vm2067, %v2192, -1e+30
        %v2229 = vsel %vm2068, %v2197, -1e+30
        %v2230 = vsel %vm2069, %v2200, -1e+30
        %v2231 = vsel %vm2070, %v2205, -1e+30
        %v2232 = vsel %vm2071, %v2208, -1e+30
        %v2233 = vsel %vm2072, %v2213, -1e+30
        %v2234 = vsel %vm2073, %v2216, -1e+30
        %2235 = vmax.xlane.f32.xlu0 %v2219
        %v2236 = vpop.xlane.xlu0 %2235
        %2237 = vmax.xlane.f32.xlu0 %v2220
        %v2238 = vpop.xlane.xlu0 %2237
        %2239 = vmax.xlane.f32.xlu0 %v2221
        %v2240 = vpop.xlane.xlu0 %2239
        %2241 = vmax.xlane.f32.xlu0 %v2222
        %v2242 = vpop.xlane.xlu0 %2241
        %2243 = vmax.xlane.f32.xlu0 %v2223
        %v2244 = vpop.xlane.xlu0 %2243
        %2245 = vmax.xlane.f32.xlu0 %v2224
        %v2246 = vpop.xlane.xlu0 %2245
        %2247 = vmax.xlane.f32.xlu0 %v2225
        %v2248 = vpop.xlane.xlu0 %2247
        %2249 = vmax.xlane.f32.xlu0 %v2226
        %v2250 = vpop.xlane.xlu0 %2249
        %2251 = vmax.xlane.f32.xlu0 %v2227
        %v2252 = vpop.xlane.xlu0 %2251
        %2253 = vmax.xlane.f32.xlu0 %v2228
        %v2254 = vpop.xlane.xlu0 %2253
        %2255 = vmax.xlane.f32.xlu0 %v2229
        %v2256 = vpop.xlane.xlu0 %2255
        %2257 = vmax.xlane.f32.xlu0 %v2230
        %v2258 = vpop.xlane.xlu0 %2257
        %2259 = vmax.xlane.f32.xlu0 %v2231
        %v2260 = vpop.xlane.xlu0 %2259
        %2261 = vmax.xlane.f32.xlu0 %v2232
        %v2262 = vpop.xlane.xlu0 %2261
        %2263 = vmax.xlane.f32.xlu0 %v2233
        %v2264 = vpop.xlane.xlu0 %2263
        %2265 = vmax.xlane.f32.xlu0 %v2234
        %v2266 = vpop.xlane.xlu0 %2265
        %v2267 = vsub.f32 %v2219, %v2236
        %v2268 = vsub.f32 %v2220, %v2238
        %v2269 = vsub.f32 %v2221, %v2240
        %v2270 = vsub.f32 %v2222, %v2242
        %v2271 = vsub.f32 %v2223, %v2244
        %v2272 = vsub.f32 %v2224, %v2246
        %v2273 = vsub.f32 %v2225, %v2248
        %v2274 = vsub.f32 %v2226, %v2250
        %v2275 = vsub.f32 %v2227, %v2252
        %v2276 = vsub.f32 %v2228, %v2254
        %v2277 = vsub.f32 %v2229, %v2256
        %v2278 = vsub.f32 %v2230, %v2258
        %v2279 = vsub.f32 %v2231, %v2260
        %v2280 = vsub.f32 %v2232, %v2262
        %v2281 = vsub.f32 %v2233, %v2264
        %v2282 = vsub.f32 %v2234, %v2266
        %v2283 = vmul.f32 %v2267, 1.442695
        %v2284 = vpow.pop %v2283
        %v2285 = vmul.f32 %v2268, 1.442695
        %v2286 = vpow.pop %v2285
        %v2287 = vmul.f32 %v2269, 1.442695
        %v2288 = vpow.pop %v2287
        %v2289 = vmul.f32 %v2270, 1.442695
        %v2290 = vpow.pop %v2289
        %v2291 = vmul.f32 %v2271, 1.442695
        %v2292 = vpow.pop %v2291
        %v2293 = vmul.f32 %v2272, 1.442695
        %v2294 = vpow.pop %v2293
        %v2295 = vmul.f32 %v2273, 1.442695
        %v2296 = vpow.pop %v2295
        %v2297 = vmul.f32 %v2274, 1.442695
        %v2298 = vpow.pop %v2297
        %v2299 = vmul.f32 %v2275, 1.442695
        %v2300 = vpow.pop %v2299
        %v2301 = vmul.f32 %v2276, 1.442695
        %v2302 = vpow.pop %v2301
        %v2303 = vmul.f32 %v2277, 1.442695
        %v2304 = vpow.pop %v2303
        %v2305 = vmul.f32 %v2278, 1.442695
        %v2306 = vpow.pop %v2305
        %v2307 = vmul.f32 %v2279, 1.442695
        %v2308 = vpow.pop %v2307
        %v2309 = vmul.f32 %v2280, 1.442695
        %v2310 = vpow.pop %v2309
        %v2311 = vmul.f32 %v2281, 1.442695
        %v2312 = vpow.pop %v2311
        %v2313 = vmul.f32 %v2282, 1.442695
        %v2314 = vpow.pop %v2313
        %2315 = vadd.xlane.f32.xlu0 %v2284
        %v2316 = vpop.xlane.xlu0 %2315
        %2317 = vadd.xlane.f32.xlu0 %v2286
        %v2318 = vpop.xlane.xlu0 %2317
        %2319 = vadd.xlane.f32.xlu0 %v2288
        %v2320 = vpop.xlane.xlu0 %2319
        %2321 = vadd.xlane.f32.xlu0 %v2290
        %v2322 = vpop.xlane.xlu0 %2321
        %2323 = vadd.xlane.f32.xlu0 %v2292
        %v2324 = vpop.xlane.xlu0 %2323
        %2325 = vadd.xlane.f32.xlu0 %v2294
        %v2326 = vpop.xlane.xlu0 %2325
        %2327 = vadd.xlane.f32.xlu0 %v2296
        %v2328 = vpop.xlane.xlu0 %2327
        %2329 = vadd.xlane.f32.xlu0 %v2298
        %v2330 = vpop.xlane.xlu0 %2329
        %2331 = vadd.xlane.f32.xlu0 %v2300
        %v2332 = vpop.xlane.xlu0 %2331
        %2333 = vadd.xlane.f32.xlu0 %v2302
        %v2334 = vpop.xlane.xlu0 %2333
        %2335 = vadd.xlane.f32.xlu0 %v2304
        %v2336 = vpop.xlane.xlu0 %2335
        %2337 = vadd.xlane.f32.xlu0 %v2306
        %v2338 = vpop.xlane.xlu0 %2337
        %2339 = vadd.xlane.f32.xlu0 %v2308
        %v2340 = vpop.xlane.xlu0 %2339
        %2341 = vadd.xlane.f32.xlu0 %v2310
        %v2342 = vpop.xlane.xlu0 %2341
        %2343 = vadd.xlane.f32.xlu0 %v2312
        %v2344 = vpop.xlane.xlu0 %2343
        %2345 = vadd.xlane.f32.xlu0 %v2314
        %v2346 = vpop.xlane.xlu0 %2345
        %v2347 = vpack.c.bf16 %v2286, %v2284
        %v2348 = vpack.c.bf16 %v2290, %v2288
        %v2349 = vpack.c.bf16 %v2294, %v2292
        %v2350 = vpack.c.bf16 %v2298, %v2296
        %v2351 = vpack.c.bf16 %v2302, %v2300
        %v2352 = vpack.c.bf16 %v2306, %v2304
        %v2353 = vpack.c.bf16 %v2310, %v2308
        %v2354 = vpack.c.bf16 %v2314, %v2312
        %v2355 = vrcp.pop %v2316
        %v2356 = vrcp.pop %v2318
        %v2357 = vrcp.pop %v2320
        %v2358 = vrcp.pop %v2322
        %v2359 = vrcp.pop %v2324
        %v2360 = vrcp.pop %v2326
        %v2361 = vrcp.pop %v2328
        %v2362 = vrcp.pop %v2330
        %v2363 = vrcp.pop %v2332
        %v2364 = vrcp.pop %v2334
        %v2365 = vrcp.pop %v2336
        %v2366 = vrcp.pop %v2338
        %v2367 = vrcp.pop %v2340
        %v2368 = vrcp.pop %v2342
        %v2369 = vrcp.pop %v2344
        %v2370 = vrcp.pop %v2346
        %2371 = vmatprep.subr.bf16.mxu0 0
        %2372 = vmatpush1.bf16.msra.mxu0 %v2031
        %2373 = vmatprep.subr.bf16.mxu0 0
        %2374 = vmatpush1.bf16.msra.mxu0 %v2032
        %2375 = vmatprep.subr.bf16.mxu0 0
        %2376 = vmatpush1.bf16.msra.mxu0 %v2033
        %2377 = vmatprep.subr.bf16.mxu0 0
        %2378 = vmatpush1.bf16.msra.mxu0 %v2034
        %2379 = vmatprep.subr.bf16.mxu0 0
        %2380 = vmatpush1.bf16.msra.mxu0 %v2035
        %2381 = vmatprep.subr.bf16.mxu0 0
        %2382 = vmatpush1.bf16.msra.mxu0 %v2036
        %2383 = vmatprep.subr.bf16.mxu0 0
        %2384 = vmatpush1.bf16.msra.mxu0 %v2037
        %2385 = vmatprep.subr.bf16.mxu0 0
        %2386 = vmatpush1.bf16.msra.mxu0 %v2038
        %2387 = vmatprep.subr.bf16.mxu0 0
        %2388 = vmatpush1.bf16.msra.mxu0 0
        %2389 = vmatprep.subr.bf16.mxu0 0
        %2390 = vmatpush1.bf16.msra.mxu0 0
        %2391 = vmatprep.subr.bf16.mxu0 0
        %2392 = vmatpush1.bf16.msra.mxu0 0
        %2393 = vmatprep.subr.bf16.mxu0 0
        %2394 = vmatpush1.bf16.msra.mxu0 0
        %2395 = vmatprep.subr.bf16.mxu0 0
        %2396 = vmatpush1.bf16.msra.mxu0 0
        %2397 = vmatprep.subr.bf16.mxu0 0
        %2398 = vmatpush1.bf16.msra.mxu0 0
        %2399 = vmatprep.subr.bf16.mxu0 0
        %2400 = vmatpush1.bf16.msra.mxu0 0
        %2401 = vmatprep.subr.bf16.mxu0 0
        %2402 = vmatpush1.bf16.msra.mxu0 0
        %2403 = vmatprep.mubr.bf16.mxu0 0
        %2404 = vmatmul.mubr.bf16.gmra.mrb[0].mxu0 %v2347
        %v2405 = vpop.f32.mrb[0].mxu0
        %v2406 = vadd.f32 0.0, %v2405
        %v2407 = vpop.f32.mrb[0].mxu0
        %v2408 = vpop.f32.mrb[0].mxu0
        %v2409 = vadd.f32 0.0, %v2408
        %v2410 = vpop.f32.mrb[0].mxu0
        %2411 = vmatprep.mubr.bf16.mxu0 0
        %2412 = vmatmul.mubr.bf16.gmra.mrb[0].mxu0 %v2348
        %v2413 = vpop.f32.mrb[0].mxu0
        %v2414 = vadd.f32 0.0, %v2413
        %v2415 = vpop.f32.mrb[0].mxu0
        %v2416 = vpop.f32.mrb[0].mxu0
        %v2417 = vadd.f32 0.0, %v2416
        %v2418 = vpop.f32.mrb[0].mxu0
        %2419 = vmatprep.mubr.bf16.mxu0 0
        %2420 = vmatmul.mubr.bf16.gmra.mrb[0].mxu0 %v2349
        %v2421 = vpop.f32.mrb[0].mxu0
        %v2422 = vadd.f32 0.0, %v2421
        %v2423 = vpop.f32.mrb[0].mxu0
        %v2424 = vpop.f32.mrb[0].mxu0
        %v2425 = vadd.f32 0.0, %v2424
        %v2426 = vpop.f32.mrb[0].mxu0
        %2427 = vmatprep.mubr.bf16.mxu0 0
        %2428 = vmatmul.mubr.bf16.gmra.mrb[0].mxu0 %v2350
        %v2429 = vpop.f32.mrb[0].mxu0
        %v2430 = vadd.f32 0.0, %v2429
        %v2431 = vpop.f32.mrb[0].mxu0
        %v2432 = vpop.f32.mrb[0].mxu0
        %v2433 = vadd.f32 0.0, %v2432
        %v2434 = vpop.f32.mrb[0].mxu0
        %2435 = vmatprep.mubr.bf16.mxu0 0
        %2436 = vmatmul.mubr.bf16.gmra.mrb[0].mxu0 %v2351
        %v2437 = vpop.f32.mrb[0].mxu0
        %v2438 = vadd.f32 0.0, %v2437
        %v2439 = vpop.f32.mrb[0].mxu0
        %v2440 = vpop.f32.mrb[0].mxu0
        %v2441 = vadd.f32 0.0, %v2440
        %v2442 = vpop.f32.mrb[0].mxu0
        %2443 = vmatprep.mubr.bf16.mxu0 0
        %2444 = vmatmul.mubr.bf16.gmra.mrb[0].mxu0 %v2352
        %v2445 = vpop.f32.mrb[0].mxu0
        %v2446 = vadd.f32 0.0, %v2445
        %v2447 = vpop.f32.mrb[0].mxu0
        %v2448 = vpop.f32.mrb[0].mxu0
        %v2449 = vadd.f32 0.0, %v2448
        %v2450 = vpop.f32.mrb[0].mxu0
        %2451 = vmatprep.mubr.bf16.mxu0 0
        %2452 = vmatmul.mubr.bf16.gmra.mrb[0].mxu0 %v2353
        %v2453 = vpop.f32.mrb[0].mxu0
        %v2454 = vadd.f32 0.0, %v2453
        %v2455 = vpop.f32.mrb[0].mxu0
        %v2456 = vpop.f32.mrb[0].mxu0
        %v2457 = vadd.f32 0.0, %v2456
        %v2458 = vpop.f32.mrb[0].mxu0
        %2459 = vmatprep.mubr.bf16.mxu0 0
        %2460 = vmatmul.mubr.bf16.gmra.mrb[0].mxu0 %v2354
        %v2461 = vpop.f32.mrb[0].mxu0
        %v2462 = vadd.f32 0.0, %v2461
        %v2463 = vpop.f32.mrb[0].mxu0
        %v2464 = vpop.f32.mrb[0].mxu0
        %v2465 = vadd.f32 0.0, %v2464
        %v2466 = vpop.f32.mrb[0].mxu0
        %2467 = vdwg.mxu0
        %v2468 = vmul.f32 %v2406, %v2355
        %v2469 = vmul.f32 %v2409, %v2356
        %v2470 = vmul.f32 %v2414, %v2357
        %v2471 = vmul.f32 %v2417, %v2358
        %v2472 = vmul.f32 %v2422, %v2359
        %v2473 = vmul.f32 %v2425, %v2360
        %v2474 = vmul.f32 %v2430, %v2361
        %v2475 = vmul.f32 %v2433, %v2362
        %v2476 = vmul.f32 %v2438, %v2363
        %v2477 = vmul.f32 %v2441, %v2364
        %v2478 = vmul.f32 %v2446, %v2365
        %v2479 = vmul.f32 %v2449, %v2366
        %v2480 = vmul.f32 %v2454, %v2367
        %v2481 = vmul.f32 %v2457, %v2368
        %v2482 = vmul.f32 %v2462, %v2369
        %v2483 = vmul.f32 %v2465, %v2370
        %2492 = vrot.lane.b32.xlu0 %v2015, 64
        %v2493 = vpop.permute.xlu0 %2492
        %2494 = vrot.lane.b32.xlu0 %v2016, 64
        %v2495 = vpop.permute.xlu0 %2494
        %2496 = vrot.lane.b32.xlu0 %v2017, 64
        %v2497 = vpop.permute.xlu0 %2496
        %2498 = vrot.lane.b32.xlu0 %v2018, 64
        %v2499 = vpop.permute.xlu0 %2498
        %2500 = vrot.lane.b32.xlu0 %v2019, 64
        %v2501 = vpop.permute.xlu0 %2500
        %2502 = vrot.lane.b32.xlu0 %v2020, 64
        %v2503 = vpop.permute.xlu0 %2502
        %2504 = vrot.lane.b32.xlu0 %v2021, 64
        %v2505 = vpop.permute.xlu0 %2504
        %2506 = vrot.lane.b32.xlu0 %v2022, 64
        %v2507 = vpop.permute.xlu0 %2506
        %2516 = vrot.lane.b32.xlu0 %v2023, 64
        %v2517 = vpop.permute.xlu0 %2516
        %2518 = vrot.lane.b32.xlu0 %v2024, 64
        %v2519 = vpop.permute.xlu0 %2518
        %2520 = vrot.lane.b32.xlu0 %v2025, 64
        %v2521 = vpop.permute.xlu0 %2520
        %2522 = vrot.lane.b32.xlu0 %v2026, 64
        %v2523 = vpop.permute.xlu0 %2522
        %2524 = vrot.lane.b32.xlu0 %v2027, 64
        %v2525 = vpop.permute.xlu0 %2524
        %2526 = vrot.lane.b32.xlu0 %v2028, 64
        %v2527 = vpop.permute.xlu0 %2526
        %2528 = vrot.lane.b32.xlu0 %v2029, 64
        %v2529 = vpop.permute.xlu0 %2528
        %2530 = vrot.lane.b32.xlu0 %v2030, 64
        %v2531 = vpop.permute.xlu0 %2530
        %v2533 = vsel %vm889, %v2493, 0
        %v2536 = vsel %vm889, %v2495, 0
        %v2539 = vsel %vm889, %v2497, 0
        %v2542 = vsel %vm889, %v2499, 0
        %v2545 = vsel %vm889, %v2501, 0
        %v2548 = vsel %vm889, %v2503, 0
        %v2551 = vsel %vm889, %v2505, 0
        %v2554 = vsel %vm889, %v2507, 0
        %v2557 = vsel %vm889, %v2517, 0
        %v2560 = vsel %vm889, %v2519, 0
        %v2563 = vsel %vm889, %v2521, 0
        %v2566 = vsel %vm889, %v2523, 0
        %v2569 = vsel %vm889, %v2525, 0
        %v2572 = vsel %vm889, %v2527, 0
        %v2575 = vsel %vm889, %v2529, 0
        %v2578 = vsel %vm889, %v2531, 0
        %2580 = vmatprep.subr.bf16.mxu0 0
        %2581 = vmatpush1.bf16.xpose.msra.mxu0 %v2557
        %2582 = vmatprep.subr.bf16.mxu0 0
        %2583 = vmatpush1.bf16.xpose.msra.mxu0 %v2560
        %2584 = vmatprep.subr.bf16.mxu0 0
        %2585 = vmatpush1.bf16.xpose.msra.mxu0 %v2563
        %2586 = vmatprep.subr.bf16.mxu0 0
        %2587 = vmatpush1.bf16.xpose.msra.mxu0 %v2566
        %2588 = vmatprep.subr.bf16.mxu0 0
        %2589 = vmatpush1.bf16.xpose.msra.mxu0 %v2569
        %2590 = vmatprep.subr.bf16.mxu0 0
        %2591 = vmatpush1.bf16.xpose.msra.mxu0 %v2572
        %2592 = vmatprep.subr.bf16.mxu0 0
        %2593 = vmatpush1.bf16.xpose.msra.mxu0 %v2575
        %2594 = vmatprep.subr.bf16.mxu0 0
        %2595 = vmatpush1.bf16.xpose.msra.mxu0 %v2578
        %2596 = vmatprep.subr.bf16.mxu0 0
        %2597 = vmatpush1.bf16.xpose.msra.mxu0 0
        %2598 = vmatprep.subr.bf16.mxu0 0
        %2599 = vmatpush1.bf16.xpose.msra.mxu0 0
        %2600 = vmatprep.subr.bf16.mxu0 0
        %2601 = vmatpush1.bf16.xpose.msra.mxu0 0
        %2602 = vmatprep.subr.bf16.mxu0 0
        %2603 = vmatpush1.bf16.xpose.msra.mxu0 0
        %2604 = vmatprep.subr.bf16.mxu0 0
        %2605 = vmatpush1.bf16.xpose.msra.mxu0 0
        %2606 = vmatprep.subr.bf16.mxu0 0
        %2607 = vmatpush1.bf16.xpose.msra.mxu0 0
        %2608 = vmatprep.subr.bf16.mxu0 0
        %2609 = vmatpush1.bf16.xpose.msra.mxu0 0
        %2610 = vmatprep.subr.bf16.mxu0 0
        %2611 = vmatpush1.bf16.xpose.msra.mxu0 0
        %2612 = vmatprep.mubr.bf16.mxu0 0
        %2613 = vmatmul.mubr.bf16.gmra.mrb[0].mxu0 %v2533
        %v2614 = vpop.f32.mrb[0].mxu0
        %v2615 = vadd.f32 0.0, %v2614
        %v2616 = vpop.f32.mrb[0].mxu0
        %v2617 = vpop.f32.mrb[0].mxu0
        %v2618 = vadd.f32 0.0, %v2617
        %v2619 = vpop.f32.mrb[0].mxu0
        %2620 = vmatprep.mubr.bf16.mxu0 0
        %2621 = vmatmul.mubr.bf16.gmra.mrb[0].mxu0 %v2536
        %v2622 = vpop.f32.mrb[0].mxu0
        %v2623 = vadd.f32 0.0, %v2622
        %v2624 = vpop.f32.mrb[0].mxu0
        %v2625 = vpop.f32.mrb[0].mxu0
        %v2626 = vadd.f32 0.0, %v2625
        %v2627 = vpop.f32.mrb[0].mxu0
        %2628 = vmatprep.mubr.bf16.mxu0 0
        %2629 = vmatmul.mubr.bf16.gmra.mrb[0].mxu0 %v2539
        %v2630 = vpop.f32.mrb[0].mxu0
        %v2631 = vadd.f32 0.0, %v2630
        %v2632 = vpop.f32.mrb[0].mxu0
        %v2633 = vpop.f32.mrb[0].mxu0
        %v2634 = vadd.f32 0.0, %v2633
        %v2635 = vpop.f32.mrb[0].mxu0
        %2636 = vmatprep.mubr.bf16.mxu0 0
        %2637 = vmatmul.mubr.bf16.gmra.mrb[0].mxu0 %v2542
        %v2638 = vpop.f32.mrb[0].mxu0
        %v2639 = vadd.f32 0.0, %v2638
        %v2640 = vpop.f32.mrb[0].mxu0
        %v2641 = vpop.f32.mrb[0].mxu0
        %v2642 = vadd.f32 0.0, %v2641
        %v2643 = vpop.f32.mrb[0].mxu0
        %2644 = vmatprep.mubr.bf16.mxu0 0
        %2645 = vmatmul.mubr.bf16.gmra.mrb[0].mxu0 %v2545
        %v2646 = vpop.f32.mrb[0].mxu0
        %v2647 = vadd.f32 0.0, %v2646
        %v2648 = vpop.f32.mrb[0].mxu0
        %v2649 = vpop.f32.mrb[0].mxu0
        %v2650 = vadd.f32 0.0, %v2649
        %v2651 = vpop.f32.mrb[0].mxu0
        %2652 = vmatprep.mubr.bf16.mxu0 0
        %2653 = vmatmul.mubr.bf16.gmra.mrb[0].mxu0 %v2548
        %v2654 = vpop.f32.mrb[0].mxu0
        %v2655 = vadd.f32 0.0, %v2654
        %v2656 = vpop.f32.mrb[0].mxu0
        %v2657 = vpop.f32.mrb[0].mxu0
        %v2658 = vadd.f32 0.0, %v2657
        %v2659 = vpop.f32.mrb[0].mxu0
        %2660 = vmatprep.mubr.bf16.mxu0 0
        %2661 = vmatmul.mubr.bf16.gmra.mrb[0].mxu0 %v2551
        %v2662 = vpop.f32.mrb[0].mxu0
        %v2663 = vadd.f32 0.0, %v2662
        %v2664 = vpop.f32.mrb[0].mxu0
        %v2665 = vpop.f32.mrb[0].mxu0
        %v2666 = vadd.f32 0.0, %v2665
        %v2667 = vpop.f32.mrb[0].mxu0
        %2668 = vmatprep.mubr.bf16.mxu0 0
        %2669 = vmatmul.mubr.bf16.gmra.mrb[0].mxu0 %v2554
        %v2670 = vpop.f32.mrb[0].mxu0
        %v2671 = vadd.f32 0.0, %v2670
        %v2672 = vpop.f32.mrb[0].mxu0
        %v2673 = vpop.f32.mrb[0].mxu0
        %v2674 = vadd.f32 0.0, %v2673
        %v2675 = vpop.f32.mrb[0].mxu0
        %2676 = vdwg.mxu0
        %v2677 = vsel %vm2058, %v2615, -1e+30
        %v2678 = vsel %vm2059, %v2618, -1e+30
        %v2679 = vsel %vm2060, %v2623, -1e+30
        %v2680 = vsel %vm2061, %v2626, -1e+30
        %v2681 = vsel %vm2062, %v2631, -1e+30
        %v2682 = vsel %vm2063, %v2634, -1e+30
        %v2683 = vsel %vm2064, %v2639, -1e+30
        %v2684 = vsel %vm2065, %v2642, -1e+30
        %v2685 = vsel %vm2066, %v2647, -1e+30
        %v2686 = vsel %vm2067, %v2650, -1e+30
        %v2687 = vsel %vm2068, %v2655, -1e+30
        %v2688 = vsel %vm2069, %v2658, -1e+30
        %v2689 = vsel %vm2070, %v2663, -1e+30
        %v2690 = vsel %vm2071, %v2666, -1e+30
        %v2691 = vsel %vm2072, %v2671, -1e+30
        %v2692 = vsel %vm2073, %v2674, -1e+30
        %2693 = vmax.xlane.f32.xlu0 %v2677
        %v2694 = vpop.xlane.xlu0 %2693
        %2695 = vmax.xlane.f32.xlu0 %v2678
        %v2696 = vpop.xlane.xlu0 %2695
        %2697 = vmax.xlane.f32.xlu0 %v2679
        %v2698 = vpop.xlane.xlu0 %2697
        %2699 = vmax.xlane.f32.xlu0 %v2680
        %v2700 = vpop.xlane.xlu0 %2699
        %2701 = vmax.xlane.f32.xlu0 %v2681
        %v2702 = vpop.xlane.xlu0 %2701
        %2703 = vmax.xlane.f32.xlu0 %v2682
        %v2704 = vpop.xlane.xlu0 %2703
        %2705 = vmax.xlane.f32.xlu0 %v2683
        %v2706 = vpop.xlane.xlu0 %2705
        %2707 = vmax.xlane.f32.xlu0 %v2684
        %v2708 = vpop.xlane.xlu0 %2707
        %2709 = vmax.xlane.f32.xlu0 %v2685
        %v2710 = vpop.xlane.xlu0 %2709
        %2711 = vmax.xlane.f32.xlu0 %v2686
        %v2712 = vpop.xlane.xlu0 %2711
        %2713 = vmax.xlane.f32.xlu0 %v2687
        %v2714 = vpop.xlane.xlu0 %2713
        %2715 = vmax.xlane.f32.xlu0 %v2688
        %v2716 = vpop.xlane.xlu0 %2715
        %2717 = vmax.xlane.f32.xlu0 %v2689
        %v2718 = vpop.xlane.xlu0 %2717
        %2719 = vmax.xlane.f32.xlu0 %v2690
        %v2720 = vpop.xlane.xlu0 %2719
        %2721 = vmax.xlane.f32.xlu0 %v2691
        %v2722 = vpop.xlane.xlu0 %2721
        %2723 = vmax.xlane.f32.xlu0 %v2692
        %v2724 = vpop.xlane.xlu0 %2723
        %v2725 = vsub.f32 %v2677, %v2694
        %v2726 = vsub.f32 %v2678, %v2696
        %v2727 = vsub.f32 %v2679, %v2698
        %v2728 = vsub.f32 %v2680, %v2700
        %v2729 = vsub.f32 %v2681, %v2702
        %v2730 = vsub.f32 %v2682, %v2704
        %v2731 = vsub.f32 %v2683, %v2706
        %v2732 = vsub.f32 %v2684, %v2708
        %v2733 = vsub.f32 %v2685, %v2710
        %v2734 = vsub.f32 %v2686, %v2712
        %v2735 = vsub.f32 %v2687, %v2714
        %v2736 = vsub.f32 %v2688, %v2716
        %v2737 = vsub.f32 %v2689, %v2718
        %v2738 = vsub.f32 %v2690, %v2720
        %v2739 = vsub.f32 %v2691, %v2722
        %v2740 = vsub.f32 %v2692, %v2724
        %v2741 = vmul.f32 %v2725, 1.442695
        %v2742 = vpow.pop %v2741
        %v2743 = vmul.f32 %v2726, 1.442695
        %v2744 = vpow.pop %v2743
        %v2745 = vmul.f32 %v2727, 1.442695
        %v2746 = vpow.pop %v2745
        %v2747 = vmul.f32 %v2728, 1.442695
        %v2748 = vpow.pop %v2747
        %v2749 = vmul.f32 %v2729, 1.442695
        %v2750 = vpow.pop %v2749
        %v2751 = vmul.f32 %v2730, 1.442695
        %v2752 = vpow.pop %v2751
        %v2753 = vmul.f32 %v2731, 1.442695
        %v2754 = vpow.pop %v2753
        %v2755 = vmul.f32 %v2732, 1.442695
        %v2756 = vpow.pop %v2755
        %v2757 = vmul.f32 %v2733, 1.442695
        %v2758 = vpow.pop %v2757
        %v2759 = vmul.f32 %v2734, 1.442695
        %v2760 = vpow.pop %v2759
        %v2761 = vmul.f32 %v2735, 1.442695
        %v2762 = vpow.pop %v2761
        %v2763 = vmul.f32 %v2736, 1.442695
        %v2764 = vpow.pop %v2763
        %v2765 = vmul.f32 %v2737, 1.442695
        %v2766 = vpow.pop %v2765
        %v2767 = vmul.f32 %v2738, 1.442695
        %v2768 = vpow.pop %v2767
        %v2769 = vmul.f32 %v2739, 1.442695
        %v2770 = vpow.pop %v2769
        %v2771 = vmul.f32 %v2740, 1.442695
        %v2772 = vpow.pop %v2771
        %2773 = vadd.xlane.f32.xlu0 %v2742
        %v2774 = vpop.xlane.xlu0 %2773
        %2775 = vadd.xlane.f32.xlu0 %v2744
        %v2776 = vpop.xlane.xlu0 %2775
        %2777 = vadd.xlane.f32.xlu0 %v2746
        %v2778 = vpop.xlane.xlu0 %2777
        %2779 = vadd.xlane.f32.xlu0 %v2748
        %v2780 = vpop.xlane.xlu0 %2779
        %2781 = vadd.xlane.f32.xlu0 %v2750
        %v2782 = vpop.xlane.xlu0 %2781
        %2783 = vadd.xlane.f32.xlu0 %v2752
        %v2784 = vpop.xlane.xlu0 %2783
        %2785 = vadd.xlane.f32.xlu0 %v2754
        %v2786 = vpop.xlane.xlu0 %2785
        %2787 = vadd.xlane.f32.xlu0 %v2756
        %v2788 = vpop.xlane.xlu0 %2787
        %2789 = vadd.xlane.f32.xlu0 %v2758
        %v2790 = vpop.xlane.xlu0 %2789
        %2791 = vadd.xlane.f32.xlu0 %v2760
        %v2792 = vpop.xlane.xlu0 %2791
        %2793 = vadd.xlane.f32.xlu0 %v2762
        %v2794 = vpop.xlane.xlu0 %2793
        %2795 = vadd.xlane.f32.xlu0 %v2764
        %v2796 = vpop.xlane.xlu0 %2795
        %2797 = vadd.xlane.f32.xlu0 %v2766
        %v2798 = vpop.xlane.xlu0 %2797
        %2799 = vadd.xlane.f32.xlu0 %v2768
        %v2800 = vpop.xlane.xlu0 %2799
        %2801 = vadd.xlane.f32.xlu0 %v2770
        %v2802 = vpop.xlane.xlu0 %2801
        %2803 = vadd.xlane.f32.xlu0 %v2772
        %v2804 = vpop.xlane.xlu0 %2803
        %v2805 = vpack.c.bf16 %v2744, %v2742
        %v2806 = vpack.c.bf16 %v2748, %v2746
        %v2807 = vpack.c.bf16 %v2752, %v2750
        %v2808 = vpack.c.bf16 %v2756, %v2754
        %v2809 = vpack.c.bf16 %v2760, %v2758
        %v2810 = vpack.c.bf16 %v2764, %v2762
        %v2811 = vpack.c.bf16 %v2768, %v2766
        %v2812 = vpack.c.bf16 %v2772, %v2770
        %v2813 = vrcp.pop %v2774
        %v2814 = vrcp.pop %v2776
        %v2815 = vrcp.pop %v2778
        %v2816 = vrcp.pop %v2780
        %v2817 = vrcp.pop %v2782
        %v2818 = vrcp.pop %v2784
        %v2819 = vrcp.pop %v2786
        %v2820 = vrcp.pop %v2788
        %v2821 = vrcp.pop %v2790
        %v2822 = vrcp.pop %v2792
        %v2823 = vrcp.pop %v2794
        %v2824 = vrcp.pop %v2796
        %v2825 = vrcp.pop %v2798
        %v2826 = vrcp.pop %v2800
        %v2827 = vrcp.pop %v2802
        %v2828 = vrcp.pop %v2804
        %2837 = vrot.lane.b32.xlu0 %v2031, 64
        %v2838 = vpop.permute.xlu0 %2837
        %2839 = vrot.lane.b32.xlu0 %v2032, 64
        %v2840 = vpop.permute.xlu0 %2839
        %2841 = vrot.lane.b32.xlu0 %v2033, 64
        %v2842 = vpop.permute.xlu0 %2841
        %2843 = vrot.lane.b32.xlu0 %v2034, 64
        %v2844 = vpop.permute.xlu0 %2843
        %2845 = vrot.lane.b32.xlu0 %v2035, 64
        %v2846 = vpop.permute.xlu0 %2845
        %2847 = vrot.lane.b32.xlu0 %v2036, 64
        %v2848 = vpop.permute.xlu0 %2847
        %2849 = vrot.lane.b32.xlu0 %v2037, 64
        %v2850 = vpop.permute.xlu0 %2849
        %2851 = vrot.lane.b32.xlu0 %v2038, 64
        %v2852 = vpop.permute.xlu0 %2851
        %2861 = vmatprep.subr.bf16.mxu0 0
        %2862 = vmatpush1.bf16.msra.mxu0 %v2838
        %2863 = vmatprep.subr.bf16.mxu0 0
        %2864 = vmatpush1.bf16.msra.mxu0 %v2840
        %2865 = vmatprep.subr.bf16.mxu0 0
        %2866 = vmatpush1.bf16.msra.mxu0 %v2842
        %2867 = vmatprep.subr.bf16.mxu0 0
        %2868 = vmatpush1.bf16.msra.mxu0 %v2844
        %2869 = vmatprep.subr.bf16.mxu0 0
        %2870 = vmatpush1.bf16.msra.mxu0 %v2846
        %2871 = vmatprep.subr.bf16.mxu0 0
        %2872 = vmatpush1.bf16.msra.mxu0 %v2848
        %2873 = vmatprep.subr.bf16.mxu0 0
        %2874 = vmatpush1.bf16.msra.mxu0 %v2850
        %2875 = vmatprep.subr.bf16.mxu0 0
        %2876 = vmatpush1.bf16.msra.mxu0 %v2852
        %2877 = vmatprep.subr.bf16.mxu0 0
        %2878 = vmatpush1.bf16.msra.mxu0 0
        %2879 = vmatprep.subr.bf16.mxu0 0
        %2880 = vmatpush1.bf16.msra.mxu0 0
        %2881 = vmatprep.subr.bf16.mxu0 0
        %2882 = vmatpush1.bf16.msra.mxu0 0
        %2883 = vmatprep.subr.bf16.mxu0 0
        %2884 = vmatpush1.bf16.msra.mxu0 0
        %2885 = vmatprep.subr.bf16.mxu0 0
        %2886 = vmatpush1.bf16.msra.mxu0 0
        %2887 = vmatprep.subr.bf16.mxu0 0
        %2888 = vmatpush1.bf16.msra.mxu0 0
        %2889 = vmatprep.subr.bf16.mxu0 0
        %2890 = vmatpush1.bf16.msra.mxu0 0
        %2891 = vmatprep.subr.bf16.mxu0 0
        %2892 = vmatpush1.bf16.msra.mxu0 0
        %2893 = vmatprep.mubr.bf16.mxu0 0
        %2894 = vmatmul.mubr.bf16.gmra.mrb[0].mxu0 %v2805
        %v2895 = vpop.f32.mrb[0].mxu0
        %v2896 = vadd.f32 0.0, %v2895
        %v2897 = vpop.f32.mrb[0].mxu0
        %v2898 = vpop.f32.mrb[0].mxu0
        %v2899 = vadd.f32 0.0, %v2898
        %v2900 = vpop.f32.mrb[0].mxu0
        %2901 = vmatprep.mubr.bf16.mxu0 0
        %2902 = vmatmul.mubr.bf16.gmra.mrb[0].mxu0 %v2806
        %v2903 = vpop.f32.mrb[0].mxu0
        %v2904 = vadd.f32 0.0, %v2903
        %v2905 = vpop.f32.mrb[0].mxu0
        %v2906 = vpop.f32.mrb[0].mxu0
        %v2907 = vadd.f32 0.0, %v2906
        %v2908 = vpop.f32.mrb[0].mxu0
        %2909 = vmatprep.mubr.bf16.mxu0 0
        %2910 = vmatmul.mubr.bf16.gmra.mrb[0].mxu0 %v2807
        %v2911 = vpop.f32.mrb[0].mxu0
        %v2912 = vadd.f32 0.0, %v2911
        %v2913 = vpop.f32.mrb[0].mxu0
        %v2914 = vpop.f32.mrb[0].mxu0
        %v2915 = vadd.f32 0.0, %v2914
        %v2916 = vpop.f32.mrb[0].mxu0
        %2917 = vmatprep.mubr.bf16.mxu0 0
        %2918 = vmatmul.mubr.bf16.gmra.mrb[0].mxu0 %v2808
        %v2919 = vpop.f32.mrb[0].mxu0
        %v2920 = vadd.f32 0.0, %v2919
        %v2921 = vpop.f32.mrb[0].mxu0
        %v2922 = vpop.f32.mrb[0].mxu0
        %v2923 = vadd.f32 0.0, %v2922
        %v2924 = vpop.f32.mrb[0].mxu0
        %2925 = vmatprep.mubr.bf16.mxu0 0
        %2926 = vmatmul.mubr.bf16.gmra.mrb[0].mxu0 %v2809
        %v2927 = vpop.f32.mrb[0].mxu0
        %v2928 = vadd.f32 0.0, %v2927
        %v2929 = vpop.f32.mrb[0].mxu0
        %v2930 = vpop.f32.mrb[0].mxu0
        %v2931 = vadd.f32 0.0, %v2930
        %v2932 = vpop.f32.mrb[0].mxu0
        %2933 = vmatprep.mubr.bf16.mxu0 0
        %2934 = vmatmul.mubr.bf16.gmra.mrb[0].mxu0 %v2810
        %v2935 = vpop.f32.mrb[0].mxu0
        %v2936 = vadd.f32 0.0, %v2935
        %v2937 = vpop.f32.mrb[0].mxu0
        %v2938 = vpop.f32.mrb[0].mxu0
        %v2939 = vadd.f32 0.0, %v2938
        %v2940 = vpop.f32.mrb[0].mxu0
        %2941 = vmatprep.mubr.bf16.mxu0 0
        %2942 = vmatmul.mubr.bf16.gmra.mrb[0].mxu0 %v2811
        %v2943 = vpop.f32.mrb[0].mxu0
        %v2944 = vadd.f32 0.0, %v2943
        %v2945 = vpop.f32.mrb[0].mxu0
        %v2946 = vpop.f32.mrb[0].mxu0
        %v2947 = vadd.f32 0.0, %v2946
        %v2948 = vpop.f32.mrb[0].mxu0
        %2949 = vmatprep.mubr.bf16.mxu0 0
        %2950 = vmatmul.mubr.bf16.gmra.mrb[0].mxu0 %v2812
        %v2951 = vpop.f32.mrb[0].mxu0
        %v2952 = vadd.f32 0.0, %v2951
        %v2953 = vpop.f32.mrb[0].mxu0
        %v2954 = vpop.f32.mrb[0].mxu0
        %v2955 = vadd.f32 0.0, %v2954
        %v2956 = vpop.f32.mrb[0].mxu0
        %2957 = vdwg.mxu0
        %v2958 = vmul.f32 %v2896, %v2813
        %v2959 = vmul.f32 %v2899, %v2814
        %v2960 = vmul.f32 %v2904, %v2815
        %v2961 = vmul.f32 %v2907, %v2816
        %v2962 = vmul.f32 %v2912, %v2817
        %v2963 = vmul.f32 %v2915, %v2818
        %v2964 = vmul.f32 %v2920, %v2819
        %v2965 = vmul.f32 %v2923, %v2820
        %v2966 = vmul.f32 %v2928, %v2821
        %v2967 = vmul.f32 %v2931, %v2822
        %v2968 = vmul.f32 %v2936, %v2823
        %v2969 = vmul.f32 %v2939, %v2824
        %v2970 = vmul.f32 %v2944, %v2825
        %v2971 = vmul.f32 %v2947, %v2826
        %v2972 = vmul.f32 %v2952, %v2827
        %v2973 = vmul.f32 %v2955, %v2828
        %2990 = vrot.lane.b32.xlu0 %v2958, 64
        %v2991 = vpop.permute.xlu0 %2990
        %2992 = vrot.lane.b32.xlu0 %v2959, 64
        %v2993 = vpop.permute.xlu0 %2992
        %2994 = vrot.lane.b32.xlu0 %v2960, 64
        %v2995 = vpop.permute.xlu0 %2994
        %2996 = vrot.lane.b32.xlu0 %v2961, 64
        %v2997 = vpop.permute.xlu0 %2996
        %2998 = vrot.lane.b32.xlu0 %v2962, 64
        %v2999 = vpop.permute.xlu0 %2998
        %3000 = vrot.lane.b32.xlu0 %v2963, 64
        %v3001 = vpop.permute.xlu0 %3000
        %3002 = vrot.lane.b32.xlu0 %v2964, 64
        %v3003 = vpop.permute.xlu0 %3002
        %3004 = vrot.lane.b32.xlu0 %v2965, 64
        %v3005 = vpop.permute.xlu0 %3004
        %3006 = vrot.lane.b32.xlu0 %v2966, 64
        %v3007 = vpop.permute.xlu0 %3006
        %3008 = vrot.lane.b32.xlu0 %v2967, 64
        %v3009 = vpop.permute.xlu0 %3008
        %3010 = vrot.lane.b32.xlu0 %v2968, 64
        %v3011 = vpop.permute.xlu0 %3010
        %3012 = vrot.lane.b32.xlu0 %v2969, 64
        %v3013 = vpop.permute.xlu0 %3012
        %3014 = vrot.lane.b32.xlu0 %v2970, 64
        %v3015 = vpop.permute.xlu0 %3014
        %3016 = vrot.lane.b32.xlu0 %v2971, 64
        %v3017 = vpop.permute.xlu0 %3016
        %3018 = vrot.lane.b32.xlu0 %v2972, 64
        %v3019 = vpop.permute.xlu0 %3018
        %3020 = vrot.lane.b32.xlu0 %v2973, 64
        %v3021 = vpop.permute.xlu0 %3020
        %v3038 = vsel %vm889, %v2468, %v2991
        %v3039 = vsel %vm889, %v2469, %v2993
        %v3040 = vsel %vm889, %v2470, %v2995
        %v3041 = vsel %vm889, %v2471, %v2997
        %v3042 = vsel %vm889, %v2472, %v2999
        %v3043 = vsel %vm889, %v2473, %v3001
        %v3044 = vsel %vm889, %v2474, %v3003
        %v3045 = vsel %vm889, %v2475, %v3005
        %v3046 = vsel %vm889, %v2476, %v3007
        %v3047 = vsel %vm889, %v2477, %v3009
        %v3048 = vsel %vm889, %v2478, %v3011
        %v3049 = vsel %vm889, %v2479, %v3013
        %v3050 = vsel %vm889, %v2480, %v3015
        %v3051 = vsel %vm889, %v2481, %v3017
        %v3052 = vsel %vm889, %v2482, %v3019
        %v3053 = vsel %vm889, %v2483, %v3021
        %v3054 = vpack.c.bf16 %v3039, %v3038
        %v3055 = vpack.c.bf16 %v3041, %v3040
        %v3056 = vpack.c.bf16 %v3043, %v3042
        %v3057 = vpack.c.bf16 %v3045, %v3044
        %v3058 = vpack.c.bf16 %v3047, %v3046
        %v3059 = vpack.c.bf16 %v3049, %v3048
        %v3060 = vpack.c.bf16 %v3051, %v3050
        %v3061 = vpack.c.bf16 %v3053, %v3052
        %v3062 = vld [vmem:[#allocation13] sm:$0xf]
        %v3063 = vld [vmem:[#allocation13 + $0x4] sm:$0xf]
        %v3064 = vld [vmem:[#allocation13 + $0x8] sm:$0xf]
        %v3065 = vld [vmem:[#allocation13 + $0xc] sm:$0xf]
        %v3066 = vld [vmem:[#allocation13 + $0x10] sm:$0xf]
        %v3067 = vld [vmem:[#allocation13 + $0x14] sm:$0xf]
        %v3068 = vld [vmem:[#allocation13 + $0x18] sm:$0xf]
        %v3069 = vld [vmem:[#allocation13 + $0x1c] sm:$0xf]
        %v3070 = vld [vmem:[#allocation13 + $0x20] sm:$0xf]
        %v3071 = vld [vmem:[#allocation13 + $0x24] sm:$0xf]
        %v3072 = vld [vmem:[#allocation13 + $0x28] sm:$0xf]
        %v3073 = vld [vmem:[#allocation13 + $0x2c] sm:$0xf]
        %v3074 = vld [vmem:[#allocation13 + $0x30] sm:$0xf]
        %v3075 = vld [vmem:[#allocation13 + $0x34] sm:$0xf]
        %v3076 = vld [vmem:[#allocation13 + $0x38] sm:$0xf]
        %v3077 = vld [vmem:[#allocation13 + $0x3c] sm:$0xf]
        %v3094 = vunpack.c.l.b16 %v3062
        %v3095 = vunpack.c.l.b16 %v3063
        %v3096 = vunpack.c.l.b16 %v3064
        %v3097 = vunpack.c.l.b16 %v3065
        %v3098 = vunpack.c.l.b16 %v3066
        %v3099 = vunpack.c.l.b16 %v3067
        %v3100 = vunpack.c.l.b16 %v3068
        %v3101 = vunpack.c.l.b16 %v3069
        %v3102 = vunpack.c.l.b16 %v3070
        %v3103 = vunpack.c.l.b16 %v3071
        %v3104 = vunpack.c.l.b16 %v3072
        %v3105 = vunpack.c.l.b16 %v3073
        %v3106 = vunpack.c.l.b16 %v3074
        %v3107 = vunpack.c.l.b16 %v3075
        %v3108 = vunpack.c.l.b16 %v3076
        %v3109 = vunpack.c.l.b16 %v3077
        %v3110 = vpack.c.b16 %v3095, %v3094
        %v3111 = vpack.c.b16 %v3097, %v3096
        %v3112 = vpack.c.b16 %v3099, %v3098
        %v3113 = vpack.c.b16 %v3101, %v3100
        %v3114 = vpack.c.b16 %v3103, %v3102
        %v3115 = vpack.c.b16 %v3105, %v3104
        %v3116 = vpack.c.b16 %v3107, %v3106
        %v3117 = vpack.c.b16 %v3109, %v3108
        %3126 = vmatprep.subr.bf16.mxu0 0
        %3127 = vmatpush1.bf16.msra.mxu0 %v3110
        %3128 = vmatprep.subr.bf16.mxu0 0
        %3129 = vmatpush1.bf16.msra.mxu0 %v3111
        %3130 = vmatprep.subr.bf16.mxu0 0
        %3131 = vmatpush1.bf16.msra.mxu0 %v3112
        %3132 = vmatprep.subr.bf16.mxu0 0
        %3133 = vmatpush1.bf16.msra.mxu0 %v3113
        %3134 = vmatprep.subr.bf16.mxu0 0
        %3135 = vmatpush1.bf16.msra.mxu0 %v3114
        %3136 = vmatprep.subr.bf16.mxu0 0
        %3137 = vmatpush1.bf16.msra.mxu0 %v3115
        %3138 = vmatprep.subr.bf16.mxu0 0
        %3139 = vmatpush1.bf16.msra.mxu0 %v3116
        %3140 = vmatprep.subr.bf16.mxu0 0
        %3141 = vmatpush1.bf16.msra.mxu0 %v3117
        %3142 = vmatprep.subr.bf16.mxu0 0
        %3143 = vmatpush1.bf16.msra.mxu0 0
        %3144 = vmatprep.subr.bf16.mxu0 0
        %3145 = vmatpush1.bf16.msra.mxu0 0
        %3146 = vmatprep.subr.bf16.mxu0 0
        %3147 = vmatpush1.bf16.msra.mxu0 0
        %3148 = vmatprep.subr.bf16.mxu0 0
        %3149 = vmatpush1.bf16.msra.mxu0 0
        %3150 = vmatprep.subr.bf16.mxu0 0
        %3151 = vmatpush1.bf16.msra.mxu0 0
        %3152 = vmatprep.subr.bf16.mxu0 0
        %3153 = vmatpush1.bf16.msra.mxu0 0
        %3154 = vmatprep.subr.bf16.mxu0 0
        %3155 = vmatpush1.bf16.msra.mxu0 0
        %3156 = vmatprep.subr.bf16.mxu0 0
        %3157 = vmatpush1.bf16.msra.mxu0 0
        %3158 = vmatprep.mubr.bf16.mxu0 0
        %3159 = vmatmul.mubr.bf16.gmra.mrb[0].mxu0 %v3054
        %v3160 = vpop.f32.mrb[0].mxu0
        %v3161 = vadd.f32 0.0, %v3160
        %v3162 = vpop.f32.mrb[0].mxu0
        %v3163 = vpop.f32.mrb[0].mxu0
        %v3164 = vadd.f32 0.0, %v3163
        %v3165 = vpop.f32.mrb[0].mxu0
        %3166 = vmatprep.mubr.bf16.mxu0 0
        %3167 = vmatmul.mubr.bf16.gmra.mrb[0].mxu0 %v3055
        %v3168 = vpop.f32.mrb[0].mxu0
        %v3169 = vadd.f32 0.0, %v3168
        %v3170 = vpop.f32.mrb[0].mxu0
        %v3171 = vpop.f32.mrb[0].mxu0
        %v3172 = vadd.f32 0.0, %v3171
        %v3173 = vpop.f32.mrb[0].mxu0
        %3174 = vmatprep.mubr.bf16.mxu0 0
        %3175 = vmatmul.mubr.bf16.gmra.mrb[0].mxu0 %v3056
        %v3176 = vpop.f32.mrb[0].mxu0
        %v3177 = vadd.f32 0.0, %v3176
        %v3178 = vpop.f32.mrb[0].mxu0
        %v3179 = vpop.f32.mrb[0].mxu0
        %v3180 = vadd.f32 0.0, %v3179
        %v3181 = vpop.f32.mrb[0].mxu0
        %3182 = vmatprep.mubr.bf16.mxu0 0
        %3183 = vmatmul.mubr.bf16.gmra.mrb[0].mxu0 %v3057
        %v3184 = vpop.f32.mrb[0].mxu0
        %v3185 = vadd.f32 0.0, %v3184
        %v3186 = vpop.f32.mrb[0].mxu0
        %v3187 = vpop.f32.mrb[0].mxu0
        %v3188 = vadd.f32 0.0, %v3187
        %v3189 = vpop.f32.mrb[0].mxu0
        %3190 = vmatprep.mubr.bf16.mxu0 0
        %3191 = vmatmul.mubr.bf16.gmra.mrb[0].mxu0 %v3058
        %v3192 = vpop.f32.mrb[0].mxu0
        %v3193 = vadd.f32 0.0, %v3192
        %v3194 = vpop.f32.mrb[0].mxu0
        %v3195 = vpop.f32.mrb[0].mxu0
        %v3196 = vadd.f32 0.0, %v3195
        %v3197 = vpop.f32.mrb[0].mxu0
        %3198 = vmatprep.mubr.bf16.mxu0 0
        %3199 = vmatmul.mubr.bf16.gmra.mrb[0].mxu0 %v3059
        %v3200 = vpop.f32.mrb[0].mxu0
        %v3201 = vadd.f32 0.0, %v3200
        %v3202 = vpop.f32.mrb[0].mxu0
        %v3203 = vpop.f32.mrb[0].mxu0
        %v3204 = vadd.f32 0.0, %v3203
        %v3205 = vpop.f32.mrb[0].mxu0
        %3206 = vmatprep.mubr.bf16.mxu0 0
        %3207 = vmatmul.mubr.bf16.gmra.mrb[0].mxu0 %v3060
        %v3208 = vpop.f32.mrb[0].mxu0
        %v3209 = vadd.f32 0.0, %v3208
        %v3210 = vpop.f32.mrb[0].mxu0
        %v3211 = vpop.f32.mrb[0].mxu0
        %v3212 = vadd.f32 0.0, %v3211
        %v3213 = vpop.f32.mrb[0].mxu0
        %3214 = vmatprep.mubr.bf16.mxu0 0
        %3215 = vmatmul.mubr.bf16.gmra.mrb[0].mxu0 %v3061
        %v3216 = vpop.f32.mrb[0].mxu0
        %v3217 = vadd.f32 0.0, %v3216
        %v3218 = vpop.f32.mrb[0].mxu0
        %v3219 = vpop.f32.mrb[0].mxu0
        %v3220 = vadd.f32 0.0, %v3219
        %v3221 = vpop.f32.mrb[0].mxu0
        %3222 = vdwg.mxu0
        %v3223 = vpack.c.bf16 %v3164, %v3161
        %v3224 = vpack.c.bf16 %v3172, %v3169
        %v3225 = vpack.c.bf16 %v3180, %v3177
        %v3226 = vpack.c.bf16 %v3188, %v3185
        %v3227 = vpack.c.bf16 %v3196, %v3193
        %v3228 = vpack.c.bf16 %v3204, %v3201
        %v3229 = vpack.c.bf16 %v3212, %v3209
        %v3230 = vpack.c.bf16 %v3220, %v3217
        %v3239 = vunpack.c.l.b16 %v3223
        %v3240 = vunpack.c.h.b16 %v3223
        %v3241 = vunpack.c.l.b16 %v3224
        %v3242 = vunpack.c.h.b16 %v3224
        %v3243 = vunpack.c.l.b16 %v3225
        %v3244 = vunpack.c.h.b16 %v3225
        %v3245 = vunpack.c.l.b16 %v3226
        %v3246 = vunpack.c.h.b16 %v3226
        %v3247 = vunpack.c.l.b16 %v3227
        %v3248 = vunpack.c.h.b16 %v3227
        %v3249 = vunpack.c.l.b16 %v3228
        %v3250 = vunpack.c.h.b16 %v3228
        %v3251 = vunpack.c.l.b16 %v3229
        %v3252 = vunpack.c.h.b16 %v3229
        %v3253 = vunpack.c.l.b16 %v3230
        %v3254 = vunpack.c.h.b16 %v3230
        %v3255 = vpack.c.b16 %v3239, %v3239
        %v3256 = vpack.c.b16 %v3240, %v3240
        %v3257 = vpack.c.b16 %v3241, %v3241
        %v3258 = vpack.c.b16 %v3242, %v3242
        %v3259 = vpack.c.b16 %v3243, %v3243
        %v3260 = vpack.c.b16 %v3244, %v3244
        %v3261 = vpack.c.b16 %v3245, %v3245
        %v3262 = vpack.c.b16 %v3246, %v3246
        %v3263 = vpack.c.b16 %v3247, %v3247
        %v3264 = vpack.c.b16 %v3248, %v3248
        %v3265 = vpack.c.b16 %v3249, %v3249
        %v3266 = vpack.c.b16 %v3250, %v3250
        %v3267 = vpack.c.b16 %v3251, %v3251
        %v3268 = vpack.c.b16 %v3252, %v3252
        %v3269 = vpack.c.b16 %v3253, %v3253
        %v3270 = vpack.c.b16 %v3254, %v3254
        %3287 = vst [vmem:[%s403] sm:$0xf] %v3255
        %3288 = vst [vmem:[%s403 + $0x4] sm:$0xf] %v3256
        %3289 = vst [vmem:[%s403 + $0x8] sm:$0xf] %v3257
        %3290 = vst [vmem:[%s403 + $0xc] sm:$0xf] %v3258
        %3291 = vst [vmem:[%s403 + $0x10] sm:$0xf] %v3259
        %3292 = vst [vmem:[%s403 + $0x14] sm:$0xf] %v3260
        %3293 = vst [vmem:[%s403 + $0x18] sm:$0xf] %v3261
        %3294 = vst [vmem:[%s403 + $0x1c] sm:$0xf] %v3262
        %3295 = vst [vmem:[%s403 + $0x20] sm:$0xf] %v3263
        %3296 = vst [vmem:[%s403 + $0x24] sm:$0xf] %v3264
        %3297 = vst [vmem:[%s403 + $0x28] sm:$0xf] %v3265
        %3298 = vst [vmem:[%s403 + $0x2c] sm:$0xf] %v3266
        %3299 = vst [vmem:[%s403 + $0x30] sm:$0xf] %v3267
        %3300 = vst [vmem:[%s403 + $0x34] sm:$0xf] %v3268
        %3301 = vst [vmem:[%s403 + $0x38] sm:$0xf] %v3269
        %3302 = vst [vmem:[%s403 + $0x3c] sm:$0xf] %v3270
        %s3303 = sand.u32 %s192, 1
        %s3304 = scalar_lea.sflag [#allocation4], %s3303
        %s3305 = sand.u32 %s192, 1
        %s3306 = smul.addr %s3305, 64
        %s3307 = scalar_lea.vmem [#allocation14], %s3306
        // Predicated region
        $region77: #{tpu_custom_call.1} parent=47 // pred_check
          %p3308 = pneg %p202
        $region78: #{tpu_custom_call.1} parent=47 // pred_check_branch
          %3310 = sbr.rel (%p3308) target = $region80
        $region79: #{tpu_custom_call.1} parent=47 // pred_region
          %s3312 = ssub.s32 1024, 1024
          %3313 = vsyncadd %s3304, %s3312
          %s3314 = smul.addr %s27, 16
          %s3315 = smul.addr %s3314, 64
          %s3316 = scalar_lea.hbm %s7, %s3315
          %s3317 = sshll.u32 %s3307, 4
          %s3318 = int_to_ptr.vmem [resolvable:$true] %s3317
          %3323 = dma.vmem_to_hbm [thread:$0]  %s3318, 1024, %s3316, %s3304, 64, 64, 4
        $region80: #{tpu_custom_call.1} parent=47 // pred_fallthru
          _
      $region48: #{tpu_custom_call.1} parent=5 // pred_fallthru
        _
      %p3324 = scmp.le.s32.totalorder 2, %s22
      // Predicated region
      $region81: #{tpu_custom_call.1} parent=5 // pred_check
        %p3325 = pneg %p3324
      $region82: #{tpu_custom_call.1} parent=5 // pred_check_branch
        %3327 = sbr.rel (%p3325) target = $region84
      $region83: #{tpu_custom_call.1} parent=5 // pred_region
        %s3328 = ssub.s32 %s22, 2
        // Predicated region
        $region85: #{tpu_custom_call.1} parent=83 // pred_check
          %p3329 = pneg %p208
        $region86: #{tpu_custom_call.1} parent=83 // pred_check_branch
          %3331 = sbr.rel (%p3329) target = $region88
        $region87: #{tpu_custom_call.1} parent=83 // pred_region
          %s3332 = sand.u32 %s193, 1
          %s3333 = scalar_lea.sflag [#allocation4], %s3332
          %s3334 = sand.u32 %s193, 1
          %s3335 = smul.addr %s3334, 64
          %s3336 = scalar_lea.vmem [#allocation14], %s3335
          %3337 = dma.done %s3333, 1024
        $region88: #{tpu_custom_call.1} parent=83 // pred_fallthru
          _
      $region84: #{tpu_custom_call.1} parent=5 // pred_fallthru
        _
    $region6: #{tpu_custom_call.1} parent=1 // loop_footer
      %s26 = sadd.s32 1, %s22
    $region7: #{tpu_custom_call.1} parent=1 // loop_footer_branch
      %21 = sbr.rel target = $region3
    $region8: #{tpu_custom_call.1} parent=1 // loop_exit
      _
    %3338 = vsyncpa [#allocation3], 1
    %s3339 = scalar_lea.sflag [#allocation3], 1
    %3340 = vsyncpa %s3339, 1
    %3341 = vsyncpa [#allocation8], 1
    %3342 = vsyncpa [#allocation11], 1
    %3343 = vsyncpa [#allocation4], 1
    %s3344 = scalar_lea.sflag [#allocation4], 1
    %3345 = vsyncpa %s3344, 1
    %3346 = vsyncpa [#allocation5], 1
    %s3347 = scalar_lea.sflag [#allocation5], 1
    %3348 = vsyncpa %s3347, 1

</llo_original>
